<compile_context>
chip_gen: v7x
topology: tpu7x:2x2x1
jax: 0.10.0
libtpu: 0.0.40
codegen_flags: <defaults>
</compile_context>

<pallas_src>
import functools
import math

import jax
import jax.numpy as jnp
from jax.experimental import pallas as pl
from jax.experimental.pallas import tpu as pltpu

MXU_DTYPE = jnp.bfloat16   # MXU input dtype (f32 accumulate + f32 epilogue)
HEAD_OUT_W = 128           # lane-dense head output slab: [logprob, value, entropy, 0...]


# ---------------------------------------------------------------------------
# Pallas kernels
# ---------------------------------------------------------------------------
def _conv_tanh_pool_kernel(x_ref, w_ref, b_ref, o_ref):
    """Fused Conv2d (as im2col matmul) + bias + Tanh + MaxPool2d(2,2).

    x_ref: (1, 4, R, K)  -- axis 1 = (dh, dw) offset of the conv output inside
                            its 2x2 pool window; R pooled positions per block.
    w_ref: (K, C) bf16, b_ref: (1, C) f32, o_ref: (1, R, C).
    """
    w = w_ref[...]
    b = b_ref[...]
    out = None
    for k in range(4):                                   # static unroll: 4 MXU dots
        y = jnp.dot(x_ref[0, k], w, preferred_element_type=jnp.float32) + b
        y = jnp.tanh(y)                                  # f32 epilogue (v5e-safe)
        out = y if out is None else jnp.maximum(out, y)  # the 2x2 max-pool
    o_ref[0] = out.astype(o_ref.dtype)


def _head_kernel(f_ref, act_ref, var_ref, w1_ref, b1_ref, w2_ref, b2_ref,
                 w3_ref, b3_ref, o_ref, *, adim):
    """Fused actor+critic MLP trunks + diagonal-MVN log_prob / entropy.

    Weights are pre-fused at pack time:
      W1 (F, 128)   = [actor FC1 | critic FC1] with rows in (h, w, c) order,
      W2 (128, 128) = block-diagonal [actor FC2, critic FC2],
      W3 (128, A+1) = [actor mean head | critic value head].
    Output: lane-dense (MB, 128) slab; col0 = log_prob, col1 = value, col2 = entropy.
    """
    log2pi = math.log(2.0 * math.pi)
    f = f_ref[...]
    h1 = jnp.tanh(jnp.dot(f, w1_ref[...], preferred_element_type=jnp.float32) + b1_ref[...])
    h2 = jnp.tanh(jnp.dot(h1, w2_ref[...], preferred_element_type=jnp.float32) + b2_ref[...])
    y3 = jnp.dot(h2, w3_ref[...], preferred_element_type=jnp.float32) + b3_ref[...]
    mean = jnp.tanh(y3[:, :adim])                        # actor head (tanh)
    value = y3[:, adim:adim + 1]                         # critic head (linear)

    var = var_ref[...]                                   # (1, adim)
    diff = act_ref[...] - mean
    quad = jnp.sum(diff * diff / var, axis=-1, keepdims=True)     # (MB, 1)
    logdet = jnp.sum(jnp.log(var), axis=-1, keepdims=True)        # (1, 1)
    lp = -0.5 * (quad + logdet + adim * log2pi)                   # (MB, 1)
    ent = 0.5 * (adim * (1.0 + log2pi) + logdet)                  # (1, 1)

    col = jax.lax.broadcasted_iota(jnp.int32, (1, o_ref.shape[-1]), 1)
    o_ref[...] = (jnp.where(col == 0, lp, 0.0)
                  + jnp.where(col == 1, value, 0.0)
                  + jnp.where(col == 2, ent, 0.0))


# ---------------------------------------------------------------------------
# im2col glue + Pallas wrappers
# ---------------------------------------------------------------------------
def im2col_pooled_nhwc(x, kh, kw, stride, pad):
    """Patches for conv+tanh+maxpool fusion.

    x: (N, H, W, C) -> (N, 4, Hp*Wp, kh*kw*C); axis 1 indexes the (dh, dw)
    offset inside each 2x2 pool window, axis 2 the pooled output position.
    Patch columns ordered (kh, kw, C)."""
    x = jnp.pad(x, ((0, 0), (pad, pad), (pad, pad), (0, 0)))
    N, H, W, C = x.shape
    Ho = (H - kh) // stride + 1
    Wo = (W - kw) // stride + 1
    Hp, Wp = Ho // 2, Wo // 2
    cols = []
    for i in range(kh):
        for j in range(kw):
            cols.append(x[:, i:i + stride * Ho:stride, j:j + stride * Wo:stride, :])
    p = jnp.stack(cols, axis=3)                      # (N, Ho, Wo, kh*kw, C)
    p = p[:, :2 * Hp, :2 * Wp]                       # MaxPool floor (odd tails)
    p = p.reshape(N, Hp, 2, Wp, 2, kh * kw * C)
    p = p.transpose(0, 2, 4, 1, 3, 5)                # (N, 2, 2, Hp, Wp, K)
    return p.reshape(N, 4, Hp * Wp, kh * kw * C), Hp, Wp


def _pick_row_block(total, target=512, align=16):
    """Largest divisor of `total` that is a multiple of `align` and <= target,
    else `total` (full-dim blocks waive the (8,128) divisibility rule)."""
    best = None
    r = align
    while r <= min(total, target):
        if total % r == 0:
            best = r
        r += align
    return best if best is not None else total


def conv_tanh_pool(x_nhwc, w_mat, b_row, *, kh, kw, stride, pad):
    """Conv2d + bias + Tanh + MaxPool2d(2,2) as one Pallas call.

    x_nhwc: (N, H, W, Cin); w_mat: (kh*kw*Cin, Cout) bf16; b_row: (1, Cout) f32.
    Returns (N, Hout//2, Wout//2, Cout) in w_mat.dtype.
    """
    N = x_nhwc.shape[0]
    K, C = w_mat.shape
    patches, Hp, Wp = im2col_pooled_nhwc(x_nhwc.astype(w_mat.dtype), kh, kw, stride, pad)
    Pp = Hp * Wp
    rb = _pick_row_block(Pp)
    out = pl.pallas_call(
        _conv_tanh_pool_kernel,
        out_shape=jax.ShapeDtypeStruct((N, Pp, C), w_mat.dtype),
        grid=(N, Pp // rb),
        in_specs=[
            pl.BlockSpec((1, 4, rb, K), lambda n, r: (n, 0, r, 0)),
            pl.BlockSpec((K, C), lambda n, r: (0, 0)),
            pl.BlockSpec((1, C), lambda n, r: (0, 0)),
        ],
        out_specs=pl.BlockSpec((1, rb, C), lambda n, r: (n, r, 0)),
        compiler_params=pltpu.CompilerParams(
            dimension_semantics=("parallel", "parallel")),
    )(patches, w_mat, b_row)
    return out.reshape(N, Hp, Wp, C)


def heads_and_mvn(features, action, pk):
    """Fused actor/critic MLPs + MVN log_prob / entropy (single Pallas call)."""
    N, F = features.shape
    adim = action.shape[1]
    mb = _pick_row_block(N, target=512, align=16)
    out = pl.pallas_call(
        functools.partial(_head_kernel, adim=adim),
        out_shape=jax.ShapeDtypeStruct((N, HEAD_OUT_W), jnp.float32),
        grid=(N // mb,),
        in_specs=[
            pl.BlockSpec((mb, F), lambda i: (i, 0)),          # features
            pl.BlockSpec((mb, adim), lambda i: (i, 0)),       # action
            pl.BlockSpec((1, adim), lambda i: (0, 0)),        # action_var
            pl.BlockSpec((F, 128), lambda i: (0, 0)),         # W1 fused
            pl.BlockSpec((1, 128), lambda i: (0, 0)),
            pl.BlockSpec((128, 128), lambda i: (0, 0)),       # W2 block-diag
            pl.BlockSpec((1, 128), lambda i: (0, 0)),
            pl.BlockSpec((128, adim + 1), lambda i: (0, 0)),  # W3 heads
            pl.BlockSpec((1, adim + 1), lambda i: (0, 0)),
        ],
        out_specs=pl.BlockSpec((mb, HEAD_OUT_W), lambda i: (i, 0)),
        compiler_params=pltpu.CompilerParams(dimension_semantics=("parallel",)),
    )(features, action.astype(jnp.float32), pk["var"], pk["W1"], pk["b1"],
      pk["W2"], pk["b2"], pk["W3"], pk["b3"])
    return out[:, 0], out[:, 1], out[:, 2]


def evaluate(pk, state, action):
    """ActorCritic.evaluate(state, action) -> (logprobs, state_value, entropy)."""
    x = state.transpose(0, 2, 3, 1)                                   # NCHW -> NHWC once
    y = conv_tanh_pool(x, pk["cW1"], pk["cb1"], kh=8, kw=8, stride=4, pad=2)  # (N,20,20,64)
    y = conv_tanh_pool(y, pk["cW2"], pk["cb2"], kh=4, kw=4, stride=2, pad=1)  # (N,5,5,64)
    feats = y.reshape(y.shape[0], -1)                                 # (N, 1600), (h,w,c) order
    return heads_and_mvn(feats, action, pk)


# ---------------------------------------------------------------------------
# Parameters: raw PyTorch-shaped init + one-time fusion / re-layout
# ---------------------------------------------------------------------------
def init_params(key, action_dim=3, action_std=0.5):
    ks = jax.random.split(key, 20)
    w = lambda k, s, sc=0.05: sc * jax.random.normal(k, s, jnp.float32)
    return {
        "actor_conv": {"cw1": w(ks[0], (32, 3, 8, 8)), "cb1": w(ks[1], (32,)),
                       "cw2": w(ks[2], (32, 32, 4, 4)), "cb2": w(ks[3], (32,))},
        "critic_conv": {"cw1": w(ks[4], (32, 3, 8, 8)), "cb1": w(ks[5], (32,)),
                        "cw2": w(ks[6], (32, 32, 4, 4)), "cb2": w(ks[7], (32,))},
        "a_w1": w(ks[8], (800, 64)), "a_b1": w(ks[9], (64,)),
        "a_w2": w(ks[10], (64, 64)), "a_b2": w(ks[11], (64,)),
        "a_w3": w(ks[12], (64, 3)), "a_b3": w(ks[13], (3,)),
        "c_w1": w(ks[14], (800, 64)), "c_b1": w(ks[15], (64,)),
        "c_w2": w(ks[16], (64, 64)), "c_b2": w(ks[17], (64,)),
        "c_w3": w(ks[18], (64, 1)), "c_b3": w(ks[19], (1,)),
        "action_var": jnp.full((action_dim,), action_std * action_std, jnp.float32),
    }


def pack_params(p):
    """One-time fusion / re-layout of the PyTorch-shaped parameters."""
    f32 = jnp.float32

    # conv1 (3->32 twice) -> (3->64), rows ordered (kh, kw, cin) for NHWC im2col.
    cw1 = jnp.concatenate([p["actor_conv"]["cw1"], p["critic_conv"]["cw1"]], axis=0)
    cW1 = cw1.transpose(2, 3, 1, 0).reshape(8 * 8 * 3, 64).astype(MXU_DTYPE)
    cb1 = jnp.concatenate([p["actor_conv"]["cb1"],
                           p["critic_conv"]["cb1"]]).reshape(1, 64).astype(f32)

    # conv2: block-diagonal over the 64 concatenated channels (actor 0:32, critic 32:64).
    w2a = p["actor_conv"]["cw2"].transpose(2, 3, 1, 0)    # (kh, kw, cin, cout)
    w2c = p["critic_conv"]["cw2"].transpose(2, 3, 1, 0)
    blk = jnp.zeros((4, 4, 64, 64), f32)
    blk = blk.at[:, :, :32, :32].set(w2a).at[:, :, 32:, 32:].set(w2c)
    cW2 = blk.reshape(4 * 4 * 64, 64).astype(MXU_DTYPE)
    cb2 = jnp.concatenate([p["actor_conv"]["cb2"],
                           p["critic_conv"]["cb2"]]).reshape(1, 64).astype(f32)

    # FC1 (800->64 twice) -> (1600->128); rows permuted from PyTorch NCHW-flatten
    # order (c, h, w) to the kernel's (h, w, c) feature order.
    a1 = p["a_w1"].reshape(32, 5, 5, 64).transpose(1, 2, 0, 3)   # (h, w, c, 64)
    c1 = p["c_w1"].reshape(32, 5, 5, 64).transpose(1, 2, 0, 3)
    W1 = jnp.zeros((5, 5, 64, 128), f32)
    W1 = W1.at[:, :, :32, :64].set(a1).at[:, :, 32:, 64:].set(c1)
    W1 = W1.reshape(5 * 5 * 64, 128).astype(MXU_DTYPE)
    b1 = jnp.concatenate([p["a_b1"], p["c_b1"]]).reshape(1, 128).astype(f32)

    # FC2 (64->64 twice) -> block-diagonal (128->128).
    W2 = jnp.zeros((128, 128), f32)
    W2 = W2.at[:64, :64].set(p["a_w2"]).at[64:, 64:].set(p["c_w2"])
    b2 = jnp.concatenate([p["a_b2"], p["c_b2"]]).reshape(1, 128).astype(f32)

    # FC3: actor 64->3 (cols 0:3, tanh applied in-kernel), critic 64->1 (col 3).
    adim = p["a_w3"].shape[1]
    W3 = jnp.zeros((128, adim + 1), f32)
    W3 = W3.at[:64, :adim].set(p["a_w3"]).at[64:, adim:].set(p["c_w3"])
    b3 = jnp.concatenate([p["a_b3"], p["c_b3"]]).reshape(1, adim + 1).astype(f32)

    return {"cW1": cW1, "cb1": cb1, "cW2": cW2, "cb2": cb2,
            "W1": W1, "b1": b1, "W2": W2, "b2": b2, "W3": W3, "b3": b3,
            "var": p["action_var"].reshape(1, adim).astype(f32)}


if __name__ == "__main__":
    key = jax.random.PRNGKey(0)
    kp, kstate, kact = jax.random.split(key, 3)
    params = pack_params(init_params(kp))
    # Linear(32*5*5, 64) after the conv stack implies a 3x160x160 input image.
    state = jax.random.normal(kstate, (2, 3, 160, 160), jnp.float32)
    action = jax.random.normal(kact, (2, 3), jnp.float32)
    # TODO(synk): act() draws a stochastic MVN sample and does host-side numpy
    # memory bookkeeping; only the deterministic evaluate() path is implemented.
    logprobs, values, entropy = jax.jit(evaluate)(params, state, action)
    jax.block_until_ready((logprobs, values, entropy))
    assert logprobs.shape == (2,) and values.shape == (2,) and entropy.shape == (2,)
    print("KERNEL_OK")
</pallas_src>

<mosaic_0001>
module attributes {stable_mosaic.version = 11 : i64} {
  func.func @_conv_tanh_pool_kernel(%arg0: i32, %arg1: i32, %arg2: memref<1x4x400x192xbf16, #tpu.memory_space<vmem>>, %arg3: memref<192x64xbf16, #tpu.memory_space<vmem>>, %arg4: memref<1x64xf32, #tpu.memory_space<vmem>>, %arg5: memref<1x400x64xbf16, #tpu.memory_space<vmem>>) attributes {dimension_semantics = [#tpu.dimension_semantics<parallel>, #tpu.dimension_semantics<parallel>], iteration_bounds = array<i64: 2, 1>, scalar_prefetch = 0 : i64, scratch_operands = 0 : i64, tpu.core_type = #tpu.core_type<tc>, window_params = [{transform_indices = @transform_0, window_bounds = array<i64: 1, 4, 400, 192>}, {pipeline_mode = #tpu.pipeline_mode<synchronous>, transform_indices = @transform_1, window_bounds = array<i64: 192, 64>}, {pipeline_mode = #tpu.pipeline_mode<synchronous>, transform_indices = @transform_2, window_bounds = array<i64: 1, 64>}, {transform_indices = @transform_3, window_bounds = array<i64: 1, 400, 64>}]} {
    %c0 = arith.constant 0 : index
    %c0_0 = arith.constant 0 : index
    %0 = vector.load %arg3[%c0, %c0_0] : memref<192x64xbf16, #tpu.memory_space<vmem>>, vector<192x64xbf16>
    %c0_1 = arith.constant 0 : index
    %c0_2 = arith.constant 0 : index
    %1 = vector.load %arg4[%c0_1, %c0_2] : memref<1x64xf32, #tpu.memory_space<vmem>>, vector<1x64xf32>
    %c0_3 = arith.constant 0 : index
    %c0_4 = arith.constant 0 : index
    %c0_5 = arith.constant 0 : index
    %c0_6 = arith.constant 0 : index
    %2 = vector.load %arg2[%c0_3, %c0_4, %c0_5, %c0_6] : memref<1x4x400x192xbf16, #tpu.memory_space<vmem>>, vector<1x1x400x192xbf16>
    %3 = vector.shape_cast %2 : vector<1x1x400x192xbf16> to vector<400x192xbf16>
    %cst = arith.constant dense<0.000000e+00> : vector<400x64xf32>
    %4 = tpu.matmul %3, %0, %cst {dimension_numbers = #tpu.dot_dimension_numbers<[1], [0], [0], [1], [0, 0, 1, 1], [], []>} : vector<400x192xbf16>, vector<192x64xbf16>, vector<400x64xf32> -> vector<400x64xf32>
    %5 = vector.broadcast %1 : vector<1x64xf32> to vector<400x64xf32>
    %6 = arith.addf %4, %5 : vector<400x64xf32>
    %7 = math.tanh %6 : vector<400x64xf32>
    %c0_7 = arith.constant 0 : index
    %c1 = arith.constant 1 : index
    %c0_8 = arith.constant 0 : index
    %c0_9 = arith.constant 0 : index
    %8 = vector.load %arg2[%c0_7, %c1, %c0_8, %c0_9] : memref<1x4x400x192xbf16, #tpu.memory_space<vmem>>, vector<1x1x400x192xbf16>
    %9 = vector.shape_cast %8 : vector<1x1x400x192xbf16> to vector<400x192xbf16>
    %cst_10 = arith.constant dense<0.000000e+00> : vector<400x64xf32>
    %10 = tpu.matmul %9, %0, %cst_10 {dimension_numbers = #tpu.dot_dimension_numbers<[1], [0], [0], [1], [0, 0, 1, 1], [], []>} : vector<400x192xbf16>, vector<192x64xbf16>, vector<400x64xf32> -> vector<400x64xf32>
    %11 = vector.broadcast %1 : vector<1x64xf32> to vector<400x64xf32>
    %12 = arith.addf %10, %11 : vector<400x64xf32>
    %13 = math.tanh %12 : vector<400x64xf32>
    %14 = arith.maximumf %7, %13 : vector<400x64xf32>
    %c0_11 = arith.constant 0 : index
    %c2 = arith.constant 2 : index
    %c0_12 = arith.constant 0 : index
    %c0_13 = arith.constant 0 : index
    %15 = vector.load %arg2[%c0_11, %c2, %c0_12, %c0_13] : memref<1x4x400x192xbf16, #tpu.memory_space<vmem>>, vector<1x1x400x192xbf16>
    %16 = vector.shape_cast %15 : vector<1x1x400x192xbf16> to vector<400x192xbf16>
    %cst_14 = arith.constant dense<0.000000e+00> : vector<400x64xf32>
    %17 = tpu.matmul %16, %0, %cst_14 {dimension_numbers = #tpu.dot_dimension_numbers<[1], [0], [0], [1], [0, 0, 1, 1], [], []>} : vector<400x192xbf16>, vector<192x64xbf16>, vector<400x64xf32> -> vector<400x64xf32>
    %18 = vector.broadcast %1 : vector<1x64xf32> to vector<400x64xf32>
    %19 = arith.addf %17, %18 : vector<400x64xf32>
    %20 = math.tanh %19 : vector<400x64xf32>
    %21 = arith.maximumf %14, %20 : vector<400x64xf32>
    %c0_15 = arith.constant 0 : index
    %c3 = arith.constant 3 : index
    %c0_16 = arith.constant 0 : index
    %c0_17 = arith.constant 0 : index
    %22 = vector.load %arg2[%c0_15, %c3, %c0_16, %c0_17] : memref<1x4x400x192xbf16, #tpu.memory_space<vmem>>, vector<1x1x400x192xbf16>
    %23 = vector.shape_cast %22 : vector<1x1x400x192xbf16> to vector<400x192xbf16>
    %cst_18 = arith.constant dense<0.000000e+00> : vector<400x64xf32>
    %24 = tpu.matmul %23, %0, %cst_18 {dimension_numbers = #tpu.dot_dimension_numbers<[1], [0], [0], [1], [0, 0, 1, 1], [], []>} : vector<400x192xbf16>, vector<192x64xbf16>, vector<400x64xf32> -> vector<400x64xf32>
    %25 = vector.broadcast %1 : vector<1x64xf32> to vector<400x64xf32>
    %26 = arith.addf %24, %25 : vector<400x64xf32>
    %27 = math.tanh %26 : vector<400x64xf32>
    %28 = arith.maximumf %21, %27 : vector<400x64xf32>
    %29 = arith.truncf %28 : vector<400x64xf32> to vector<400x64xbf16>
    %c0_19 = arith.constant 0 : index
    %c0_20 = arith.constant 0 : index
    %c0_21 = arith.constant 0 : index
    %30 = vector.load %arg5[%c0_19, %c0_20, %c0_21] : memref<1x400x64xbf16, #tpu.memory_space<vmem>>, vector<1x400x64xbf16>
    %31 = vector.shape_cast %30 : vector<1x400x64xbf16> to vector<400x64xbf16>
    %32 = vector.shape_cast %29 : vector<400x64xbf16> to vector<1x400x64xbf16>
    tpu.vector_store %arg5[%c0_19, %c0_20, %c0_21], %32 {strides = array<i32>} : memref<1x400x64xbf16, #tpu.memory_space<vmem>>, vector<1x400x64xbf16>,
    return
  }
  func.func @transform_0(%arg0: i32, %arg1: i32) -> (i32, i32, i32, i32) {
    %c0_i32 = arith.constant 0 : i32
    %c0_i32_0 = arith.constant 0 : i32
    %c0_i32_1 = arith.constant 0 : i32
    return %arg0, %c0_i32, %arg1, %c0_i32_0 : i32, i32, i32, i32
  }
  func.func @transform_1(%arg0: i32, %arg1: i32) -> (i32, i32) {
    %c0_i32 = arith.constant 0 : i32
    %c0_i32_0 = arith.constant 0 : i32
    %c0_i32_1 = arith.constant 0 : i32
    return %c0_i32, %c0_i32_0 : i32, i32
  }
  func.func @transform_2(%arg0: i32, %arg1: i32) -> (i32, i32) {
    %c0_i32 = arith.constant 0 : i32
    %c0_i32_0 = arith.constant 0 : i32
    %c0_i32_1 = arith.constant 0 : i32
    return %c0_i32, %c0_i32_0 : i32, i32
  }
  func.func @transform_3(%arg0: i32, %arg1: i32) -> (i32, i32, i32) {
    %c0_i32 = arith.constant 0 : i32
    %c0_i32_0 = arith.constant 0 : i32
    return %arg0, %arg1, %c0_i32 : i32, i32, i32
  }
}

module attributes {stable_mosaic.version = 11 : i64} {
  func.func @_conv_tanh_pool_kernel(%arg0: i32, %arg1: i32, %arg2: memref<1x4x25x1024xbf16, #tpu.memory_space<vmem>>, %arg3: memref<1024x64xbf16, #tpu.memory_space<vmem>>, %arg4: memref<1x64xf32, #tpu.memory_space<vmem>>, %arg5: memref<1x25x64xbf16, #tpu.memory_space<vmem>>) attributes {dimension_semantics = [#tpu.dimension_semantics<parallel>, #tpu.dimension_semantics<parallel>], iteration_bounds = array<i64: 2, 1>, scalar_prefetch = 0 : i64, scratch_operands = 0 : i64, tpu.core_type = #tpu.core_type<tc>, window_params = [{transform_indices = @transform_0, window_bounds = array<i64: 1, 4, 25, 1024>}, {pipeline_mode = #tpu.pipeline_mode<synchronous>, transform_indices = @transform_1, window_bounds = array<i64: 1024, 64>}, {pipeline_mode = #tpu.pipeline_mode<synchronous>, transform_indices = @transform_2, window_bounds = array<i64: 1, 64>}, {transform_indices = @transform_3, window_bounds = array<i64: 1, 25, 64>}]} {
    %c0 = arith.constant 0 : index
    %c0_0 = arith.constant 0 : index
    %0 = vector.load %arg3[%c0, %c0_0] : memref<1024x64xbf16, #tpu.memory_space<vmem>>, vector<1024x64xbf16>
    %c0_1 = arith.constant 0 : index
    %c0_2 = arith.constant 0 : index
    %1 = vector.load %arg4[%c0_1, %c0_2] : memref<1x64xf32, #tpu.memory_space<vmem>>, vector<1x64xf32>
    %c0_3 = arith.constant 0 : index
    %c0_4 = arith.constant 0 : index
    %c0_5 = arith.constant 0 : index
    %c0_6 = arith.constant 0 : index
    %2 = vector.load %arg2[%c0_3, %c0_4, %c0_5, %c0_6] : memref<1x4x25x1024xbf16, #tpu.memory_space<vmem>>, vector<1x1x25x1024xbf16>
    %3 = vector.shape_cast %2 : vector<1x1x25x1024xbf16> to vector<25x1024xbf16>
    %cst = arith.constant dense<0.000000e+00> : vector<25x64xf32>
    %4 = tpu.matmul %3, %0, %cst {dimension_numbers = #tpu.dot_dimension_numbers<[1], [0], [0], [1], [0, 0, 1, 1], [], []>} : vector<25x1024xbf16>, vector<1024x64xbf16>, vector<25x64xf32> -> vector<25x64xf32>
    %5 = vector.broadcast %1 : vector<1x64xf32> to vector<25x64xf32>
    %6 = arith.addf %4, %5 : vector<25x64xf32>
    %7 = math.tanh %6 : vector<25x64xf32>
    %c0_7 = arith.constant 0 : index
    %c1 = arith.constant 1 : index
    %c0_8 = arith.constant 0 : index
    %c0_9 = arith.constant 0 : index
    %8 = vector.load %arg2[%c0_7, %c1, %c0_8, %c0_9] : memref<1x4x25x1024xbf16, #tpu.memory_space<vmem>>, vector<1x1x25x1024xbf16>
    %9 = vector.shape_cast %8 : vector<1x1x25x1024xbf16> to vector<25x1024xbf16>
    %cst_10 = arith.constant dense<0.000000e+00> : vector<25x64xf32>
    %10 = tpu.matmul %9, %0, %cst_10 {dimension_numbers = #tpu.dot_dimension_numbers<[1], [0], [0], [1], [0, 0, 1, 1], [], []>} : vector<25x1024xbf16>, vector<1024x64xbf16>, vector<25x64xf32> -> vector<25x64xf32>
    %11 = vector.broadcast %1 : vector<1x64xf32> to vector<25x64xf32>
    %12 = arith.addf %10, %11 : vector<25x64xf32>
    %13 = math.tanh %12 : vector<25x64xf32>
    %14 = arith.maximumf %7, %13 : vector<25x64xf32>
    %c0_11 = arith.constant 0 : index
    %c2 = arith.constant 2 : index
    %c0_12 = arith.constant 0 : index
    %c0_13 = arith.constant 0 : index
    %15 = vector.load %arg2[%c0_11, %c2, %c0_12, %c0_13] : memref<1x4x25x1024xbf16, #tpu.memory_space<vmem>>, vector<1x1x25x1024xbf16>
    %16 = vector.shape_cast %15 : vector<1x1x25x1024xbf16> to vector<25x1024xbf16>
    %cst_14 = arith.constant dense<0.000000e+00> : vector<25x64xf32>
    %17 = tpu.matmul %16, %0, %cst_14 {dimension_numbers = #tpu.dot_dimension_numbers<[1], [0], [0], [1], [0, 0, 1, 1], [], []>} : vector<25x1024xbf16>, vector<1024x64xbf16>, vector<25x64xf32> -> vector<25x64xf32>
    %18 = vector.broadcast %1 : vector<1x64xf32> to vector<25x64xf32>
    %19 = arith.addf %17, %18 : vector<25x64xf32>
    %20 = math.tanh %19 : vector<25x64xf32>
    %21 = arith.maximumf %14, %20 : vector<25x64xf32>
    %c0_15 = arith.constant 0 : index
    %c3 = arith.constant 3 : index
    %c0_16 = arith.constant 0 : index
    %c0_17 = arith.constant 0 : index
    %22 = vector.load %arg2[%c0_15, %c3, %c0_16, %c0_17] : memref<1x4x25x1024xbf16, #tpu.memory_space<vmem>>, vector<1x1x25x1024xbf16>
    %23 = vector.shape_cast %22 : vector<1x1x25x1024xbf16> to vector<25x1024xbf16>
    %cst_18 = arith.constant dense<0.000000e+00> : vector<25x64xf32>
    %24 = tpu.matmul %23, %0, %cst_18 {dimension_numbers = #tpu.dot_dimension_numbers<[1], [0], [0], [1], [0, 0, 1, 1], [], []>} : vector<25x1024xbf16>, vector<1024x64xbf16>, vector<25x64xf32> -> vector<25x64xf32>
    %25 = vector.broadcast %1 : vector<1x64xf32> to vector<25x64xf32>
    %26 = arith.addf %24, %25 : vector<25x64xf32>
    %27 = math.tanh %26 : vector<25x64xf32>
    %28 = arith.maximumf %21, %27 : vector<25x64xf32>
    %29 = arith.truncf %28 : vector<25x64xf32> to vector<25x64xbf16>
    %c0_19 = arith.constant 0 : index
    %c0_20 = arith.constant 0 : index
    %c0_21 = arith.constant 0 : index
    %30 = vector.load %arg5[%c0_19, %c0_20, %c0_21] : memref<1x25x64xbf16, #tpu.memory_space<vmem>>, vector<1x25x64xbf16>
    %31 = vector.shape_cast %30 : vector<1x25x64xbf16> to vector<25x64xbf16>
    %32 = vector.shape_cast %29 : vector<25x64xbf16> to vector<1x25x64xbf16>
    tpu.vector_store %arg5[%c0_19, %c0_20, %c0_21], %32 {strides = array<i32>} : memref<1x25x64xbf16, #tpu.memory_space<vmem>>, vector<1x25x64xbf16>,
    return
  }
  func.func @transform_0(%arg0: i32, %arg1: i32) -> (i32, i32, i32, i32) {
    %c0_i32 = arith.constant 0 : i32
    %c0_i32_0 = arith.constant 0 : i32
    %c0_i32_1 = arith.constant 0 : i32
    return %arg0, %c0_i32, %arg1, %c0_i32_0 : i32, i32, i32, i32
  }
  func.func @transform_1(%arg0: i32, %arg1: i32) -> (i32, i32) {
    %c0_i32 = arith.constant 0 : i32
    %c0_i32_0 = arith.constant 0 : i32
    %c0_i32_1 = arith.constant 0 : i32
    return %c0_i32, %c0_i32_0 : i32, i32
  }
  func.func @transform_2(%arg0: i32, %arg1: i32) -> (i32, i32) {
    %c0_i32 = arith.constant 0 : i32
    %c0_i32_0 = arith.constant 0 : i32
    %c0_i32_1 = arith.constant 0 : i32
    return %c0_i32, %c0_i32_0 : i32, i32
  }
  func.func @transform_3(%arg0: i32, %arg1: i32) -> (i32, i32, i32) {
    %c0_i32 = arith.constant 0 : i32
    %c0_i32_0 = arith.constant 0 : i32
    return %arg0, %arg1, %c0_i32 : i32, i32, i32
  }
}

module attributes {stable_mosaic.version = 11 : i64} {
  func.func @_head_kernel(%arg0: i32, %arg1: memref<2x1600xbf16, #tpu.memory_space<vmem>>, %arg2: memref<2x3xf32, #tpu.memory_space<vmem>>, %arg3: memref<1x3xf32, #tpu.memory_space<vmem>>, %arg4: memref<1600x128xbf16, #tpu.memory_space<vmem>>, %arg5: memref<1x128xf32, #tpu.memory_space<vmem>>, %arg6: memref<128x128xf32, #tpu.memory_space<vmem>>, %arg7: memref<1x128xf32, #tpu.memory_space<vmem>>, %arg8: memref<128x4xf32, #tpu.memory_space<vmem>>, %arg9: memref<1x4xf32, #tpu.memory_space<vmem>>, %arg10: memref<2x128xf32, #tpu.memory_space<vmem>>) attributes {dimension_semantics = [#tpu.dimension_semantics<parallel>], iteration_bounds = array<i64: 1>, scalar_prefetch = 0 : i64, scratch_operands = 0 : i64, tpu.core_type = #tpu.core_type<tc>, window_params = [{transform_indices = @transform_0, window_bounds = array<i64: 2, 1600>}, {transform_indices = @transform_1, window_bounds = array<i64: 2, 3>}, {pipeline_mode = #tpu.pipeline_mode<synchronous>, transform_indices = @transform_2, window_bounds = array<i64: 1, 3>}, {pipeline_mode = #tpu.pipeline_mode<synchronous>, transform_indices = @transform_3, window_bounds = array<i64: 1600, 128>}, {pipeline_mode = #tpu.pipeline_mode<synchronous>, transform_indices = @transform_4, window_bounds = array<i64: 1, 128>}, {pipeline_mode = #tpu.pipeline_mode<synchronous>, transform_indices = @transform_5, window_bounds = array<i64: 128, 128>}, {pipeline_mode = #tpu.pipeline_mode<synchronous>, transform_indices = @transform_6, window_bounds = array<i64: 1, 128>}, {pipeline_mode = #tpu.pipeline_mode<synchronous>, transform_indices = @transform_7, window_bounds = array<i64: 128, 4>}, {pipeline_mode = #tpu.pipeline_mode<synchronous>, transform_indices = @transform_8, window_bounds = array<i64: 1, 4>}, {transform_indices = @transform_9, window_bounds = array<i64: 2, 128>}]} {
    %c0 = arith.constant 0 : index
    %c0_0 = arith.constant 0 : index
    %0 = vector.load %arg1[%c0, %c0_0] : memref<2x1600xbf16, #tpu.memory_space<vmem>>, vector<2x1600xbf16>
    %c0_1 = arith.constant 0 : index
    %c0_2 = arith.constant 0 : index
    %1 = vector.load %arg4[%c0_1, %c0_2] : memref<1600x128xbf16, #tpu.memory_space<vmem>>, vector<1600x128xbf16>
    %cst = arith.constant dense<0.000000e+00> : vector<2x128xf32>
    %2 = tpu.matmul %0, %1, %cst {dimension_numbers = #tpu.dot_dimension_numbers<[1], [0], [0], [1], [0, 0, 1, 1], [], []>} : vector<2x1600xbf16>, vector<1600x128xbf16>, vector<2x128xf32> -> vector<2x128xf32>
    %c0_3 = arith.constant 0 : index
    %c0_4 = arith.constant 0 : index
    %3 = vector.load %arg5[%c0_3, %c0_4] : memref<1x128xf32, #tpu.memory_space<vmem>>, vector<1x128xf32>
    %4 = vector.broadcast %3 : vector<1x128xf32> to vector<2x128xf32>
    %5 = arith.addf %2, %4 : vector<2x128xf32>
    %6 = math.tanh %5 : vector<2x128xf32>
    %c0_5 = arith.constant 0 : index
    %c0_6 = arith.constant 0 : index
    %7 = vector.load %arg6[%c0_5, %c0_6] : memref<128x128xf32, #tpu.memory_space<vmem>>, vector<128x128xf32>
    %cst_7 = arith.constant dense<0.000000e+00> : vector<2x128xf32>
    %8 = tpu.matmul %6, %7, %cst_7 {dimension_numbers = #tpu.dot_dimension_numbers<[1], [0], [0], [1], [0, 0, 1, 1], [], []>} : vector<2x128xf32>, vector<128x128xf32>, vector<2x128xf32> -> vector<2x128xf32>
    %c0_8 = arith.constant 0 : index
    %c0_9 = arith.constant 0 : index
    %9 = vector.load %arg7[%c0_8, %c0_9] : memref<1x128xf32, #tpu.memory_space<vmem>>, vector<1x128xf32>
    %10 = vector.broadcast %9 : vector<1x128xf32> to vector<2x128xf32>
    %11 = arith.addf %8, %10 : vector<2x128xf32>
    %12 = math.tanh %11 : vector<2x128xf32>
    %c0_10 = arith.constant 0 : index
    %c0_11 = arith.constant 0 : index
    %13 = vector.load %arg8[%c0_10, %c0_11] : memref<128x4xf32, #tpu.memory_space<vmem>>, vector<128x4xf32>
    %cst_12 = arith.constant dense<0.000000e+00> : vector<2x4xf32>
    %14 = tpu.matmul %12, %13, %cst_12 {dimension_numbers = #tpu.dot_dimension_numbers<[1], [0], [0], [1], [0, 0, 1, 1], [], []>} : vector<2x128xf32>, vector<128x4xf32>, vector<2x4xf32> -> vector<2x4xf32>
    %c0_13 = arith.constant 0 : index
    %c0_14 = arith.constant 0 : index
    %15 = vector.load %arg9[%c0_13, %c0_14] : memref<1x4xf32, #tpu.memory_space<vmem>>, vector<1x4xf32>
    %16 = vector.broadcast %15 : vector<1x4xf32> to vector<2x4xf32>
    %17 = arith.addf %14, %16 : vector<2x4xf32>
    %18 = vector.extract_strided_slice %17 {offsets = [0, 0], sizes = [2, 3], strides = [1, 1]} : vector<2x4xf32> to vector<2x3xf32>
    %19 = math.tanh %18 : vector<2x3xf32>
    %20 = vector.extract_strided_slice %17 {offsets = [0, 3], sizes = [2, 1], strides = [1, 1]} : vector<2x4xf32> to vector<2x1xf32>
    %c0_15 = arith.constant 0 : index
    %c0_16 = arith.constant 0 : index
    %21 = vector.load %arg3[%c0_15, %c0_16] : memref<1x3xf32, #tpu.memory_space<vmem>>, vector<1x3xf32>
    %c0_17 = arith.constant 0 : index
    %c0_18 = arith.constant 0 : index
    %22 = vector.load %arg2[%c0_17, %c0_18] : memref<2x3xf32, #tpu.memory_space<vmem>>, vector<2x3xf32>
    %23 = arith.subf %22, %19 : vector<2x3xf32>
    %24 = arith.mulf %23, %23 : vector<2x3xf32>
    %25 = vector.broadcast %21 : vector<1x3xf32> to vector<2x3xf32>
    %26 = arith.divf %24, %25 : vector<2x3xf32>
    %cst_19 = arith.constant dense<0.000000e+00> : vector<2xf32>
    %27 = vector.multi_reduction <add>, %26, %cst_19 [1] : vector<2x3xf32> to vector<2xf32>
    %28 = vector.shape_cast %27 : vector<2xf32> to vector<2x1xf32>
    %29 = math.log %21 : vector<1x3xf32>
    %cst_20 = arith.constant dense<0.000000e+00> : vector<1xf32>
    %30 = vector.multi_reduction <add>, %29, %cst_20 [1] : vector<1x3xf32> to vector<1xf32>
    %31 = vector.shape_cast %30 : vector<1xf32> to vector<1x1xf32>
    %32 = vector.broadcast %31 : vector<1x1xf32> to vector<2x1xf32>
    %33 = arith.addf %28, %32 : vector<2x1xf32>
    %cst_21 = arith.constant 5.51363134 : f32
    %34 = vector.broadcast %cst_21 : f32 to vector<2x1xf32>
    %35 = arith.addf %33, %34 : vector<2x1xf32>
    %cst_22 = arith.constant -5.000000e-01 : f32
    %36 = vector.broadcast %cst_22 : f32 to vector<2x1xf32>
    %37 = arith.mulf %36, %35 : vector<2x1xf32>
    %cst_23 = arith.constant 8.51363086 : f32
    %38 = vector.broadcast %cst_23 : f32 to vector<1x1xf32>
    %39 = arith.addf %38, %31 : vector<1x1xf32>
    %cst_24 = arith.constant 5.000000e-01 : f32
    %40 = vector.broadcast %cst_24 : f32 to vector<1x1xf32>
    %41 = arith.mulf %40, %39 : vector<1x1xf32>
    %42 = tpu.iota {dimensions = array<i32: 1>} : vector<1x128xi32>
    %c0_i32 = arith.constant 0 : i32
    %43 = vector.broadcast %c0_i32 : i32 to vector<1x128xi32>
    %44 = arith.cmpi eq, %42, %43 : vector<1x128xi32>
    %cst_25 = arith.constant 0.000000e+00 : f32
    %45 = vector.shape_cast %44 : vector<1x128xi1> to vector<1x128xi1>
    %46 = vector.broadcast %45 : vector<1x128xi1> to vector<2x128xi1>
    %47 = vector.shape_cast %37 : vector<2x1xf32> to vector<2x1xf32>
    %48 = vector.broadcast %47 : vector<2x1xf32> to vector<2x128xf32>
    %49 = vector.broadcast %cst_25 : f32 to vector<2x128xf32>
    %50 = arith.select %46, %48, %49 : vector<2x128xi1>, vector<2x128xf32>
    %c1_i32 = arith.constant 1 : i32
    %51 = vector.broadcast %c1_i32 : i32 to vector<1x128xi32>
    %52 = arith.cmpi eq, %42, %51 : vector<1x128xi32>
    %cst_26 = arith.constant 0.000000e+00 : f32
    %53 = vector.shape_cast %52 : vector<1x128xi1> to vector<1x128xi1>
    %54 = vector.broadcast %53 : vector<1x128xi1> to vector<2x128xi1>
    %55 = vector.shape_cast %20 : vector<2x1xf32> to vector<2x1xf32>
    %56 = vector.broadcast %55 : vector<2x1xf32> to vector<2x128xf32>
    %57 = vector.broadcast %cst_26 : f32 to vector<2x128xf32>
    %58 = arith.select %54, %56, %57 : vector<2x128xi1>, vector<2x128xf32>
    %59 = arith.addf %50, %58 : vector<2x128xf32>
    %c2_i32 = arith.constant 2 : i32
    %60 = vector.broadcast %c2_i32 : i32 to vector<1x128xi32>
    %61 = arith.cmpi eq, %42, %60 : vector<1x128xi32>
    %cst_27 = arith.constant 0.000000e+00 : f32
    %62 = vector.shape_cast %41 : vector<1x1xf32> to vector<1x1xf32>
    %63 = vector.broadcast %62 : vector<1x1xf32> to vector<1x128xf32>
    %64 = vector.broadcast %cst_27 : f32 to vector<1x128xf32>
    %65 = arith.select %61, %63, %64 : vector<1x128xi1>, vector<1x128xf32>
    %66 = vector.broadcast %65 : vector<1x128xf32> to vector<2x128xf32>
    %67 = arith.addf %59, %66 : vector<2x128xf32>
    %c0_28 = arith.constant 0 : index
    %c0_29 = arith.constant 0 : index
    %68 = vector.load %arg10[%c0_28, %c0_29] : memref<2x128xf32, #tpu.memory_space<vmem>>, vector<2x128xf32>
    tpu.vector_store %arg10[%c0_28, %c0_29], %67 {strides = array<i32>} : memref<2x128xf32, #tpu.memory_space<vmem>>, vector<2x128xf32>,
    return
  }
  func.func @transform_0(%arg0: i32) -> (i32, i32) {
    %c0_i32 = arith.constant 0 : i32
    %c0_i32_0 = arith.constant 0 : i32
    return %arg0, %c0_i32 : i32, i32
  }
  func.func @transform_1(%arg0: i32) -> (i32, i32) {
    %c0_i32 = arith.constant 0 : i32
    %c0_i32_0 = arith.constant 0 : i32
    return %arg0, %c0_i32 : i32, i32
  }
  func.func @transform_2(%arg0: i32) -> (i32, i32) {
    %c0_i32 = arith.constant 0 : i32
    %c0_i32_0 = arith.constant 0 : i32
    %c0_i32_1 = arith.constant 0 : i32
    return %c0_i32, %c0_i32_0 : i32, i32
  }
  func.func @transform_3(%arg0: i32) -> (i32, i32) {
    %c0_i32 = arith.constant 0 : i32
    %c0_i32_0 = arith.constant 0 : i32
    %c0_i32_1 = arith.constant 0 : i32
    return %c0_i32, %c0_i32_0 : i32, i32
  }
  func.func @transform_4(%arg0: i32) -> (i32, i32) {
    %c0_i32 = arith.constant 0 : i32
    %c0_i32_0 = arith.constant 0 : i32
    %c0_i32_1 = arith.constant 0 : i32
    return %c0_i32, %c0_i32_0 : i32, i32
  }
  func.func @transform_5(%arg0: i32) -> (i32, i32) {
    %c0_i32 = arith.constant 0 : i32
    %c0_i32_0 = arith.constant 0 : i32
    %c0_i32_1 = arith.constant 0 : i32
    return %c0_i32, %c0_i32_0 : i32, i32
  }
  func.func @transform_6(%arg0: i32) -> (i32, i32) {
    %c0_i32 = arith.constant 0 : i32
    %c0_i32_0 = arith.constant 0 : i32
    %c0_i32_1 = arith.constant 0 : i32
    return %c0_i32, %c0_i32_0 : i32, i32
  }
  func.func @transform_7(%arg0: i32) -> (i32, i32) {
    %c0_i32 = arith.constant 0 : i32
    %c0_i32_0 = arith.constant 0 : i32
    %c0_i32_1 = arith.constant 0 : i32
    return %c0_i32, %c0_i32_0 : i32, i32
  }
  func.func @transform_8(%arg0: i32) -> (i32, i32) {
    %c0_i32 = arith.constant 0 : i32
    %c0_i32_0 = arith.constant 0 : i32
    %c0_i32_1 = arith.constant 0 : i32
    return %c0_i32, %c0_i32_0 : i32, i32
  }
  func.func @transform_9(%arg0: i32) -> (i32, i32) {
    %c0_i32 = arith.constant 0 : i32
    %c0_i32_0 = arith.constant 0 : i32
    return %arg0, %c0_i32 : i32, i32
  }
}

</mosaic_0001>

<llo_original>
// kernel: evaluate.3
$region0: #{evaluate.3}
  #allocation0 [shape = 'u32[]', space=smem, size = 0x4, offset = 0x4, fixed_abs, tag = 'smem constant byte address 0x4 - core index']
  #allocation1 [shape = 'u32[144,128]{1,0:T(1,128)}', space=vmem, size = 0x12000, scoped, tag = 'internal scratch']
  %s0 = inlined_call_operand.vmem [shape: bf16[2,4,400,192], index: 0, kind: input, shape index: {}]
  %s1 = inlined_call_operand.vmem [shape: bf16[192,64], index: 1, kind: input, shape index: {}]
  %s2 = inlined_call_operand.vmem [shape: f32[1,64], index: 2, kind: input, shape index: {}]
  %s3 = inlined_call_operand.vmem [shape: bf16[2,400,64], index: 3, kind: output, shape index: {}]
  %s4 = sld [smem:[#allocation0]]
  $region45: #{evaluate.3} parent=0
    _
  %s6 = ssub.s32 1, %s4
  %s7 = scalar_select 0, %s6, %s4
  loop: start=0, step=1, limit=4
  $region2: #{evaluate.3} parent=0 // loop_pre_header
    _
  $region3: #{evaluate.3} parent=0 // loop_header
    %s9 = sphi 0, %s13
    %p10 = scmp.ge.s32.totalorder %s9, 4
    %s16 = sphi 0, %s28
    %s17 = sphi 0, %s24
    %s18 = sphi 0, %s16
    %s19 = sphi 0, %s17
    %s20 = sphi 0, %s18
    %s21 = sphi 0, %s19
    %s33 = sphi 0, %s35
    %s36 = sphi 0, %s33
    %s37 = sphi 0, %s36
    %s53 = sphi 0, %s37
    %s57 = sphi 0, %s57
    %s59 = sphi 0, %s57
    %s60 = sphi 0, %s59
    %s74 = sphi 0, %s60
    %s78 = sphi 0, %s78
    %s80 = sphi 0, %s78
    %s81 = sphi 0, %s80
    %s95 = sphi 0, %s81
    %s103 = sphi 0, %s105
    %s106 = sphi 0, %s103
    %s107 = sphi 0, %s106
    %s123 = sphi 0, %s107
  $region4: #{evaluate.3} parent=0 // loop_header_branch
    %12 = sbr.rel (%p10) target = $region8
  $region5: #{evaluate.3} parent=0 // loop_body
    %s14 = ssub.s32 %s9, 1
    %s15 = ssub.s32 %s9, 2
    %s22 = sadd.s32 1, %s17
    %p23 = scmp.ge.s32.totalorder %s22, 1
    %s24 = scalar_select %p23, 0, %s22
    %s25 = sadd.s32 1, %s16
    %s26 = scalar_select %p23, %s25, %s16
    %p27 = scmp.ge.s32.totalorder %s26, 2
    %s28 = scalar_select %p27, 0, %s26
    %s29 = ssub.s32 %s16, %s28
    %s30 = ssub.s32 %s17, %s24
    %s31 = sor.u32 %s29, %s30
    %p32 = scmp.eq.s32.totalorder %s31, 0
    %s34 = sadd.s32 %s33, 1
    %s35 = scalar_select %p32, %s33, %s34
    %p38 = pneg %p32
    %p39 = scmp.eq.s32.totalorder %s9, 1
    %p40 = por %p38, %p39
    %p41 = scmp.ne.s32.totalorder %s33, %s36
    %p42 = scmp.eq.s32.totalorder %s9, 0
    %p43 = por %p41, %p42
    %p44 = scmp.ne.s32.totalorder %s33, %s36
    %p45 = scmp.eq.s32.totalorder %s14, 1
    %p46 = por %p44, %p45
    %p47 = scmp.ne.s32.totalorder %s36, %s37
    %p48 = scmp.eq.s32.totalorder %s14, 0
    %p49 = por %p47, %p48
    %p50 = scmp.ne.s32.totalorder %s36, %s37
    %p51 = scmp.eq.s32.totalorder %s15, 1
    %p52 = por %p50, %p51
    %p54 = scmp.ne.s32.totalorder %s37, %s53
    %p55 = scmp.eq.s32.totalorder %s15, 0
    %p56 = por %p54, %p55
    %s58 = sadd.s32 %s57, 1
    %p61 = scmp.eq.s32.totalorder %s9, 1
    %p62 = scmp.ne.s32.totalorder %s57, %s59
    %p63 = scmp.eq.s32.totalorder %s9, 0
    %p64 = por %p62, %p63
    %p65 = scmp.ne.s32.totalorder %s57, %s59
    %p66 = scmp.eq.s32.totalorder %s14, 1
    %p67 = por %p65, %p66
    %p68 = scmp.ne.s32.totalorder %s59, %s60
    %p69 = scmp.eq.s32.totalorder %s14, 0
    %p70 = por %p68, %p69
    %p71 = scmp.ne.s32.totalorder %s59, %s60
    %p72 = scmp.eq.s32.totalorder %s15, 1
    %p73 = por %p71, %p72
    %p75 = scmp.ne.s32.totalorder %s60, %s74
    %p76 = scmp.eq.s32.totalorder %s15, 0
    %p77 = por %p75, %p76
    %s79 = sadd.s32 %s78, 1
    %p82 = scmp.eq.s32.totalorder %s9, 1
    %p83 = scmp.ne.s32.totalorder %s78, %s80
    %p84 = scmp.eq.s32.totalorder %s9, 0
    %p85 = por %p83, %p84
    %p86 = scmp.ne.s32.totalorder %s78, %s80
    %p87 = scmp.eq.s32.totalorder %s14, 1
    %p88 = por %p86, %p87
    %p89 = scmp.ne.s32.totalorder %s80, %s81
    %p90 = scmp.eq.s32.totalorder %s14, 0
    %p91 = por %p89, %p90
    %p92 = scmp.ne.s32.totalorder %s80, %s81
    %p93 = scmp.eq.s32.totalorder %s15, 1
    %p94 = por %p92, %p93
    %p96 = scmp.ne.s32.totalorder %s81, %s95
    %p97 = scmp.eq.s32.totalorder %s15, 0
    %p98 = por %p96, %p97
    %s99 = ssub.s32 %s16, %s28
    %s100 = ssub.s32 %s17, %s24
    %s101 = sor.u32 %s99, %s100
    %p102 = scmp.eq.s32.totalorder %s101, 0
    %s104 = sadd.s32 %s103, 1
    %s105 = scalar_select %p102, %s103, %s104
    %p108 = pneg %p102
    %p109 = scmp.eq.s32.totalorder %s9, 1
    %p110 = por %p108, %p109
    %p111 = scmp.ne.s32.totalorder %s103, %s106
    %p112 = scmp.eq.s32.totalorder %s9, 0
    %p113 = por %p111, %p112
    %p114 = scmp.ne.s32.totalorder %s103, %s106
    %p115 = scmp.eq.s32.totalorder %s14, 1
    %p116 = por %p114, %p115
    %p117 = scmp.ne.s32.totalorder %s106, %s107
    %p118 = scmp.eq.s32.totalorder %s14, 0
    %p119 = por %p117, %p118
    %p120 = scmp.ne.s32.totalorder %s106, %s107
    %p121 = scmp.eq.s32.totalorder %s15, 1
    %p122 = por %p120, %p121
    %p124 = scmp.ne.s32.totalorder %s107, %s123
    %p125 = scmp.eq.s32.totalorder %s15, 0
    %p126 = por %p124, %p125
    %p127 = scmp.le.s32.totalorder 1, %s9
    %p128 = scmp.lt.s32.totalorder %s9, 3
    %p129 = pnand %p127, %p128
    %p130 = pneg %p129
    // Predicated region
    $region9: #{evaluate.3} parent=5 // pred_check
      _
    $region10: #{evaluate.3} parent=5 // pred_check_branch
      %132 = sbr.rel (%p129) target = $region12
    $region11: #{evaluate.3} parent=5 // pred_region
      %s133 = ssub.s32 %s9, 1
      // Predicated region
      $region13: #{evaluate.3} parent=11 // pred_check
        %p134 = pneg %p70
      $region14: #{evaluate.3} parent=11 // pred_check_branch
        %136 = sbr.rel (%p134) target = $region16
      $region15: #{evaluate.3} parent=11 // pred_region
        _
      $region16: #{evaluate.3} parent=11 // pred_fallthru
        _
      // Predicated region
      $region17: #{evaluate.3} parent=11 // pred_check
        %p137 = pneg %p91
      $region18: #{evaluate.3} parent=11 // pred_check_branch
        %139 = sbr.rel (%p137) target = $region20
      $region19: #{evaluate.3} parent=11 // pred_region
        _
      $region20: #{evaluate.3} parent=11 // pred_fallthru
        _
    $region12: #{evaluate.3} parent=5 // pred_fallthru
      _
    %p140 = scmp.lt.s32.totalorder %s9, 2
    // Predicated region
    $region21: #{evaluate.3} parent=5 // pred_check
      %p141 = pneg %p140
    $region22: #{evaluate.3} parent=5 // pred_check_branch
      %143 = sbr.rel (%p141) target = $region24
    $region23: #{evaluate.3} parent=5 // pred_region
      // Predicated region
      $region25: #{evaluate.3} parent=23 // pred_check
        %p144 = pneg %p43
      $region26: #{evaluate.3} parent=23 // pred_check_branch
        %146 = sbr.rel (%p144) target = $region28
      $region27: #{evaluate.3} parent=23 // pred_region
        %s147 = smul.u32 50, %s17
        %p148 = scmp.lt.s32.totalorder %s16, 1
        %s149 = scalar_select %p148, %s16, 1
        %p150 = scmp.lt.s32.totalorder %s147, 49
        %s151 = scalar_select %p150, %s147, 49
        %s152 = smul.addr %s151, 2
        %s153 = smul.addr %s149, 400
        %s154 = sadd.s32 %s152, %s153
        %s155 = smul.addr %s154, 4
        %s156 = scalar_lea.vmem %s0, %s155
        %s157 = smul.u32 50, %s17
      $region28: #{evaluate.3} parent=23 // pred_fallthru
        _
    $region24: #{evaluate.3} parent=5 // pred_fallthru
      _
    %p158 = scmp.le.s32.totalorder 1, %s9
    %p159 = scmp.lt.s32.totalorder %s9, 3
    %p160 = pnand %p158, %p159
    %p161 = pneg %p160
    // Predicated region
    $region29: #{evaluate.3} parent=5 // pred_check
      _
    $region30: #{evaluate.3} parent=5 // pred_check_branch
      %163 = sbr.rel (%p160) target = $region32
    $region31: #{evaluate.3} parent=5 // pred_region
      %s164 = ssub.s32 %s9, 1
      %s165 = smul.u32 50, %s19
      %p166 = scmp.lt.s32.totalorder %s18, 1
      %s167 = scalar_select %p166, %s18, 1
      %p168 = scmp.lt.s32.totalorder %s165, 49
      %s169 = scalar_select %p168, %s165, 49
      %s170 = smul.addr %s169, 2
      %s171 = smul.addr %s167, 400
      %s172 = sadd.s32 %s170, %s171
      %s173 = smul.addr %s172, 4
      %s174 = scalar_lea.vmem %s0, %s173
      %p175 = pneg %p49
      %p176 = pneg %p46
      %p177 = pneg %p70
      %p178 = pneg %p67
      %p179 = pneg %p91
      %p180 = pneg %p88
      %p181 = pneg %p119
      %p182 = pneg %p116
      %s183 = smul.u32 50, %s19
      %p184 = scmp.lt.s32.totalorder %s18, 1
      %s185 = scalar_select %p184, %s18, 1
      %p186 = scmp.lt.s32.totalorder %s183, 49
      %s187 = scalar_select %p186, %s183, 49
      %s188 = smul.addr %s185, 50
      %s189 = sadd.s32 %s187, %s188
      %s190 = smul.addr %s189, 4
      %s191 = scalar_lea.vmem %s3, %s190
      %s192 = smul.u32 50, %s19
      %p193 = scmp.lt.s32.totalorder %s18, 1
      %s194 = scalar_select %p193, %s18, 1
      %p195 = scmp.lt.s32.totalorder %s192, 49
      %s196 = scalar_select %p195, %s192, 49
      %s197 = smul.addr %s196, 2
      %s198 = smul.addr %s194, 400
      %s199 = sadd.s32 %s197, %s198
      %s200 = smul.addr %s199, 4
      %s201 = scalar_lea.vmem %s0, %s200
      %s202 = smul.u32 50, %s19
      %s203 = smul.u32 50, %s19
      %p204 = scmp.lt.s32.totalorder %s18, 1
      %s205 = scalar_select %p204, %s18, 1
      %p206 = scmp.lt.s32.totalorder %s203, 49
      %s207 = scalar_select %p206, %s203, 49
      %s208 = smul.addr %s205, 50
      %s209 = sadd.s32 %s207, %s208
      %s210 = smul.addr %s209, 4
      %s211 = scalar_lea.vmem %s3, %s210
      %s212 = smul.u32 50, %s19
      %v214 = vld [vmem:[%s1] sm:$0xf]
      %v215 = vld [vmem:[%s1 + $0x4] sm:$0xf]
      %v216 = vld [vmem:[%s1 + $0x8] sm:$0xf]
      %v217 = vld [vmem:[%s1 + $0xc] sm:$0xf]
      %v218 = vld [vmem:[%s1 + $0x10] sm:$0xf]
      %v219 = vld [vmem:[%s1 + $0x14] sm:$0xf]
      %v220 = vld [vmem:[%s1 + $0x18] sm:$0xf]
      %v221 = vld [vmem:[%s1 + $0x1c] sm:$0xf]
      %v222 = vld [vmem:[%s1 + $0x20] sm:$0xf]
      %v223 = vld [vmem:[%s1 + $0x24] sm:$0xf]
      %v224 = vld [vmem:[%s1 + $0x28] sm:$0xf]
      %v225 = vld [vmem:[%s1 + $0x2c] sm:$0xf]
      %v226 = vld [vmem:[%s1 + $0x30] sm:$0xf]
      %v227 = vld [vmem:[%s1 + $0x34] sm:$0xf]
      %v228 = vld [vmem:[%s1 + $0x38] sm:$0xf]
      %v229 = vld [vmem:[%s1 + $0x3c] sm:$0xf]
      %v230 = vld [vmem:[%s1 + $0x40] sm:$0xf]
      %v231 = vld [vmem:[%s1 + $0x44] sm:$0xf]
      %v232 = vld [vmem:[%s1 + $0x48] sm:$0xf]
      %v233 = vld [vmem:[%s1 + $0x4c] sm:$0xf]
      %v234 = vld [vmem:[%s1 + $0x50] sm:$0xf]
      %v235 = vld [vmem:[%s1 + $0x54] sm:$0xf]
      %v236 = vld [vmem:[%s1 + $0x58] sm:$0xf]
      %v237 = vld [vmem:[%s1 + $0x5c] sm:$0xf]
      %v238 = vld [vmem:[%s2] sm:$0x1]
      %v239 = vld [vmem:[%s201] sm:$0xff]
      %v240 = vld [vmem:[%s201 + $0x8] sm:$0xff]
      %v241 = vld [vmem:[%s201 + $0x10] sm:$0xff]
      %v242 = vld [vmem:[%s201 + $0x18] sm:$0xff]
      %v243 = vld [vmem:[%s201 + $0x20] sm:$0xff]
      %v244 = vld [vmem:[%s201 + $0x28] sm:$0xff]
      %v245 = vld [vmem:[%s201 + $0x30] sm:$0xff]
      %v246 = vld [vmem:[%s201 + $0x38] sm:$0xff]
      %v247 = vld [vmem:[%s201 + $0x40] sm:$0xff]
      %v248 = vld [vmem:[%s201 + $0x48] sm:$0xff]
      %v249 = vld [vmem:[%s201 + $0x50] sm:$0xff]
      %v250 = vld [vmem:[%s201 + $0x58] sm:$0xff]
      %v251 = vld [vmem:[%s201 + $0x60] sm:$0xff]
      %v252 = vld [vmem:[%s201 + $0x68] sm:$0xff]
      %v253 = vld [vmem:[%s201 + $0x70] sm:$0xff]
      %v254 = vld [vmem:[%s201 + $0x78] sm:$0xff]
      %v255 = vld [vmem:[%s201 + $0x80] sm:$0xff]
      %v256 = vld [vmem:[%s201 + $0x88] sm:$0xff]
      %v257 = vld [vmem:[%s201 + $0x90] sm:$0xff]
      %v258 = vld [vmem:[%s201 + $0x98] sm:$0xff]
      %v259 = vld [vmem:[%s201 + $0xa0] sm:$0xff]
      %v260 = vld [vmem:[%s201 + $0xa8] sm:$0xff]
      %v261 = vld [vmem:[%s201 + $0xb0] sm:$0xff]
      %v262 = vld [vmem:[%s201 + $0xb8] sm:$0xff]
      %v263 = vld [vmem:[%s201 + $0xc0] sm:$0xff]
      %v264 = vld [vmem:[%s201 + $0xc8] sm:$0xff]
      %v265 = vld [vmem:[%s201 + $0xd0] sm:$0xff]
      %v266 = vld [vmem:[%s201 + $0xd8] sm:$0xff]
      %v267 = vld [vmem:[%s201 + $0xe0] sm:$0xff]
      %v268 = vld [vmem:[%s201 + $0xe8] sm:$0xff]
      %v269 = vld [vmem:[%s201 + $0xf0] sm:$0xff]
      %v270 = vld [vmem:[%s201 + $0xf8] sm:$0xff]
      %v271 = vld [vmem:[%s201 + $0x100] sm:$0xff]
      %v272 = vld [vmem:[%s201 + $0x108] sm:$0xff]
      %v273 = vld [vmem:[%s201 + $0x110] sm:$0xff]
      %v274 = vld [vmem:[%s201 + $0x118] sm:$0xff]
      %v275 = vld [vmem:[%s201 + $0x120] sm:$0xff]
      %v276 = vld [vmem:[%s201 + $0x128] sm:$0xff]
      %v277 = vld [vmem:[%s201 + $0x130] sm:$0xff]
      %v278 = vld [vmem:[%s201 + $0x138] sm:$0xff]
      %v279 = vld [vmem:[%s201 + $0x140] sm:$0xff]
      %v280 = vld [vmem:[%s201 + $0x148] sm:$0xff]
      %v281 = vld [vmem:[%s201 + $0x150] sm:$0xff]
      %v282 = vld [vmem:[%s201 + $0x158] sm:$0xff]
      %v283 = vld [vmem:[%s201 + $0x160] sm:$0xff]
      %v284 = vld [vmem:[%s201 + $0x168] sm:$0xff]
      %v285 = vld [vmem:[%s201 + $0x170] sm:$0xff]
      %v286 = vld [vmem:[%s201 + $0x178] sm:$0xff]
      %v287 = vld [vmem:[%s201 + $0x180] sm:$0xff]
      %v288 = vld [vmem:[%s201 + $0x188] sm:$0xff]
      %v290 = vlaneseq
      %v291 = vshrl.u32 %v290, 7
      %v292 = vsub.s32 0, %v291
      %v293 = vrot.slane %v238, %v292
      %v345 = vunpack.c.l.b16 %v239
      %v346 = vunpack.c.h.b16 %v239
      %v347 = vunpack.c.l.b16 %v240
      %v348 = vunpack.c.h.b16 %v240
      %v349 = vunpack.c.l.b16 %v241
      %v350 = vunpack.c.h.b16 %v241
      %v351 = vunpack.c.l.b16 %v242
      %v352 = vunpack.c.h.b16 %v242
      %v353 = vunpack.c.l.b16 %v243
      %v354 = vunpack.c.h.b16 %v243
      %v355 = vunpack.c.l.b16 %v244
      %v356 = vunpack.c.h.b16 %v244
      %v357 = vunpack.c.l.b16 %v245
      %v358 = vunpack.c.h.b16 %v245
      %v359 = vunpack.c.l.b16 %v246
      %v360 = vunpack.c.h.b16 %v246
      %v361 = vunpack.c.l.b16 %v247
      %v362 = vunpack.c.h.b16 %v247
      %v363 = vunpack.c.l.b16 %v248
      %v364 = vunpack.c.h.b16 %v248
      %v365 = vunpack.c.l.b16 %v249
      %v366 = vunpack.c.h.b16 %v249
      %v367 = vunpack.c.l.b16 %v250
      %v368 = vunpack.c.h.b16 %v250
      %v369 = vunpack.c.l.b16 %v251
      %v370 = vunpack.c.h.b16 %v251
      %v371 = vunpack.c.l.b16 %v252
      %v372 = vunpack.c.h.b16 %v252
      %v373 = vunpack.c.l.b16 %v253
      %v374 = vunpack.c.h.b16 %v253
      %v375 = vunpack.c.l.b16 %v254
      %v376 = vunpack.c.h.b16 %v254
      %v377 = vunpack.c.l.b16 %v255
      %v378 = vunpack.c.h.b16 %v255
      %v379 = vunpack.c.l.b16 %v256
      %v380 = vunpack.c.h.b16 %v256
      %v381 = vunpack.c.l.b16 %v257
      %v382 = vunpack.c.h.b16 %v257
      %v383 = vunpack.c.l.b16 %v258
      %v384 = vunpack.c.h.b16 %v258
      %v385 = vunpack.c.l.b16 %v259
      %v386 = vunpack.c.h.b16 %v259
      %v387 = vunpack.c.l.b16 %v260
      %v388 = vunpack.c.h.b16 %v260
      %v389 = vunpack.c.l.b16 %v261
      %v390 = vunpack.c.h.b16 %v261
      %v391 = vunpack.c.l.b16 %v262
      %v392 = vunpack.c.h.b16 %v262
      %v393 = vunpack.c.l.b16 %v263
      %v394 = vunpack.c.h.b16 %v263
      %v395 = vunpack.c.l.b16 %v264
      %v396 = vunpack.c.h.b16 %v264
      %v397 = vunpack.c.l.b16 %v265
      %v398 = vunpack.c.h.b16 %v265
      %v399 = vunpack.c.l.b16 %v266
      %v400 = vunpack.c.h.b16 %v266
      %v401 = vunpack.c.l.b16 %v267
      %v402 = vunpack.c.h.b16 %v267
      %v403 = vunpack.c.l.b16 %v268
      %v404 = vunpack.c.h.b16 %v268
      %v405 = vunpack.c.l.b16 %v269
      %v406 = vunpack.c.h.b16 %v269
      %v407 = vunpack.c.l.b16 %v270
      %v408 = vunpack.c.h.b16 %v270
      %v409 = vunpack.c.l.b16 %v271
      %v410 = vunpack.c.h.b16 %v271
      %v411 = vunpack.c.l.b16 %v272
      %v412 = vunpack.c.h.b16 %v272
      %v413 = vunpack.c.l.b16 %v273
      %v414 = vunpack.c.h.b16 %v273
      %v415 = vunpack.c.l.b16 %v274
      %v416 = vunpack.c.h.b16 %v274
      %v417 = vunpack.c.l.b16 %v275
      %v418 = vunpack.c.h.b16 %v275
      %v419 = vunpack.c.l.b16 %v276
      %v420 = vunpack.c.h.b16 %v276
      %v421 = vunpack.c.l.b16 %v277
      %v422 = vunpack.c.h.b16 %v277
      %v423 = vunpack.c.l.b16 %v278
      %v424 = vunpack.c.h.b16 %v278
      %v425 = vunpack.c.l.b16 %v279
      %v426 = vunpack.c.h.b16 %v279
      %v427 = vunpack.c.l.b16 %v280
      %v428 = vunpack.c.h.b16 %v280
      %v429 = vunpack.c.l.b16 %v281
      %v430 = vunpack.c.h.b16 %v281
      %v431 = vunpack.c.l.b16 %v282
      %v432 = vunpack.c.h.b16 %v282
      %v433 = vunpack.c.l.b16 %v283
      %v434 = vunpack.c.h.b16 %v283
      %v435 = vunpack.c.l.b16 %v284
      %v436 = vunpack.c.h.b16 %v284
      %v437 = vunpack.c.l.b16 %v285
      %v438 = vunpack.c.h.b16 %v285
      %v439 = vunpack.c.l.b16 %v286
      %v440 = vunpack.c.h.b16 %v286
      %v441 = vunpack.c.l.b16 %v287
      %v442 = vunpack.c.h.b16 %v287
      %v443 = vunpack.c.l.b16 %v288
      %v444 = vunpack.c.h.b16 %v288
      %v445 = vpack.c.b16 %v347, %v345
      %v446 = vpack.c.b16 %v348, %v346
      %v447 = vpack.c.b16 %v351, %v349
      %v448 = vpack.c.b16 %v352, %v350
      %v449 = vpack.c.b16 %v355, %v353
      %v450 = vpack.c.b16 %v356, %v354
      %v451 = vpack.c.b16 %v359, %v357
      %v452 = vpack.c.b16 %v360, %v358
      %v453 = vpack.c.b16 %v363, %v361
      %v454 = vpack.c.b16 %v364, %v362
      %v455 = vpack.c.b16 %v367, %v365
      %v456 = vpack.c.b16 %v368, %v366
      %v457 = vpack.c.b16 %v371, %v369
      %v458 = vpack.c.b16 %v372, %v370
      %v459 = vpack.c.b16 %v375, %v373
      %v460 = vpack.c.b16 %v376, %v374
      %v461 = vpack.c.b16 %v379, %v377
      %v462 = vpack.c.b16 %v380, %v378
      %v463 = vpack.c.b16 %v383, %v381
      %v464 = vpack.c.b16 %v384, %v382
      %v465 = vpack.c.b16 %v387, %v385
      %v466 = vpack.c.b16 %v388, %v386
      %v467 = vpack.c.b16 %v391, %v389
      %v468 = vpack.c.b16 %v392, %v390
      %v469 = vpack.c.b16 %v395, %v393
      %v470 = vpack.c.b16 %v396, %v394
      %v471 = vpack.c.b16 %v399, %v397
      %v472 = vpack.c.b16 %v400, %v398
      %v473 = vpack.c.b16 %v403, %v401
      %v474 = vpack.c.b16 %v404, %v402
      %v475 = vpack.c.b16 %v407, %v405
      %v476 = vpack.c.b16 %v408, %v406
      %v477 = vpack.c.b16 %v411, %v409
      %v478 = vpack.c.b16 %v412, %v410
      %v479 = vpack.c.b16 %v415, %v413
      %v480 = vpack.c.b16 %v416, %v414
      %v481 = vpack.c.b16 %v419, %v417
      %v482 = vpack.c.b16 %v420, %v418
      %v483 = vpack.c.b16 %v423, %v421
      %v484 = vpack.c.b16 %v424, %v422
      %v485 = vpack.c.b16 %v427, %v425
      %v486 = vpack.c.b16 %v428, %v426
      %v487 = vpack.c.b16 %v431, %v429
      %v488 = vpack.c.b16 %v432, %v430
      %v489 = vpack.c.b16 %v435, %v433
      %v490 = vpack.c.b16 %v436, %v434
      %v491 = vpack.c.b16 %v439, %v437
      %v492 = vpack.c.b16 %v440, %v438
      %v493 = vpack.c.b16 %v443, %v441
      %v494 = vpack.c.b16 %v444, %v442
      %v544 = vunpack.c.l.b16 %v214
      %v545 = vunpack.c.l.b16 %v215
      %v546 = vunpack.c.l.b16 %v216
      %v547 = vunpack.c.l.b16 %v217
      %v548 = vunpack.c.l.b16 %v218
      %v549 = vunpack.c.l.b16 %v219
      %v550 = vunpack.c.l.b16 %v220
      %v551 = vunpack.c.l.b16 %v221
      %v552 = vunpack.c.l.b16 %v222
      %v553 = vunpack.c.l.b16 %v223
      %v554 = vunpack.c.l.b16 %v224
      %v555 = vunpack.c.l.b16 %v225
      %v556 = vunpack.c.l.b16 %v226
      %v557 = vunpack.c.l.b16 %v227
      %v558 = vunpack.c.l.b16 %v228
      %v559 = vunpack.c.l.b16 %v229
      %v560 = vunpack.c.l.b16 %v230
      %v561 = vunpack.c.l.b16 %v231
      %v562 = vunpack.c.l.b16 %v232
      %v563 = vunpack.c.l.b16 %v233
      %v564 = vunpack.c.l.b16 %v234
      %v565 = vunpack.c.l.b16 %v235
      %v566 = vunpack.c.l.b16 %v236
      %v567 = vunpack.c.l.b16 %v237
      %v568 = vpack.c.b16 %v545, %v544
      %v569 = vpack.c.b16 %v547, %v546
      %v570 = vpack.c.b16 %v549, %v548
      %v571 = vpack.c.b16 %v551, %v550
      %v572 = vpack.c.b16 %v553, %v552
      %v573 = vpack.c.b16 %v555, %v554
      %v574 = vpack.c.b16 %v557, %v556
      %v575 = vpack.c.b16 %v559, %v558
      %v576 = vpack.c.b16 %v561, %v560
      %v577 = vpack.c.b16 %v563, %v562
      %v578 = vpack.c.b16 %v565, %v564
      %v579 = vpack.c.b16 %v567, %v566
      %vm592 = vcmask 523264
      %v594 = vsel %vm592, %v446, 0
      %v597 = vsel %vm592, %v448, 0
      %v600 = vsel %vm592, %v450, 0
      %v603 = vsel %vm592, %v452, 0
      %v606 = vsel %vm592, %v454, 0
      %v609 = vsel %vm592, %v456, 0
      %v612 = vsel %vm592, %v458, 0
      %v615 = vsel %vm592, %v460, 0
      %v618 = vsel %vm592, %v462, 0
      %v621 = vsel %vm592, %v464, 0
      %v624 = vsel %vm592, %v466, 0
      %v627 = vsel %vm592, %v468, 0
      %v630 = vsel %vm592, %v470, 0
      %v633 = vsel %vm592, %v472, 0
      %v636 = vsel %vm592, %v474, 0
      %v639 = vsel %vm592, %v476, 0
      %v642 = vsel %vm592, %v478, 0
      %v645 = vsel %vm592, %v480, 0
      %v648 = vsel %vm592, %v482, 0
      %v651 = vsel %vm592, %v484, 0
      %v654 = vsel %vm592, %v486, 0
      %v657 = vsel %vm592, %v488, 0
      %v660 = vsel %vm592, %v490, 0
      %v663 = vsel %vm592, %v492, 0
      %v666 = vsel %vm592, %v494, 0
      %668 = vmatprep.subr.bf16.mxu0 0
      %669 = vmatpush1.bf16.msra.mxu0 %v568
      %670 = vmatprep.subr.bf16.mxu0 0
      %671 = vmatpush1.bf16.msra.mxu0 %v569
      %672 = vmatprep.subr.bf16.mxu0 0
      %673 = vmatpush1.bf16.msra.mxu0 %v570
      %674 = vmatprep.subr.bf16.mxu0 0
      %675 = vmatpush1.bf16.msra.mxu0 %v571
      %676 = vmatprep.subr.bf16.mxu0 0
      %677 = vmatpush1.bf16.msra.mxu0 %v572
      %678 = vmatprep.subr.bf16.mxu0 0
      %679 = vmatpush1.bf16.msra.mxu0 %v573
      %680 = vmatprep.subr.bf16.mxu0 0
      %681 = vmatpush1.bf16.msra.mxu0 %v574
      %682 = vmatprep.subr.bf16.mxu0 0
      %683 = vmatpush1.bf16.msra.mxu0 %v575
      %684 = vmatprep.subr.bf16.mxu0 0
      %685 = vmatpush1.bf16.msra.mxu0 %v576
      %686 = vmatprep.subr.bf16.mxu0 0
      %687 = vmatpush1.bf16.msra.mxu0 %v577
      %688 = vmatprep.subr.bf16.mxu0 0
      %689 = vmatpush1.bf16.msra.mxu0 %v578
      %690 = vmatprep.subr.bf16.mxu0 0
      %691 = vmatpush1.bf16.msra.mxu0 %v579
      %692 = vmatprep.subr.bf16.mxu0 0
      %693 = vmatpush1.bf16.msra.mxu0 0
      %694 = vmatprep.subr.bf16.mxu0 0
      %695 = vmatpush1.bf16.msra.mxu0 0
      %696 = vmatprep.subr.bf16.mxu0 0
      %697 = vmatpush1.bf16.msra.mxu0 0
      %698 = vmatprep.subr.bf16.mxu0 0
      %699 = vmatpush1.bf16.msra.mxu0 0
      %700 = vmatprep.mubr.bf16.mxu0 %v594
      %701 = vmatmul.mubr.bf16.gmra.mrb[0].mxu0 %v445
      %v702 = vpop.f32.mrb[0].mxu0
      %v703 = vadd.f32 %v293, %v702
      %v704 = vpop.f32.mrb[0].mxu0
      %v705 = vpop.f32.mrb[0].mxu0
      %v706 = vadd.f32 %v293, %v705
      %v707 = vpop.f32.mrb[0].mxu0
      %708 = vmatprep.mubr.bf16.mxu0 %v597
      %709 = vmatmul.mubr.bf16.gmra.mrb[0].mxu0 %v447
      %v710 = vpop.f32.mrb[0].mxu0
      %v711 = vadd.f32 %v293, %v710
      %v712 = vpop.f32.mrb[0].mxu0
      %v713 = vpop.f32.mrb[0].mxu0
      %v714 = vadd.f32 %v293, %v713
      %v715 = vpop.f32.mrb[0].mxu0
      %716 = vmatprep.mubr.bf16.mxu0 %v600
      %717 = vmatmul.mubr.bf16.gmra.mrb[0].mxu0 %v449
      %v718 = vpop.f32.mrb[0].mxu0
      %v719 = vadd.f32 %v293, %v718
      %v720 = vpop.f32.mrb[0].mxu0
      %v721 = vpop.f32.mrb[0].mxu0
      %v722 = vadd.f32 %v293, %v721
      %v723 = vpop.f32.mrb[0].mxu0
      %724 = vmatprep.mubr.bf16.mxu0 %v603
      %725 = vmatmul.mubr.bf16.gmra.mrb[0].mxu0 %v451
      %v726 = vpop.f32.mrb[0].mxu0
      %v727 = vadd.f32 %v293, %v726
      %v728 = vpop.f32.mrb[0].mxu0
      %v729 = vpop.f32.mrb[0].mxu0
      %v730 = vadd.f32 %v293, %v729
      %v731 = vpop.f32.mrb[0].mxu0
      %732 = vmatprep.mubr.bf16.mxu0 %v606
      %733 = vmatmul.mubr.bf16.gmra.mrb[0].mxu0 %v453
      %v734 = vpop.f32.mrb[0].mxu0
      %v735 = vadd.f32 %v293, %v734
      %v736 = vpop.f32.mrb[0].mxu0
      %v737 = vpop.f32.mrb[0].mxu0
      %v738 = vadd.f32 %v293, %v737
      %v739 = vpop.f32.mrb[0].mxu0
      %740 = vmatprep.mubr.bf16.mxu0 %v609
      %741 = vmatmul.mubr.bf16.gmra.mrb[0].mxu0 %v455
      %v742 = vpop.f32.mrb[0].mxu0
      %v743 = vadd.f32 %v293, %v742
      %v744 = vpop.f32.mrb[0].mxu0
      %v745 = vpop.f32.mrb[0].mxu0
      %v746 = vadd.f32 %v293, %v745
      %v747 = vpop.f32.mrb[0].mxu0
      %748 = vmatprep.mubr.bf16.mxu0 %v612
      %749 = vmatmul.mubr.bf16.gmra.mrb[0].mxu0 %v457
      %v750 = vpop.f32.mrb[0].mxu0
      %v751 = vadd.f32 %v293, %v750
      %v752 = vpop.f32.mrb[0].mxu0
      %v753 = vpop.f32.mrb[0].mxu0
      %v754 = vadd.f32 %v293, %v753
      %v755 = vpop.f32.mrb[0].mxu0
      %756 = vmatprep.mubr.bf16.mxu0 %v615
      %757 = vmatmul.mubr.bf16.gmra.mrb[0].mxu0 %v459
      %v758 = vpop.f32.mrb[0].mxu0
      %v759 = vadd.f32 %v293, %v758
      %v760 = vpop.f32.mrb[0].mxu0
      %v761 = vpop.f32.mrb[0].mxu0
      %v762 = vadd.f32 %v293, %v761
      %v763 = vpop.f32.mrb[0].mxu0
      %764 = vmatprep.mubr.bf16.mxu0 %v618
      %765 = vmatmul.mubr.bf16.gmra.mrb[0].mxu0 %v461
      %v766 = vpop.f32.mrb[0].mxu0
      %v767 = vadd.f32 %v293, %v766
      %v768 = vpop.f32.mrb[0].mxu0
      %v769 = vpop.f32.mrb[0].mxu0
      %v770 = vadd.f32 %v293, %v769
      %v771 = vpop.f32.mrb[0].mxu0
      %772 = vmatprep.mubr.bf16.mxu0 %v621
      %773 = vmatmul.mubr.bf16.gmra.mrb[0].mxu0 %v463
      %v774 = vpop.f32.mrb[0].mxu0
      %v775 = vadd.f32 %v293, %v774
      %v776 = vpop.f32.mrb[0].mxu0
      %v777 = vpop.f32.mrb[0].mxu0
      %v778 = vadd.f32 %v293, %v777
      %v779 = vpop.f32.mrb[0].mxu0
      %780 = vmatprep.mubr.bf16.mxu0 %v624
      %781 = vmatmul.mubr.bf16.gmra.mrb[0].mxu0 %v465
      %v782 = vpop.f32.mrb[0].mxu0
      %v783 = vadd.f32 %v293, %v782
      %v784 = vpop.f32.mrb[0].mxu0
      %v785 = vpop.f32.mrb[0].mxu0
      %v786 = vadd.f32 %v293, %v785
      %v787 = vpop.f32.mrb[0].mxu0
      %788 = vmatprep.mubr.bf16.mxu0 %v627
      %789 = vmatmul.mubr.bf16.gmra.mrb[0].mxu0 %v467
      %v790 = vpop.f32.mrb[0].mxu0
      %v791 = vadd.f32 %v293, %v790
      %v792 = vpop.f32.mrb[0].mxu0
      %v793 = vpop.f32.mrb[0].mxu0
      %v794 = vadd.f32 %v293, %v793
      %v795 = vpop.f32.mrb[0].mxu0
      %796 = vmatprep.mubr.bf16.mxu0 %v630
      %797 = vmatmul.mubr.bf16.gmra.mrb[0].mxu0 %v469
      %v798 = vpop.f32.mrb[0].mxu0
      %v799 = vadd.f32 %v293, %v798
      %v800 = vpop.f32.mrb[0].mxu0
      %v801 = vpop.f32.mrb[0].mxu0
      %v802 = vadd.f32 %v293, %v801
      %v803 = vpop.f32.mrb[0].mxu0
      %804 = vmatprep.mubr.bf16.mxu0 %v633
      %805 = vmatmul.mubr.bf16.gmra.mrb[0].mxu0 %v471
      %v806 = vpop.f32.mrb[0].mxu0
      %v807 = vadd.f32 %v293, %v806
      %v808 = vpop.f32.mrb[0].mxu0
      %v809 = vpop.f32.mrb[0].mxu0
      %v810 = vadd.f32 %v293, %v809
      %v811 = vpop.f32.mrb[0].mxu0
      %812 = vmatprep.mubr.bf16.mxu0 %v636
      %813 = vmatmul.mubr.bf16.gmra.mrb[0].mxu0 %v473
      %v814 = vpop.f32.mrb[0].mxu0
      %v815 = vadd.f32 %v293, %v814
      %v816 = vpop.f32.mrb[0].mxu0
      %v817 = vpop.f32.mrb[0].mxu0
      %v818 = vadd.f32 %v293, %v817
      %v819 = vpop.f32.mrb[0].mxu0
      %820 = vmatprep.mubr.bf16.mxu0 %v639
      %821 = vmatmul.mubr.bf16.gmra.mrb[0].mxu0 %v475
      %v822 = vpop.f32.mrb[0].mxu0
      %v823 = vadd.f32 %v293, %v822
      %v824 = vpop.f32.mrb[0].mxu0
      %v825 = vpop.f32.mrb[0].mxu0
      %v826 = vadd.f32 %v293, %v825
      %v827 = vpop.f32.mrb[0].mxu0
      %828 = vmatprep.mubr.bf16.mxu0 %v642
      %829 = vmatmul.mubr.bf16.gmra.mrb[0].mxu0 %v477
      %v830 = vpop.f32.mrb[0].mxu0
      %v831 = vadd.f32 %v293, %v830
      %v832 = vpop.f32.mrb[0].mxu0
      %v833 = vpop.f32.mrb[0].mxu0
      %v834 = vadd.f32 %v293, %v833
      %v835 = vpop.f32.mrb[0].mxu0
      %836 = vmatprep.mubr.bf16.mxu0 %v645
      %837 = vmatmul.mubr.bf16.gmra.mrb[0].mxu0 %v479
      %v838 = vpop.f32.mrb[0].mxu0
      %v839 = vadd.f32 %v293, %v838
      %v840 = vpop.f32.mrb[0].mxu0
      %v841 = vpop.f32.mrb[0].mxu0
      %v842 = vadd.f32 %v293, %v841
      %v843 = vpop.f32.mrb[0].mxu0
      %844 = vmatprep.mubr.bf16.mxu0 %v648
      %845 = vmatmul.mubr.bf16.gmra.mrb[0].mxu0 %v481
      %v846 = vpop.f32.mrb[0].mxu0
      %v847 = vadd.f32 %v293, %v846
      %v848 = vpop.f32.mrb[0].mxu0
      %v849 = vpop.f32.mrb[0].mxu0
      %v850 = vadd.f32 %v293, %v849
      %v851 = vpop.f32.mrb[0].mxu0
      %852 = vmatprep.mubr.bf16.mxu0 %v651
      %853 = vmatmul.mubr.bf16.gmra.mrb[0].mxu0 %v483
      %v854 = vpop.f32.mrb[0].mxu0
      %v855 = vadd.f32 %v293, %v854
      %v856 = vpop.f32.mrb[0].mxu0
      %v857 = vpop.f32.mrb[0].mxu0
      %v858 = vadd.f32 %v293, %v857
      %v859 = vpop.f32.mrb[0].mxu0
      %860 = vmatprep.mubr.bf16.mxu0 %v654
      %861 = vmatmul.mubr.bf16.gmra.mrb[0].mxu0 %v485
      %v862 = vpop.f32.mrb[0].mxu0
      %v863 = vadd.f32 %v293, %v862
      %v864 = vpop.f32.mrb[0].mxu0
      %v865 = vpop.f32.mrb[0].mxu0
      %v866 = vadd.f32 %v293, %v865
      %v867 = vpop.f32.mrb[0].mxu0
      %868 = vmatprep.mubr.bf16.mxu0 %v657
      %869 = vmatmul.mubr.bf16.gmra.mrb[0].mxu0 %v487
      %v870 = vpop.f32.mrb[0].mxu0
      %v871 = vadd.f32 %v293, %v870
      %v872 = vpop.f32.mrb[0].mxu0
      %v873 = vpop.f32.mrb[0].mxu0
      %v874 = vadd.f32 %v293, %v873
      %v875 = vpop.f32.mrb[0].mxu0
      %876 = vmatprep.mubr.bf16.mxu0 %v660
      %877 = vmatmul.mubr.bf16.gmra.mrb[0].mxu0 %v489
      %v878 = vpop.f32.mrb[0].mxu0
      %v879 = vadd.f32 %v293, %v878
      %v880 = vpop.f32.mrb[0].mxu0
      %v881 = vpop.f32.mrb[0].mxu0
      %v882 = vadd.f32 %v293, %v881
      %v883 = vpop.f32.mrb[0].mxu0
      %884 = vmatprep.mubr.bf16.mxu0 %v663
      %885 = vmatmul.mubr.bf16.gmra.mrb[0].mxu0 %v491
      %v886 = vpop.f32.mrb[0].mxu0
      %v887 = vadd.f32 %v293, %v886
      %v888 = vpop.f32.mrb[0].mxu0
      %v889 = vpop.f32.mrb[0].mxu0
      %v890 = vadd.f32 %v293, %v889
      %v891 = vpop.f32.mrb[0].mxu0
      %892 = vmatprep.mubr.bf16.mxu0 %v666
      %893 = vmatmul.mubr.bf16.gmra.mrb[0].mxu0 %v493
      %v894 = vpop.f32.mrb[0].mxu0
      %v895 = vadd.f32 %v293, %v894
      %v896 = vpop.f32.mrb[0].mxu0
      %v897 = vpop.f32.mrb[0].mxu0
      %v898 = vadd.f32 %v293, %v897
      %v899 = vpop.f32.mrb[0].mxu0
      %900 = vdwg.mxu0
      %v901 = vtanh.pop %v703
      %v902 = vtanh.pop %v706
      %v903 = vtanh.pop %v711
      %v904 = vtanh.pop %v714
      %v905 = vtanh.pop %v719
      %v906 = vtanh.pop %v722
      %v907 = vtanh.pop %v727
      %v908 = vtanh.pop %v730
      %v909 = vtanh.pop %v735
      %v910 = vtanh.pop %v738
      %v911 = vtanh.pop %v743
      %v912 = vtanh.pop %v746
      %v913 = vtanh.pop %v751
      %v914 = vtanh.pop %v754
      %v915 = vtanh.pop %v759
      %v916 = vtanh.pop %v762
      %v917 = vtanh.pop %v767
      %v918 = vtanh.pop %v770
      %v919 = vtanh.pop %v775
      %v920 = vtanh.pop %v778
      %v921 = vtanh.pop %v783
      %v922 = vtanh.pop %v786
      %v923 = vtanh.pop %v791
      %v924 = vtanh.pop %v794
      %v925 = vtanh.pop %v799
      %v926 = vtanh.pop %v802
      %v927 = vtanh.pop %v807
      %v928 = vtanh.pop %v810
      %v929 = vtanh.pop %v815
      %v930 = vtanh.pop %v818
      %v931 = vtanh.pop %v823
      %v932 = vtanh.pop %v826
      %v933 = vtanh.pop %v831
      %v934 = vtanh.pop %v834
      %v935 = vtanh.pop %v839
      %v936 = vtanh.pop %v842
      %v937 = vtanh.pop %v847
      %v938 = vtanh.pop %v850
      %v939 = vtanh.pop %v855
      %v940 = vtanh.pop %v858
      %v941 = vtanh.pop %v863
      %v942 = vtanh.pop %v866
      %v943 = vtanh.pop %v871
      %v944 = vtanh.pop %v874
      %v945 = vtanh.pop %v879
      %v946 = vtanh.pop %v882
      %v947 = vtanh.pop %v887
      %v948 = vtanh.pop %v890
      %v949 = vtanh.pop %v895
      %v950 = vtanh.pop %v898
      %s951 = scalar_lea.vmem %s201, 400
      %v952 = vld [vmem:[%s951] sm:$0xff]
      %v953 = vld [vmem:[%s951 + $0x8] sm:$0xff]
      %v954 = vld [vmem:[%s951 + $0x10] sm:$0xff]
      %v955 = vld [vmem:[%s951 + $0x18] sm:$0xff]
      %v956 = vld [vmem:[%s951 + $0x20] sm:$0xff]
      %v957 = vld [vmem:[%s951 + $0x28] sm:$0xff]
      %v958 = vld [vmem:[%s951 + $0x30] sm:$0xff]
      %v959 = vld [vmem:[%s951 + $0x38] sm:$0xff]
      %v960 = vld [vmem:[%s951 + $0x40] sm:$0xff]
      %v961 = vld [vmem:[%s951 + $0x48] sm:$0xff]
      %v962 = vld [vmem:[%s951 + $0x50] sm:$0xff]
      %v963 = vld [vmem:[%s951 + $0x58] sm:$0xff]
      %v964 = vld [vmem:[%s951 + $0x60] sm:$0xff]
      %v965 = vld [vmem:[%s951 + $0x68] sm:$0xff]
      %v966 = vld [vmem:[%s951 + $0x70] sm:$0xff]
      %v967 = vld [vmem:[%s951 + $0x78] sm:$0xff]
      %v968 = vld [vmem:[%s951 + $0x80] sm:$0xff]
      %v969 = vld [vmem:[%s951 + $0x88] sm:$0xff]
      %v970 = vld [vmem:[%s951 + $0x90] sm:$0xff]
      %v971 = vld [vmem:[%s951 + $0x98] sm:$0xff]
      %v972 = vld [vmem:[%s951 + $0xa0] sm:$0xff]
      %v973 = vld [vmem:[%s951 + $0xa8] sm:$0xff]
      %v974 = vld [vmem:[%s951 + $0xb0] sm:$0xff]
      %v975 = vld [vmem:[%s951 + $0xb8] sm:$0xff]
      %v976 = vld [vmem:[%s951 + $0xc0] sm:$0xff]
      %v977 = vld [vmem:[%s951 + $0xc8] sm:$0xff]
      %v978 = vld [vmem:[%s951 + $0xd0] sm:$0xff]
      %v979 = vld [vmem:[%s951 + $0xd8] sm:$0xff]
      %v980 = vld [vmem:[%s951 + $0xe0] sm:$0xff]
      %v981 = vld [vmem:[%s951 + $0xe8] sm:$0xff]
      %v982 = vld [vmem:[%s951 + $0xf0] sm:$0xff]
      %v983 = vld [vmem:[%s951 + $0xf8] sm:$0xff]
      %v984 = vld [vmem:[%s951 + $0x100] sm:$0xff]
      %v985 = vld [vmem:[%s951 + $0x108] sm:$0xff]
      %v986 = vld [vmem:[%s951 + $0x110] sm:$0xff]
      %v987 = vld [vmem:[%s951 + $0x118] sm:$0xff]
      %v988 = vld [vmem:[%s951 + $0x120] sm:$0xff]
      %v989 = vld [vmem:[%s951 + $0x128] sm:$0xff]
      %v990 = vld [vmem:[%s951 + $0x130] sm:$0xff]
      %v991 = vld [vmem:[%s951 + $0x138] sm:$0xff]
      %v992 = vld [vmem:[%s951 + $0x140] sm:$0xff]
      %v993 = vld [vmem:[%s951 + $0x148] sm:$0xff]
      %v994 = vld [vmem:[%s951 + $0x150] sm:$0xff]
      %v995 = vld [vmem:[%s951 + $0x158] sm:$0xff]
      %v996 = vld [vmem:[%s951 + $0x160] sm:$0xff]
      %v997 = vld [vmem:[%s951 + $0x168] sm:$0xff]
      %v998 = vld [vmem:[%s951 + $0x170] sm:$0xff]
      %v999 = vld [vmem:[%s951 + $0x178] sm:$0xff]
      %v1000 = vld [vmem:[%s951 + $0x180] sm:$0xff]
      %v1001 = vld [vmem:[%s951 + $0x188] sm:$0xff]
      %v1052 = vunpack.c.l.b16 %v952
      %v1053 = vunpack.c.h.b16 %v952
      %v1054 = vunpack.c.l.b16 %v953
      %v1055 = vunpack.c.h.b16 %v953
      %v1056 = vunpack.c.l.b16 %v954
      %v1057 = vunpack.c.h.b16 %v954
      %v1058 = vunpack.c.l.b16 %v955
      %v1059 = vunpack.c.h.b16 %v955
      %v1060 = vunpack.c.l.b16 %v956
      %v1061 = vunpack.c.h.b16 %v956
      %v1062 = vunpack.c.l.b16 %v957
      %v1063 = vunpack.c.h.b16 %v957
      %v1064 = vunpack.c.l.b16 %v958
      %v1065 = vunpack.c.h.b16 %v958
      %v1066 = vunpack.c.l.b16 %v959
      %v1067 = vunpack.c.h.b16 %v959
      %v1068 = vunpack.c.l.b16 %v960
      %v1069 = vunpack.c.h.b16 %v960
      %v1070 = vunpack.c.l.b16 %v961
      %v1071 = vunpack.c.h.b16 %v961
      %v1072 = vunpack.c.l.b16 %v962
      %v1073 = vunpack.c.h.b16 %v962
      %v1074 = vunpack.c.l.b16 %v963
      %v1075 = vunpack.c.h.b16 %v963
      %v1076 = vunpack.c.l.b16 %v964
      %v1077 = vunpack.c.h.b16 %v964
      %v1078 = vunpack.c.l.b16 %v965
      %v1079 = vunpack.c.h.b16 %v965
      %v1080 = vunpack.c.l.b16 %v966
      %v1081 = vunpack.c.h.b16 %v966
      %v1082 = vunpack.c.l.b16 %v967
      %v1083 = vunpack.c.h.b16 %v967
      %v1084 = vunpack.c.l.b16 %v968
      %v1085 = vunpack.c.h.b16 %v968
      %v1086 = vunpack.c.l.b16 %v969
      %v1087 = vunpack.c.h.b16 %v969
      %v1088 = vunpack.c.l.b16 %v970
      %v1089 = vunpack.c.h.b16 %v970
      %v1090 = vunpack.c.l.b16 %v971
      %v1091 = vunpack.c.h.b16 %v971
      %v1092 = vunpack.c.l.b16 %v972
      %v1093 = vunpack.c.h.b16 %v972
      %v1094 = vunpack.c.l.b16 %v973
      %v1095 = vunpack.c.h.b16 %v973
      %v1096 = vunpack.c.l.b16 %v974
      %v1097 = vunpack.c.h.b16 %v974
      %v1098 = vunpack.c.l.b16 %v975
      %v1099 = vunpack.c.h.b16 %v975
      %v1100 = vunpack.c.l.b16 %v976
      %v1101 = vunpack.c.h.b16 %v976
      %v1102 = vunpack.c.l.b16 %v977
      %v1103 = vunpack.c.h.b16 %v977
      %v1104 = vunpack.c.l.b16 %v978
      %v1105 = vunpack.c.h.b16 %v978
      %v1106 = vunpack.c.l.b16 %v979
      %v1107 = vunpack.c.h.b16 %v979
      %v1108 = vunpack.c.l.b16 %v980
      %v1109 = vunpack.c.h.b16 %v980
      %v1110 = vunpack.c.l.b16 %v981
      %v1111 = vunpack.c.h.b16 %v981
      %v1112 = vunpack.c.l.b16 %v982
      %v1113 = vunpack.c.h.b16 %v982
      %v1114 = vunpack.c.l.b16 %v983
      %v1115 = vunpack.c.h.b16 %v983
      %v1116 = vunpack.c.l.b16 %v984
      %v1117 = vunpack.c.h.b16 %v984
      %v1118 = vunpack.c.l.b16 %v985
      %v1119 = vunpack.c.h.b16 %v985
      %v1120 = vunpack.c.l.b16 %v986
      %v1121 = vunpack.c.h.b16 %v986
      %v1122 = vunpack.c.l.b16 %v987
      %v1123 = vunpack.c.h.b16 %v987
      %v1124 = vunpack.c.l.b16 %v988
      %v1125 = vunpack.c.h.b16 %v988
      %v1126 = vunpack.c.l.b16 %v989
      %v1127 = vunpack.c.h.b16 %v989
      %v1128 = vunpack.c.l.b16 %v990
      %v1129 = vunpack.c.h.b16 %v990
      %v1130 = vunpack.c.l.b16 %v991
      %v1131 = vunpack.c.h.b16 %v991
      %v1132 = vunpack.c.l.b16 %v992
      %v1133 = vunpack.c.h.b16 %v992
      %v1134 = vunpack.c.l.b16 %v993
      %v1135 = vunpack.c.h.b16 %v993
      %v1136 = vunpack.c.l.b16 %v994
      %v1137 = vunpack.c.h.b16 %v994
      %v1138 = vunpack.c.l.b16 %v995
      %v1139 = vunpack.c.h.b16 %v995
      %v1140 = vunpack.c.l.b16 %v996
      %v1141 = vunpack.c.h.b16 %v996
      %v1142 = vunpack.c.l.b16 %v997
      %v1143 = vunpack.c.h.b16 %v997
      %v1144 = vunpack.c.l.b16 %v998
      %v1145 = vunpack.c.h.b16 %v998
      %v1146 = vunpack.c.l.b16 %v999
      %v1147 = vunpack.c.h.b16 %v999
      %v1148 = vunpack.c.l.b16 %v1000
      %v1149 = vunpack.c.h.b16 %v1000
      %v1150 = vunpack.c.l.b16 %v1001
      %v1151 = vunpack.c.h.b16 %v1001
      %v1152 = vpack.c.b16 %v1054, %v1052
      %v1153 = vpack.c.b16 %v1055, %v1053
      %v1154 = vpack.c.b16 %v1058, %v1056
      %v1155 = vpack.c.b16 %v1059, %v1057
      %v1156 = vpack.c.b16 %v1062, %v1060
      %v1157 = vpack.c.b16 %v1063, %v1061
      %v1158 = vpack.c.b16 %v1066, %v1064
      %v1159 = vpack.c.b16 %v1067, %v1065
      %v1160 = vpack.c.b16 %v1070, %v1068
      %v1161 = vpack.c.b16 %v1071, %v1069
      %v1162 = vpack.c.b16 %v1074, %v1072
      %v1163 = vpack.c.b16 %v1075, %v1073
      %v1164 = vpack.c.b16 %v1078, %v1076
      %v1165 = vpack.c.b16 %v1079, %v1077
      %v1166 = vpack.c.b16 %v1082, %v1080
      %v1167 = vpack.c.b16 %v1083, %v1081
      %v1168 = vpack.c.b16 %v1086, %v1084
      %v1169 = vpack.c.b16 %v1087, %v1085
      %v1170 = vpack.c.b16 %v1090, %v1088
      %v1171 = vpack.c.b16 %v1091, %v1089
      %v1172 = vpack.c.b16 %v1094, %v1092
      %v1173 = vpack.c.b16 %v1095, %v1093
      %v1174 = vpack.c.b16 %v1098, %v1096
      %v1175 = vpack.c.b16 %v1099, %v1097
      %v1176 = vpack.c.b16 %v1102, %v1100
      %v1177 = vpack.c.b16 %v1103, %v1101
      %v1178 = vpack.c.b16 %v1106, %v1104
      %v1179 = vpack.c.b16 %v1107, %v1105
      %v1180 = vpack.c.b16 %v1110, %v1108
      %v1181 = vpack.c.b16 %v1111, %v1109
      %v1182 = vpack.c.b16 %v1114, %v1112
      %v1183 = vpack.c.b16 %v1115, %v1113
      %v1184 = vpack.c.b16 %v1118, %v1116
      %v1185 = vpack.c.b16 %v1119, %v1117
      %v1186 = vpack.c.b16 %v1122, %v1120
      %v1187 = vpack.c.b16 %v1123, %v1121
      %v1188 = vpack.c.b16 %v1126, %v1124
      %v1189 = vpack.c.b16 %v1127, %v1125
      %v1190 = vpack.c.b16 %v1130, %v1128
      %v1191 = vpack.c.b16 %v1131, %v1129
      %v1192 = vpack.c.b16 %v1134, %v1132
      %v1193 = vpack.c.b16 %v1135, %v1133
      %v1194 = vpack.c.b16 %v1138, %v1136
      %v1195 = vpack.c.b16 %v1139, %v1137
      %v1196 = vpack.c.b16 %v1142, %v1140
      %v1197 = vpack.c.b16 %v1143, %v1141
      %v1198 = vpack.c.b16 %v1146, %v1144
      %v1199 = vpack.c.b16 %v1147, %v1145
      %v1200 = vpack.c.b16 %v1150, %v1148
      %v1201 = vpack.c.b16 %v1151, %v1149
      %v1228 = vsel %vm592, %v1153, 0
      %v1231 = vsel %vm592, %v1155, 0
      %v1234 = vsel %vm592, %v1157, 0
      %v1237 = vsel %vm592, %v1159, 0
      %v1240 = vsel %vm592, %v1161, 0
      %v1243 = vsel %vm592, %v1163, 0
      %v1246 = vsel %vm592, %v1165, 0
      %v1249 = vsel %vm592, %v1167, 0
      %v1252 = vsel %vm592, %v1169, 0
      %v1255 = vsel %vm592, %v1171, 0
      %v1258 = vsel %vm592, %v1173, 0
      %v1261 = vsel %vm592, %v1175, 0
      %v1264 = vsel %vm592, %v1177, 0
      %v1267 = vsel %vm592, %v1179, 0
      %v1270 = vsel %vm592, %v1181, 0
      %v1273 = vsel %vm592, %v1183, 0
      %v1276 = vsel %vm592, %v1185, 0
      %v1279 = vsel %vm592, %v1187, 0
      %v1282 = vsel %vm592, %v1189, 0
      %v1285 = vsel %vm592, %v1191, 0
      %v1288 = vsel %vm592, %v1193, 0
      %v1291 = vsel %vm592, %v1195, 0
      %v1294 = vsel %vm592, %v1197, 0
      %v1297 = vsel %vm592, %v1199, 0
      %v1300 = vsel %vm592, %v1201, 0
      %1302 = vmatprep.subr.bf16.mxu0 0
      %1303 = vmatpush1.bf16.msra.mxu0 %v568
      %1304 = vmatprep.subr.bf16.mxu0 0
      %1305 = vmatpush1.bf16.msra.mxu0 %v569
      %1306 = vmatprep.subr.bf16.mxu0 0
      %1307 = vmatpush1.bf16.msra.mxu0 %v570
      %1308 = vmatprep.subr.bf16.mxu0 0
      %1309 = vmatpush1.bf16.msra.mxu0 %v571
      %1310 = vmatprep.subr.bf16.mxu0 0
      %1311 = vmatpush1.bf16.msra.mxu0 %v572
      %1312 = vmatprep.subr.bf16.mxu0 0
      %1313 = vmatpush1.bf16.msra.mxu0 %v573
      %1314 = vmatprep.subr.bf16.mxu0 0
      %1315 = vmatpush1.bf16.msra.mxu0 %v574
      %1316 = vmatprep.subr.bf16.mxu0 0
      %1317 = vmatpush1.bf16.msra.mxu0 %v575
      %1318 = vmatprep.subr.bf16.mxu0 0
      %1319 = vmatpush1.bf16.msra.mxu0 %v576
      %1320 = vmatprep.subr.bf16.mxu0 0
      %1321 = vmatpush1.bf16.msra.mxu0 %v577
      %1322 = vmatprep.subr.bf16.mxu0 0
      %1323 = vmatpush1.bf16.msra.mxu0 %v578
      %1324 = vmatprep.subr.bf16.mxu0 0
      %1325 = vmatpush1.bf16.msra.mxu0 %v579
      %1326 = vmatprep.subr.bf16.mxu0 0
      %1327 = vmatpush1.bf16.msra.mxu0 0
      %1328 = vmatprep.subr.bf16.mxu0 0
      %1329 = vmatpush1.bf16.msra.mxu0 0
      %1330 = vmatprep.subr.bf16.mxu0 0
      %1331 = vmatpush1.bf16.msra.mxu0 0
      %1332 = vmatprep.subr.bf16.mxu0 0
      %1333 = vmatpush1.bf16.msra.mxu0 0
      %1334 = vmatprep.mubr.bf16.mxu0 %v1228
      %1335 = vmatmul.mubr.bf16.gmra.mrb[0].mxu0 %v1152
      %v1336 = vpop.f32.mrb[0].mxu0
      %v1337 = vadd.f32 %v293, %v1336
      %v1338 = vpop.f32.mrb[0].mxu0
      %v1339 = vpop.f32.mrb[0].mxu0
      %v1340 = vadd.f32 %v293, %v1339
      %v1341 = vpop.f32.mrb[0].mxu0
      %1342 = vmatprep.mubr.bf16.mxu0 %v1231
      %1343 = vmatmul.mubr.bf16.gmra.mrb[0].mxu0 %v1154
      %v1344 = vpop.f32.mrb[0].mxu0
      %v1345 = vadd.f32 %v293, %v1344
      %v1346 = vpop.f32.mrb[0].mxu0
      %v1347 = vpop.f32.mrb[0].mxu0
      %v1348 = vadd.f32 %v293, %v1347
      %v1349 = vpop.f32.mrb[0].mxu0
      %1350 = vmatprep.mubr.bf16.mxu0 %v1234
      %1351 = vmatmul.mubr.bf16.gmra.mrb[0].mxu0 %v1156
      %v1352 = vpop.f32.mrb[0].mxu0
      %v1353 = vadd.f32 %v293, %v1352
      %v1354 = vpop.f32.mrb[0].mxu0
      %v1355 = vpop.f32.mrb[0].mxu0
      %v1356 = vadd.f32 %v293, %v1355
      %v1357 = vpop.f32.mrb[0].mxu0
      %1358 = vmatprep.mubr.bf16.mxu0 %v1237
      %1359 = vmatmul.mubr.bf16.gmra.mrb[0].mxu0 %v1158
      %v1360 = vpop.f32.mrb[0].mxu0
      %v1361 = vadd.f32 %v293, %v1360
      %v1362 = vpop.f32.mrb[0].mxu0
      %v1363 = vpop.f32.mrb[0].mxu0
      %v1364 = vadd.f32 %v293, %v1363
      %v1365 = vpop.f32.mrb[0].mxu0
      %1366 = vmatprep.mubr.bf16.mxu0 %v1240
      %1367 = vmatmul.mubr.bf16.gmra.mrb[0].mxu0 %v1160
      %v1368 = vpop.f32.mrb[0].mxu0
      %v1369 = vadd.f32 %v293, %v1368
      %v1370 = vpop.f32.mrb[0].mxu0
      %v1371 = vpop.f32.mrb[0].mxu0
      %v1372 = vadd.f32 %v293, %v1371
      %v1373 = vpop.f32.mrb[0].mxu0
      %1374 = vmatprep.mubr.bf16.mxu0 %v1243
      %1375 = vmatmul.mubr.bf16.gmra.mrb[0].mxu0 %v1162
      %v1376 = vpop.f32.mrb[0].mxu0
      %v1377 = vadd.f32 %v293, %v1376
      %v1378 = vpop.f32.mrb[0].mxu0
      %v1379 = vpop.f32.mrb[0].mxu0
      %v1380 = vadd.f32 %v293, %v1379
      %v1381 = vpop.f32.mrb[0].mxu0
      %1382 = vmatprep.mubr.bf16.mxu0 %v1246
      %1383 = vmatmul.mubr.bf16.gmra.mrb[0].mxu0 %v1164
      %v1384 = vpop.f32.mrb[0].mxu0
      %v1385 = vadd.f32 %v293, %v1384
      %v1386 = vpop.f32.mrb[0].mxu0
      %v1387 = vpop.f32.mrb[0].mxu0
      %v1388 = vadd.f32 %v293, %v1387
      %v1389 = vpop.f32.mrb[0].mxu0
      %1390 = vmatprep.mubr.bf16.mxu0 %v1249
      %1391 = vmatmul.mubr.bf16.gmra.mrb[0].mxu0 %v1166
      %v1392 = vpop.f32.mrb[0].mxu0
      %v1393 = vadd.f32 %v293, %v1392
      %v1394 = vpop.f32.mrb[0].mxu0
      %v1395 = vpop.f32.mrb[0].mxu0
      %v1396 = vadd.f32 %v293, %v1395
      %v1397 = vpop.f32.mrb[0].mxu0
      %1398 = vmatprep.mubr.bf16.mxu0 %v1252
      %1399 = vmatmul.mubr.bf16.gmra.mrb[0].mxu0 %v1168
      %v1400 = vpop.f32.mrb[0].mxu0
      %v1401 = vadd.f32 %v293, %v1400
      %v1402 = vpop.f32.mrb[0].mxu0
      %v1403 = vpop.f32.mrb[0].mxu0
      %v1404 = vadd.f32 %v293, %v1403
      %v1405 = vpop.f32.mrb[0].mxu0
      %1406 = vmatprep.mubr.bf16.mxu0 %v1255
      %1407 = vmatmul.mubr.bf16.gmra.mrb[0].mxu0 %v1170
      %v1408 = vpop.f32.mrb[0].mxu0
      %v1409 = vadd.f32 %v293, %v1408
      %v1410 = vpop.f32.mrb[0].mxu0
      %v1411 = vpop.f32.mrb[0].mxu0
      %v1412 = vadd.f32 %v293, %v1411
      %v1413 = vpop.f32.mrb[0].mxu0
      %1414 = vmatprep.mubr.bf16.mxu0 %v1258
      %1415 = vmatmul.mubr.bf16.gmra.mrb[0].mxu0 %v1172
      %v1416 = vpop.f32.mrb[0].mxu0
      %v1417 = vadd.f32 %v293, %v1416
      %v1418 = vpop.f32.mrb[0].mxu0
      %v1419 = vpop.f32.mrb[0].mxu0
      %v1420 = vadd.f32 %v293, %v1419
      %v1421 = vpop.f32.mrb[0].mxu0
      %1422 = vmatprep.mubr.bf16.mxu0 %v1261
      %1423 = vmatmul.mubr.bf16.gmra.mrb[0].mxu0 %v1174
      %v1424 = vpop.f32.mrb[0].mxu0
      %v1425 = vadd.f32 %v293, %v1424
      %v1426 = vpop.f32.mrb[0].mxu0
      %v1427 = vpop.f32.mrb[0].mxu0
      %v1428 = vadd.f32 %v293, %v1427
      %v1429 = vpop.f32.mrb[0].mxu0
      %1430 = vmatprep.mubr.bf16.mxu0 %v1264
      %1431 = vmatmul.mubr.bf16.gmra.mrb[0].mxu0 %v1176
      %v1432 = vpop.f32.mrb[0].mxu0
      %v1433 = vadd.f32 %v293, %v1432
      %v1434 = vpop.f32.mrb[0].mxu0
      %v1435 = vpop.f32.mrb[0].mxu0
      %v1436 = vadd.f32 %v293, %v1435
      %v1437 = vpop.f32.mrb[0].mxu0
      %1438 = vmatprep.mubr.bf16.mxu0 %v1267
      %1439 = vmatmul.mubr.bf16.gmra.mrb[0].mxu0 %v1178
      %v1440 = vpop.f32.mrb[0].mxu0
      %v1441 = vadd.f32 %v293, %v1440
      %v1442 = vpop.f32.mrb[0].mxu0
      %v1443 = vpop.f32.mrb[0].mxu0
      %v1444 = vadd.f32 %v293, %v1443
      %v1445 = vpop.f32.mrb[0].mxu0
      %1446 = vmatprep.mubr.bf16.mxu0 %v1270
      %1447 = vmatmul.mubr.bf16.gmra.mrb[0].mxu0 %v1180
      %v1448 = vpop.f32.mrb[0].mxu0
      %v1449 = vadd.f32 %v293, %v1448
      %v1450 = vpop.f32.mrb[0].mxu0
      %v1451 = vpop.f32.mrb[0].mxu0
      %v1452 = vadd.f32 %v293, %v1451
      %v1453 = vpop.f32.mrb[0].mxu0
      %1454 = vmatprep.mubr.bf16.mxu0 %v1273
      %1455 = vmatmul.mubr.bf16.gmra.mrb[0].mxu0 %v1182
      %v1456 = vpop.f32.mrb[0].mxu0
      %v1457 = vadd.f32 %v293, %v1456
      %v1458 = vpop.f32.mrb[0].mxu0
      %v1459 = vpop.f32.mrb[0].mxu0
      %v1460 = vadd.f32 %v293, %v1459
      %v1461 = vpop.f32.mrb[0].mxu0
      %1462 = vmatprep.mubr.bf16.mxu0 %v1276
      %1463 = vmatmul.mubr.bf16.gmra.mrb[0].mxu0 %v1184
      %v1464 = vpop.f32.mrb[0].mxu0
      %v1465 = vadd.f32 %v293, %v1464
      %v1466 = vpop.f32.mrb[0].mxu0
      %v1467 = vpop.f32.mrb[0].mxu0
      %v1468 = vadd.f32 %v293, %v1467
      %v1469 = vpop.f32.mrb[0].mxu0
      %1470 = vmatprep.mubr.bf16.mxu0 %v1279
      %1471 = vmatmul.mubr.bf16.gmra.mrb[0].mxu0 %v1186
      %v1472 = vpop.f32.mrb[0].mxu0
      %v1473 = vadd.f32 %v293, %v1472
      %v1474 = vpop.f32.mrb[0].mxu0
      %v1475 = vpop.f32.mrb[0].mxu0
      %v1476 = vadd.f32 %v293, %v1475
      %v1477 = vpop.f32.mrb[0].mxu0
      %1478 = vmatprep.mubr.bf16.mxu0 %v1282
      %1479 = vmatmul.mubr.bf16.gmra.mrb[0].mxu0 %v1188
      %v1480 = vpop.f32.mrb[0].mxu0
      %v1481 = vadd.f32 %v293, %v1480
      %v1482 = vpop.f32.mrb[0].mxu0
      %v1483 = vpop.f32.mrb[0].mxu0
      %v1484 = vadd.f32 %v293, %v1483
      %v1485 = vpop.f32.mrb[0].mxu0
      %1486 = vmatprep.mubr.bf16.mxu0 %v1285
      %1487 = vmatmul.mubr.bf16.gmra.mrb[0].mxu0 %v1190
      %v1488 = vpop.f32.mrb[0].mxu0
      %v1489 = vadd.f32 %v293, %v1488
      %v1490 = vpop.f32.mrb[0].mxu0
      %v1491 = vpop.f32.mrb[0].mxu0
      %v1492 = vadd.f32 %v293, %v1491
      %v1493 = vpop.f32.mrb[0].mxu0
      %1494 = vmatprep.mubr.bf16.mxu0 %v1288
      %1495 = vmatmul.mubr.bf16.gmra.mrb[0].mxu0 %v1192
      %v1496 = vpop.f32.mrb[0].mxu0
      %v1497 = vadd.f32 %v293, %v1496
      %v1498 = vpop.f32.mrb[0].mxu0
      %v1499 = vpop.f32.mrb[0].mxu0
      %v1500 = vadd.f32 %v293, %v1499
      %v1501 = vpop.f32.mrb[0].mxu0
      %1502 = vmatprep.mubr.bf16.mxu0 %v1291
      %1503 = vmatmul.mubr.bf16.gmra.mrb[0].mxu0 %v1194
      %v1504 = vpop.f32.mrb[0].mxu0
      %v1505 = vadd.f32 %v293, %v1504
      %v1506 = vpop.f32.mrb[0].mxu0
      %v1507 = vpop.f32.mrb[0].mxu0
      %v1508 = vadd.f32 %v293, %v1507
      %v1509 = vpop.f32.mrb[0].mxu0
      %1510 = vmatprep.mubr.bf16.mxu0 %v1294
      %1511 = vmatmul.mubr.bf16.gmra.mrb[0].mxu0 %v1196
      %v1512 = vpop.f32.mrb[0].mxu0
      %v1513 = vadd.f32 %v293, %v1512
      %v1514 = vpop.f32.mrb[0].mxu0
      %v1515 = vpop.f32.mrb[0].mxu0
      %v1516 = vadd.f32 %v293, %v1515
      %v1517 = vpop.f32.mrb[0].mxu0
      %1518 = vmatprep.mubr.bf16.mxu0 %v1297
      %1519 = vmatmul.mubr.bf16.gmra.mrb[0].mxu0 %v1198
      %v1520 = vpop.f32.mrb[0].mxu0
      %v1521 = vadd.f32 %v293, %v1520
      %v1522 = vpop.f32.mrb[0].mxu0
      %v1523 = vpop.f32.mrb[0].mxu0
      %v1524 = vadd.f32 %v293, %v1523
      %v1525 = vpop.f32.mrb[0].mxu0
      %1526 = vmatprep.mubr.bf16.mxu0 %v1300
      %1527 = vmatmul.mubr.bf16.gmra.mrb[0].mxu0 %v1200
      %v1528 = vpop.f32.mrb[0].mxu0
      %v1529 = vadd.f32 %v293, %v1528
      %v1530 = vpop.f32.mrb[0].mxu0
      %v1531 = vpop.f32.mrb[0].mxu0
      %v1532 = vadd.f32 %v293, %v1531
      %v1533 = vpop.f32.mrb[0].mxu0
      %1534 = vdwg.mxu0
      %v1535 = vtanh.pop %v1337
      %v1536 = vtanh.pop %v1340
      %v1537 = vtanh.pop %v1345
      %v1538 = vtanh.pop %v1348
      %v1539 = vtanh.pop %v1353
      %v1540 = vtanh.pop %v1356
      %v1541 = vtanh.pop %v1361
      %v1542 = vtanh.pop %v1364
      %v1543 = vtanh.pop %v1369
      %v1544 = vtanh.pop %v1372
      %v1545 = vtanh.pop %v1377
      %v1546 = vtanh.pop %v1380
      %v1547 = vtanh.pop %v1385
      %v1548 = vtanh.pop %v1388
      %v1549 = vtanh.pop %v1393
      %v1550 = vtanh.pop %v1396
      %v1551 = vtanh.pop %v1401
      %v1552 = vtanh.pop %v1404
      %v1553 = vtanh.pop %v1409
      %v1554 = vtanh.pop %v1412
      %v1555 = vtanh.pop %v1417
      %v1556 = vtanh.pop %v1420
      %v1557 = vtanh.pop %v1425
      %v1558 = vtanh.pop %v1428
      %v1559 = vtanh.pop %v1433
      %v1560 = vtanh.pop %v1436
      %v1561 = vtanh.pop %v1441
      %v1562 = vtanh.pop %v1444
      %v1563 = vtanh.pop %v1449
      %v1564 = vtanh.pop %v1452
      %v1565 = vtanh.pop %v1457
      %v1566 = vtanh.pop %v1460
      %v1567 = vtanh.pop %v1465
      %v1568 = vtanh.pop %v1468
      %v1569 = vtanh.pop %v1473
      %v1570 = vtanh.pop %v1476
      %v1571 = vtanh.pop %v1481
      %v1572 = vtanh.pop %v1484
      %v1573 = vtanh.pop %v1489
      %v1574 = vtanh.pop %v1492
      %v1575 = vtanh.pop %v1497
      %v1576 = vtanh.pop %v1500
      %v1577 = vtanh.pop %v1505
      %v1578 = vtanh.pop %v1508
      %v1579 = vtanh.pop %v1513
      %v1580 = vtanh.pop %v1516
      %v1581 = vtanh.pop %v1521
      %v1582 = vtanh.pop %v1524
      %v1583 = vtanh.pop %v1529
      %v1584 = vtanh.pop %v1532
      %v1585 = vmax.f32 %v901, %v1535
      %v1586 = vmax.f32 %v902, %v1536
      %v1587 = vmax.f32 %v903, %v1537
      %v1588 = vmax.f32 %v904, %v1538
      %v1589 = vmax.f32 %v905, %v1539
      %v1590 = vmax.f32 %v906, %v1540
      %v1591 = vmax.f32 %v907, %v1541
      %v1592 = vmax.f32 %v908, %v1542
      %v1593 = vmax.f32 %v909, %v1543
      %v1594 = vmax.f32 %v910, %v1544
      %v1595 = vmax.f32 %v911, %v1545
      %v1596 = vmax.f32 %v912, %v1546
      %v1597 = vmax.f32 %v913, %v1547
      %v1598 = vmax.f32 %v914, %v1548
      %v1599 = vmax.f32 %v915, %v1549
      %v1600 = vmax.f32 %v916, %v1550
      %v1601 = vmax.f32 %v917, %v1551
      %v1602 = vmax.f32 %v918, %v1552
      %v1603 = vmax.f32 %v919, %v1553
      %v1604 = vmax.f32 %v920, %v1554
      %v1605 = vmax.f32 %v921, %v1555
      %v1606 = vmax.f32 %v922, %v1556
      %v1607 = vmax.f32 %v923, %v1557
      %v1608 = vmax.f32 %v924, %v1558
      %v1609 = vmax.f32 %v925, %v1559
      %v1610 = vmax.f32 %v926, %v1560
      %v1611 = vmax.f32 %v927, %v1561
      %v1612 = vmax.f32 %v928, %v1562
      %v1613 = vmax.f32 %v929, %v1563
      %v1614 = vmax.f32 %v930, %v1564
      %v1615 = vmax.f32 %v931, %v1565
      %v1616 = vmax.f32 %v932, %v1566
      %v1617 = vmax.f32 %v933, %v1567
      %v1618 = vmax.f32 %v934, %v1568
      %v1619 = vmax.f32 %v935, %v1569
      %v1620 = vmax.f32 %v936, %v1570
      %v1621 = vmax.f32 %v937, %v1571
      %v1622 = vmax.f32 %v938, %v1572
      %v1623 = vmax.f32 %v939, %v1573
      %v1624 = vmax.f32 %v940, %v1574
      %v1625 = vmax.f32 %v941, %v1575
      %v1626 = vmax.f32 %v942, %v1576
      %v1627 = vmax.f32 %v943, %v1577
      %v1628 = vmax.f32 %v944, %v1578
      %v1629 = vmax.f32 %v945, %v1579
      %v1630 = vmax.f32 %v946, %v1580
      %v1631 = vmax.f32 %v947, %v1581
      %v1632 = vmax.f32 %v948, %v1582
      %v1633 = vmax.f32 %v949, %v1583
      %v1634 = vmax.f32 %v950, %v1584
      %s1635 = scalar_lea.vmem %s201, 800
      %v1636 = vld [vmem:[%s1635] sm:$0xff]
      %v1637 = vld [vmem:[%s1635 + $0x8] sm:$0xff]
      %v1638 = vld [vmem:[%s1635 + $0x10] sm:$0xff]
      %v1639 = vld [vmem:[%s1635 + $0x18] sm:$0xff]
      %v1640 = vld [vmem:[%s1635 + $0x20] sm:$0xff]
      %v1641 = vld [vmem:[%s1635 + $0x28] sm:$0xff]
      %v1642 = vld [vmem:[%s1635 + $0x30] sm:$0xff]
      %v1643 = vld [vmem:[%s1635 + $0x38] sm:$0xff]
      %v1644 = vld [vmem:[%s1635 + $0x40] sm:$0xff]
      %v1645 = vld [vmem:[%s1635 + $0x48] sm:$0xff]
      %v1646 = vld [vmem:[%s1635 + $0x50] sm:$0xff]
      %v1647 = vld [vmem:[%s1635 + $0x58] sm:$0xff]
      %v1648 = vld [vmem:[%s1635 + $0x60] sm:$0xff]
      %v1649 = vld [vmem:[%s1635 + $0x68] sm:$0xff]
      %v1650 = vld [vmem:[%s1635 + $0x70] sm:$0xff]
      %v1651 = vld [vmem:[%s1635 + $0x78] sm:$0xff]
      %v1652 = vld [vmem:[%s1635 + $0x80] sm:$0xff]
      %v1653 = vld [vmem:[%s1635 + $0x88] sm:$0xff]
      %v1654 = vld [vmem:[%s1635 + $0x90] sm:$0xff]
      %v1655 = vld [vmem:[%s1635 + $0x98] sm:$0xff]
      %v1656 = vld [vmem:[%s1635 + $0xa0] sm:$0xff]
      %v1657 = vld [vmem:[%s1635 + $0xa8] sm:$0xff]
      %v1658 = vld [vmem:[%s1635 + $0xb0] sm:$0xff]
      %v1659 = vld [vmem:[%s1635 + $0xb8] sm:$0xff]
      %v1660 = vld [vmem:[%s1635 + $0xc0] sm:$0xff]
      %v1661 = vld [vmem:[%s1635 + $0xc8] sm:$0xff]
      %v1662 = vld [vmem:[%s1635 + $0xd0] sm:$0xff]
      %v1663 = vld [vmem:[%s1635 + $0xd8] sm:$0xff]
      %v1664 = vld [vmem:[%s1635 + $0xe0] sm:$0xff]
      %v1665 = vld [vmem:[%s1635 + $0xe8] sm:$0xff]
      %v1666 = vld [vmem:[%s1635 + $0xf0] sm:$0xff]
      %v1667 = vld [vmem:[%s1635 + $0xf8] sm:$0xff]
      %v1668 = vld [vmem:[%s1635 + $0x100] sm:$0xff]
      %v1669 = vld [vmem:[%s1635 + $0x108] sm:$0xff]
      %v1670 = vld [vmem:[%s1635 + $0x110] sm:$0xff]
      %v1671 = vld [vmem:[%s1635 + $0x118] sm:$0xff]
      %v1672 = vld [vmem:[%s1635 + $0x120] sm:$0xff]
      %v1673 = vld [vmem:[%s1635 + $0x128] sm:$0xff]
      %v1674 = vld [vmem:[%s1635 + $0x130] sm:$0xff]
      %v1675 = vld [vmem:[%s1635 + $0x138] sm:$0xff]
      %v1676 = vld [vmem:[%s1635 + $0x140] sm:$0xff]
      %v1677 = vld [vmem:[%s1635 + $0x148] sm:$0xff]
      %v1678 = vld [vmem:[%s1635 + $0x150] sm:$0xff]
      %v1679 = vld [vmem:[%s1635 + $0x158] sm:$0xff]
      %v1680 = vld [vmem:[%s1635 + $0x160] sm:$0xff]
      %v1681 = vld [vmem:[%s1635 + $0x168] sm:$0xff]
      %v1682 = vld [vmem:[%s1635 + $0x170] sm:$0xff]
      %v1683 = vld [vmem:[%s1635 + $0x178] sm:$0xff]
      %v1684 = vld [vmem:[%s1635 + $0x180] sm:$0xff]
      %v1685 = vld [vmem:[%s1635 + $0x188] sm:$0xff]
      %v1736 = vunpack.c.l.b16 %v1636
      %v1737 = vunpack.c.h.b16 %v1636
      %v1738 = vunpack.c.l.b16 %v1637
      %v1739 = vunpack.c.h.b16 %v1637
      %v1740 = vunpack.c.l.b16 %v1638
      %v1741 = vunpack.c.h.b16 %v1638
      %v1742 = vunpack.c.l.b16 %v1639
      %v1743 = vunpack.c.h.b16 %v1639
      %v1744 = vunpack.c.l.b16 %v1640
      %v1745 = vunpack.c.h.b16 %v1640
      %v1746 = vunpack.c.l.b16 %v1641
      %v1747 = vunpack.c.h.b16 %v1641
      %v1748 = vunpack.c.l.b16 %v1642
      %v1749 = vunpack.c.h.b16 %v1642
      %v1750 = vunpack.c.l.b16 %v1643
      %v1751 = vunpack.c.h.b16 %v1643
      %v1752 = vunpack.c.l.b16 %v1644
      %v1753 = vunpack.c.h.b16 %v1644
      %v1754 = vunpack.c.l.b16 %v1645
      %v1755 = vunpack.c.h.b16 %v1645
      %v1756 = vunpack.c.l.b16 %v1646
      %v1757 = vunpack.c.h.b16 %v1646
      %v1758 = vunpack.c.l.b16 %v1647
      %v1759 = vunpack.c.h.b16 %v1647
      %v1760 = vunpack.c.l.b16 %v1648
      %v1761 = vunpack.c.h.b16 %v1648
      %v1762 = vunpack.c.l.b16 %v1649
      %v1763 = vunpack.c.h.b16 %v1649
      %v1764 = vunpack.c.l.b16 %v1650
      %v1765 = vunpack.c.h.b16 %v1650
      %v1766 = vunpack.c.l.b16 %v1651
      %v1767 = vunpack.c.h.b16 %v1651
      %v1768 = vunpack.c.l.b16 %v1652
      %v1769 = vunpack.c.h.b16 %v1652
      %v1770 = vunpack.c.l.b16 %v1653
      %v1771 = vunpack.c.h.b16 %v1653
      %v1772 = vunpack.c.l.b16 %v1654
      %v1773 = vunpack.c.h.b16 %v1654
      %v1774 = vunpack.c.l.b16 %v1655
      %v1775 = vunpack.c.h.b16 %v1655
      %v1776 = vunpack.c.l.b16 %v1656
      %v1777 = vunpack.c.h.b16 %v1656
      %v1778 = vunpack.c.l.b16 %v1657
      %v1779 = vunpack.c.h.b16 %v1657
      %v1780 = vunpack.c.l.b16 %v1658
      %v1781 = vunpack.c.h.b16 %v1658
      %v1782 = vunpack.c.l.b16 %v1659
      %v1783 = vunpack.c.h.b16 %v1659
      %v1784 = vunpack.c.l.b16 %v1660
      %v1785 = vunpack.c.h.b16 %v1660
      %v1786 = vunpack.c.l.b16 %v1661
      %v1787 = vunpack.c.h.b16 %v1661
      %v1788 = vunpack.c.l.b16 %v1662
      %v1789 = vunpack.c.h.b16 %v1662
      %v1790 = vunpack.c.l.b16 %v1663
      %v1791 = vunpack.c.h.b16 %v1663
      %v1792 = vunpack.c.l.b16 %v1664
      %v1793 = vunpack.c.h.b16 %v1664
      %v1794 = vunpack.c.l.b16 %v1665
      %v1795 = vunpack.c.h.b16 %v1665
      %v1796 = vunpack.c.l.b16 %v1666
      %v1797 = vunpack.c.h.b16 %v1666
      %v1798 = vunpack.c.l.b16 %v1667
      %v1799 = vunpack.c.h.b16 %v1667
      %v1800 = vunpack.c.l.b16 %v1668
      %v1801 = vunpack.c.h.b16 %v1668
      %v1802 = vunpack.c.l.b16 %v1669
      %v1803 = vunpack.c.h.b16 %v1669
      %v1804 = vunpack.c.l.b16 %v1670
      %v1805 = vunpack.c.h.b16 %v1670
      %v1806 = vunpack.c.l.b16 %v1671
      %v1807 = vunpack.c.h.b16 %v1671
      %v1808 = vunpack.c.l.b16 %v1672
      %v1809 = vunpack.c.h.b16 %v1672
      %v1810 = vunpack.c.l.b16 %v1673
      %v1811 = vunpack.c.h.b16 %v1673
      %v1812 = vunpack.c.l.b16 %v1674
      %v1813 = vunpack.c.h.b16 %v1674
      %v1814 = vunpack.c.l.b16 %v1675
      %v1815 = vunpack.c.h.b16 %v1675
      %v1816 = vunpack.c.l.b16 %v1676
      %v1817 = vunpack.c.h.b16 %v1676
      %v1818 = vunpack.c.l.b16 %v1677
      %v1819 = vunpack.c.h.b16 %v1677
      %v1820 = vunpack.c.l.b16 %v1678
      %v1821 = vunpack.c.h.b16 %v1678
      %v1822 = vunpack.c.l.b16 %v1679
      %v1823 = vunpack.c.h.b16 %v1679
      %v1824 = vunpack.c.l.b16 %v1680
      %v1825 = vunpack.c.h.b16 %v1680
      %v1826 = vunpack.c.l.b16 %v1681
      %v1827 = vunpack.c.h.b16 %v1681
      %v1828 = vunpack.c.l.b16 %v1682
      %v1829 = vunpack.c.h.b16 %v1682
      %v1830 = vunpack.c.l.b16 %v1683
      %v1831 = vunpack.c.h.b16 %v1683
      %v1832 = vunpack.c.l.b16 %v1684
      %v1833 = vunpack.c.h.b16 %v1684
      %v1834 = vunpack.c.l.b16 %v1685
      %v1835 = vunpack.c.h.b16 %v1685
      %v1836 = vpack.c.b16 %v1738, %v1736
      %v1837 = vpack.c.b16 %v1739, %v1737
      %v1838 = vpack.c.b16 %v1742, %v1740
      %v1839 = vpack.c.b16 %v1743, %v1741
      %v1840 = vpack.c.b16 %v1746, %v1744
      %v1841 = vpack.c.b16 %v1747, %v1745
      %v1842 = vpack.c.b16 %v1750, %v1748
      %v1843 = vpack.c.b16 %v1751, %v1749
      %v1844 = vpack.c.b16 %v1754, %v1752
      %v1845 = vpack.c.b16 %v1755, %v1753
      %v1846 = vpack.c.b16 %v1758, %v1756
      %v1847 = vpack.c.b16 %v1759, %v1757
      %v1848 = vpack.c.b16 %v1762, %v1760
      %v1849 = vpack.c.b16 %v1763, %v1761
      %v1850 = vpack.c.b16 %v1766, %v1764
      %v1851 = vpack.c.b16 %v1767, %v1765
      %v1852 = vpack.c.b16 %v1770, %v1768
      %v1853 = vpack.c.b16 %v1771, %v1769
      %v1854 = vpack.c.b16 %v1774, %v1772
      %v1855 = vpack.c.b16 %v1775, %v1773
      %v1856 = vpack.c.b16 %v1778, %v1776
      %v1857 = vpack.c.b16 %v1779, %v1777
      %v1858 = vpack.c.b16 %v1782, %v1780
      %v1859 = vpack.c.b16 %v1783, %v1781
      %v1860 = vpack.c.b16 %v1786, %v1784
      %v1861 = vpack.c.b16 %v1787, %v1785
      %v1862 = vpack.c.b16 %v1790, %v1788
      %v1863 = vpack.c.b16 %v1791, %v1789
      %v1864 = vpack.c.b16 %v1794, %v1792
      %v1865 = vpack.c.b16 %v1795, %v1793
      %v1866 = vpack.c.b16 %v1798, %v1796
      %v1867 = vpack.c.b16 %v1799, %v1797
      %v1868 = vpack.c.b16 %v1802, %v1800
      %v1869 = vpack.c.b16 %v1803, %v1801
      %v1870 = vpack.c.b16 %v1806, %v1804
      %v1871 = vpack.c.b16 %v1807, %v1805
      %v1872 = vpack.c.b16 %v1810, %v1808
      %v1873 = vpack.c.b16 %v1811, %v1809
      %v1874 = vpack.c.b16 %v1814, %v1812
      %v1875 = vpack.c.b16 %v1815, %v1813
      %v1876 = vpack.c.b16 %v1818, %v1816
      %v1877 = vpack.c.b16 %v1819, %v1817
      %v1878 = vpack.c.b16 %v1822, %v1820
      %v1879 = vpack.c.b16 %v1823, %v1821
      %v1880 = vpack.c.b16 %v1826, %v1824
      %v1881 = vpack.c.b16 %v1827, %v1825
      %v1882 = vpack.c.b16 %v1830, %v1828
      %v1883 = vpack.c.b16 %v1831, %v1829
      %v1884 = vpack.c.b16 %v1834, %v1832
      %v1885 = vpack.c.b16 %v1835, %v1833
      %v1912 = vsel %vm592, %v1837, 0
      %v1915 = vsel %vm592, %v1839, 0
      %v1918 = vsel %vm592, %v1841, 0
      %v1921 = vsel %vm592, %v1843, 0
      %v1924 = vsel %vm592, %v1845, 0
      %v1927 = vsel %vm592, %v1847, 0
      %v1930 = vsel %vm592, %v1849, 0
      %v1933 = vsel %vm592, %v1851, 0
      %v1936 = vsel %vm592, %v1853, 0
      %v1939 = vsel %vm592, %v1855, 0
      %v1942 = vsel %vm592, %v1857, 0
      %v1945 = vsel %vm592, %v1859, 0
      %v1948 = vsel %vm592, %v1861, 0
      %v1951 = vsel %vm592, %v1863, 0
      %v1954 = vsel %vm592, %v1865, 0
      %v1957 = vsel %vm592, %v1867, 0
      %v1960 = vsel %vm592, %v1869, 0
      %v1963 = vsel %vm592, %v1871, 0
      %v1966 = vsel %vm592, %v1873, 0
      %v1969 = vsel %vm592, %v1875, 0
      %v1972 = vsel %vm592, %v1877, 0
      %v1975 = vsel %vm592, %v1879, 0
      %v1978 = vsel %vm592, %v1881, 0
      %v1981 = vsel %vm592, %v1883, 0
      %v1984 = vsel %vm592, %v1885, 0
      %1986 = vmatprep.subr.bf16.mxu0 0
      %1987 = vmatpush1.bf16.msra.mxu0 %v568
      %1988 = vmatprep.subr.bf16.mxu0 0
      %1989 = vmatpush1.bf16.msra.mxu0 %v569
      %1990 = vmatprep.subr.bf16.mxu0 0
      %1991 = vmatpush1.bf16.msra.mxu0 %v570
      %1992 = vmatprep.subr.bf16.mxu0 0
      %1993 = vmatpush1.bf16.msra.mxu0 %v571
      %1994 = vmatprep.subr.bf16.mxu0 0
      %1995 = vmatpush1.bf16.msra.mxu0 %v572
      %1996 = vmatprep.subr.bf16.mxu0 0
      %1997 = vmatpush1.bf16.msra.mxu0 %v573
      %1998 = vmatprep.subr.bf16.mxu0 0
      %1999 = vmatpush1.bf16.msra.mxu0 %v574
      %2000 = vmatprep.subr.bf16.mxu0 0
      %2001 = vmatpush1.bf16.msra.mxu0 %v575
      %2002 = vmatprep.subr.bf16.mxu0 0
      %2003 = vmatpush1.bf16.msra.mxu0 %v576
      %2004 = vmatprep.subr.bf16.mxu0 0
      %2005 = vmatpush1.bf16.msra.mxu0 %v577
      %2006 = vmatprep.subr.bf16.mxu0 0
      %2007 = vmatpush1.bf16.msra.mxu0 %v578
      %2008 = vmatprep.subr.bf16.mxu0 0
      %2009 = vmatpush1.bf16.msra.mxu0 %v579
      %2010 = vmatprep.subr.bf16.mxu0 0
      %2011 = vmatpush1.bf16.msra.mxu0 0
      %2012 = vmatprep.subr.bf16.mxu0 0
      %2013 = vmatpush1.bf16.msra.mxu0 0
      %2014 = vmatprep.subr.bf16.mxu0 0
      %2015 = vmatpush1.bf16.msra.mxu0 0
      %2016 = vmatprep.subr.bf16.mxu0 0
      %2017 = vmatpush1.bf16.msra.mxu0 0
      %2018 = vmatprep.mubr.bf16.mxu0 %v1912
      %2019 = vmatmul.mubr.bf16.gmra.mrb[0].mxu0 %v1836
      %v2020 = vpop.f32.mrb[0].mxu0
      %v2021 = vadd.f32 %v293, %v2020
      %v2022 = vpop.f32.mrb[0].mxu0
      %v2023 = vpop.f32.mrb[0].mxu0
      %v2024 = vadd.f32 %v293, %v2023
      %v2025 = vpop.f32.mrb[0].mxu0
      %2026 = vmatprep.mubr.bf16.mxu0 %v1915
      %2027 = vmatmul.mubr.bf16.gmra.mrb[0].mxu0 %v1838
      %v2028 = vpop.f32.mrb[0].mxu0
      %v2029 = vadd.f32 %v293, %v2028
      %v2030 = vpop.f32.mrb[0].mxu0
      %v2031 = vpop.f32.mrb[0].mxu0
      %v2032 = vadd.f32 %v293, %v2031
      %v2033 = vpop.f32.mrb[0].mxu0
      %2034 = vmatprep.mubr.bf16.mxu0 %v1918
      %2035 = vmatmul.mubr.bf16.gmra.mrb[0].mxu0 %v1840
      %v2036 = vpop.f32.mrb[0].mxu0
      %v2037 = vadd.f32 %v293, %v2036
      %v2038 = vpop.f32.mrb[0].mxu0
      %v2039 = vpop.f32.mrb[0].mxu0
      %v2040 = vadd.f32 %v293, %v2039
      %v2041 = vpop.f32.mrb[0].mxu0
      %2042 = vmatprep.mubr.bf16.mxu0 %v1921
      %2043 = vmatmul.mubr.bf16.gmra.mrb[0].mxu0 %v1842
      %v2044 = vpop.f32.mrb[0].mxu0
      %v2045 = vadd.f32 %v293, %v2044
      %v2046 = vpop.f32.mrb[0].mxu0
      %v2047 = vpop.f32.mrb[0].mxu0
      %v2048 = vadd.f32 %v293, %v2047
      %v2049 = vpop.f32.mrb[0].mxu0
      %2050 = vmatprep.mubr.bf16.mxu0 %v1924
      %2051 = vmatmul.mubr.bf16.gmra.mrb[0].mxu0 %v1844
      %v2052 = vpop.f32.mrb[0].mxu0
      %v2053 = vadd.f32 %v293, %v2052
      %v2054 = vpop.f32.mrb[0].mxu0
      %v2055 = vpop.f32.mrb[0].mxu0
      %v2056 = vadd.f32 %v293, %v2055
      %v2057 = vpop.f32.mrb[0].mxu0
      %2058 = vmatprep.mubr.bf16.mxu0 %v1927
      %2059 = vmatmul.mubr.bf16.gmra.mrb[0].mxu0 %v1846
      %v2060 = vpop.f32.mrb[0].mxu0
      %v2061 = vadd.f32 %v293, %v2060
      %v2062 = vpop.f32.mrb[0].mxu0
      %v2063 = vpop.f32.mrb[0].mxu0
      %v2064 = vadd.f32 %v293, %v2063
      %v2065 = vpop.f32.mrb[0].mxu0
      %2066 = vmatprep.mubr.bf16.mxu0 %v1930
      %2067 = vmatmul.mubr.bf16.gmra.mrb[0].mxu0 %v1848
      %v2068 = vpop.f32.mrb[0].mxu0
      %v2069 = vadd.f32 %v293, %v2068
      %v2070 = vpop.f32.mrb[0].mxu0
      %v2071 = vpop.f32.mrb[0].mxu0
      %v2072 = vadd.f32 %v293, %v2071
      %v2073 = vpop.f32.mrb[0].mxu0
      %2074 = vmatprep.mubr.bf16.mxu0 %v1933
      %2075 = vmatmul.mubr.bf16.gmra.mrb[0].mxu0 %v1850
      %v2076 = vpop.f32.mrb[0].mxu0
      %v2077 = vadd.f32 %v293, %v2076
      %v2078 = vpop.f32.mrb[0].mxu0
      %v2079 = vpop.f32.mrb[0].mxu0
      %v2080 = vadd.f32 %v293, %v2079
      %v2081 = vpop.f32.mrb[0].mxu0
      %2082 = vmatprep.mubr.bf16.mxu0 %v1936
      %2083 = vmatmul.mubr.bf16.gmra.mrb[0].mxu0 %v1852
      %v2084 = vpop.f32.mrb[0].mxu0
      %v2085 = vadd.f32 %v293, %v2084
      %v2086 = vpop.f32.mrb[0].mxu0
      %v2087 = vpop.f32.mrb[0].mxu0
      %v2088 = vadd.f32 %v293, %v2087
      %v2089 = vpop.f32.mrb[0].mxu0
      %2090 = vmatprep.mubr.bf16.mxu0 %v1939
      %2091 = vmatmul.mubr.bf16.gmra.mrb[0].mxu0 %v1854
      %v2092 = vpop.f32.mrb[0].mxu0
      %v2093 = vadd.f32 %v293, %v2092
      %v2094 = vpop.f32.mrb[0].mxu0
      %v2095 = vpop.f32.mrb[0].mxu0
      %v2096 = vadd.f32 %v293, %v2095
      %v2097 = vpop.f32.mrb[0].mxu0
      %2098 = vmatprep.mubr.bf16.mxu0 %v1942
      %2099 = vmatmul.mubr.bf16.gmra.mrb[0].mxu0 %v1856
      %v2100 = vpop.f32.mrb[0].mxu0
      %v2101 = vadd.f32 %v293, %v2100
      %v2102 = vpop.f32.mrb[0].mxu0
      %v2103 = vpop.f32.mrb[0].mxu0
      %v2104 = vadd.f32 %v293, %v2103
      %v2105 = vpop.f32.mrb[0].mxu0
      %2106 = vmatprep.mubr.bf16.mxu0 %v1945
      %2107 = vmatmul.mubr.bf16.gmra.mrb[0].mxu0 %v1858
      %v2108 = vpop.f32.mrb[0].mxu0
      %v2109 = vadd.f32 %v293, %v2108
      %v2110 = vpop.f32.mrb[0].mxu0
      %v2111 = vpop.f32.mrb[0].mxu0
      %v2112 = vadd.f32 %v293, %v2111
      %v2113 = vpop.f32.mrb[0].mxu0
      %2114 = vmatprep.mubr.bf16.mxu0 %v1948
      %2115 = vmatmul.mubr.bf16.gmra.mrb[0].mxu0 %v1860
      %v2116 = vpop.f32.mrb[0].mxu0
      %v2117 = vadd.f32 %v293, %v2116
      %v2118 = vpop.f32.mrb[0].mxu0
      %v2119 = vpop.f32.mrb[0].mxu0
      %v2120 = vadd.f32 %v293, %v2119
      %v2121 = vpop.f32.mrb[0].mxu0
      %2122 = vmatprep.mubr.bf16.mxu0 %v1951
      %2123 = vmatmul.mubr.bf16.gmra.mrb[0].mxu0 %v1862
      %v2124 = vpop.f32.mrb[0].mxu0
      %v2125 = vadd.f32 %v293, %v2124
      %v2126 = vpop.f32.mrb[0].mxu0
      %v2127 = vpop.f32.mrb[0].mxu0
      %v2128 = vadd.f32 %v293, %v2127
      %v2129 = vpop.f32.mrb[0].mxu0
      %2130 = vmatprep.mubr.bf16.mxu0 %v1954
      %2131 = vmatmul.mubr.bf16.gmra.mrb[0].mxu0 %v1864
      %v2132 = vpop.f32.mrb[0].mxu0
      %v2133 = vadd.f32 %v293, %v2132
      %v2134 = vpop.f32.mrb[0].mxu0
      %v2135 = vpop.f32.mrb[0].mxu0
      %v2136 = vadd.f32 %v293, %v2135
      %v2137 = vpop.f32.mrb[0].mxu0
      %2138 = vmatprep.mubr.bf16.mxu0 %v1957
      %2139 = vmatmul.mubr.bf16.gmra.mrb[0].mxu0 %v1866
      %v2140 = vpop.f32.mrb[0].mxu0
      %v2141 = vadd.f32 %v293, %v2140
      %v2142 = vpop.f32.mrb[0].mxu0
      %v2143 = vpop.f32.mrb[0].mxu0
      %v2144 = vadd.f32 %v293, %v2143
      %v2145 = vpop.f32.mrb[0].mxu0
      %2146 = vmatprep.mubr.bf16.mxu0 %v1960
      %2147 = vmatmul.mubr.bf16.gmra.mrb[0].mxu0 %v1868
      %v2148 = vpop.f32.mrb[0].mxu0
      %v2149 = vadd.f32 %v293, %v2148
      %v2150 = vpop.f32.mrb[0].mxu0
      %v2151 = vpop.f32.mrb[0].mxu0
      %v2152 = vadd.f32 %v293, %v2151
      %v2153 = vpop.f32.mrb[0].mxu0
      %2154 = vmatprep.mubr.bf16.mxu0 %v1963
      %2155 = vmatmul.mubr.bf16.gmra.mrb[0].mxu0 %v1870
      %v2156 = vpop.f32.mrb[0].mxu0
      %v2157 = vadd.f32 %v293, %v2156
      %v2158 = vpop.f32.mrb[0].mxu0
      %v2159 = vpop.f32.mrb[0].mxu0
      %v2160 = vadd.f32 %v293, %v2159
      %v2161 = vpop.f32.mrb[0].mxu0
      %2162 = vmatprep.mubr.bf16.mxu0 %v1966
      %2163 = vmatmul.mubr.bf16.gmra.mrb[0].mxu0 %v1872
      %v2164 = vpop.f32.mrb[0].mxu0
      %v2165 = vadd.f32 %v293, %v2164
      %v2166 = vpop.f32.mrb[0].mxu0
      %v2167 = vpop.f32.mrb[0].mxu0
      %v2168 = vadd.f32 %v293, %v2167
      %v2169 = vpop.f32.mrb[0].mxu0
      %2170 = vmatprep.mubr.bf16.mxu0 %v1969
      %2171 = vmatmul.mubr.bf16.gmra.mrb[0].mxu0 %v1874
      %v2172 = vpop.f32.mrb[0].mxu0
      %v2173 = vadd.f32 %v293, %v2172
      %v2174 = vpop.f32.mrb[0].mxu0
      %v2175 = vpop.f32.mrb[0].mxu0
      %v2176 = vadd.f32 %v293, %v2175
      %v2177 = vpop.f32.mrb[0].mxu0
      %2178 = vmatprep.mubr.bf16.mxu0 %v1972
      %2179 = vmatmul.mubr.bf16.gmra.mrb[0].mxu0 %v1876
      %v2180 = vpop.f32.mrb[0].mxu0
      %v2181 = vadd.f32 %v293, %v2180
      %v2182 = vpop.f32.mrb[0].mxu0
      %v2183 = vpop.f32.mrb[0].mxu0
      %v2184 = vadd.f32 %v293, %v2183
      %v2185 = vpop.f32.mrb[0].mxu0
      %2186 = vmatprep.mubr.bf16.mxu0 %v1975
      %2187 = vmatmul.mubr.bf16.gmra.mrb[0].mxu0 %v1878
      %v2188 = vpop.f32.mrb[0].mxu0
      %v2189 = vadd.f32 %v293, %v2188
      %v2190 = vpop.f32.mrb[0].mxu0
      %v2191 = vpop.f32.mrb[0].mxu0
      %v2192 = vadd.f32 %v293, %v2191
      %v2193 = vpop.f32.mrb[0].mxu0
      %2194 = vmatprep.mubr.bf16.mxu0 %v1978
      %2195 = vmatmul.mubr.bf16.gmra.mrb[0].mxu0 %v1880
      %v2196 = vpop.f32.mrb[0].mxu0
      %v2197 = vadd.f32 %v293, %v2196
      %v2198 = vpop.f32.mrb[0].mxu0
      %v2199 = vpop.f32.mrb[0].mxu0
      %v2200 = vadd.f32 %v293, %v2199
      %v2201 = vpop.f32.mrb[0].mxu0
      %2202 = vmatprep.mubr.bf16.mxu0 %v1981
      %2203 = vmatmul.mubr.bf16.gmra.mrb[0].mxu0 %v1882
      %v2204 = vpop.f32.mrb[0].mxu0
      %v2205 = vadd.f32 %v293, %v2204
      %v2206 = vpop.f32.mrb[0].mxu0
      %v2207 = vpop.f32.mrb[0].mxu0
      %v2208 = vadd.f32 %v293, %v2207
      %v2209 = vpop.f32.mrb[0].mxu0
      %2210 = vmatprep.mubr.bf16.mxu0 %v1984
      %2211 = vmatmul.mubr.bf16.gmra.mrb[0].mxu0 %v1884
      %v2212 = vpop.f32.mrb[0].mxu0
      %v2213 = vadd.f32 %v293, %v2212
      %v2214 = vpop.f32.mrb[0].mxu0
      %v2215 = vpop.f32.mrb[0].mxu0
      %v2216 = vadd.f32 %v293, %v2215
      %v2217 = vpop.f32.mrb[0].mxu0
      %2218 = vdwg.mxu0
      %v2219 = vtanh.pop %v2021
      %v2220 = vtanh.pop %v2024
      %v2221 = vtanh.pop %v2029
      %v2222 = vtanh.pop %v2032
      %v2223 = vtanh.pop %v2037
      %v2224 = vtanh.pop %v2040
      %v2225 = vtanh.pop %v2045
      %v2226 = vtanh.pop %v2048
      %v2227 = vtanh.pop %v2053
      %v2228 = vtanh.pop %v2056
      %v2229 = vtanh.pop %v2061
      %v2230 = vtanh.pop %v2064
      %v2231 = vtanh.pop %v2069
      %v2232 = vtanh.pop %v2072
      %v2233 = vtanh.pop %v2077
      %v2234 = vtanh.pop %v2080
      %v2235 = vtanh.pop %v2085
      %v2236 = vtanh.pop %v2088
      %v2237 = vtanh.pop %v2093
      %v2238 = vtanh.pop %v2096
      %v2239 = vtanh.pop %v2101
      %v2240 = vtanh.pop %v2104
      %v2241 = vtanh.pop %v2109
      %v2242 = vtanh.pop %v2112
      %v2243 = vtanh.pop %v2117
      %v2244 = vtanh.pop %v2120
      %v2245 = vtanh.pop %v2125
      %v2246 = vtanh.pop %v2128
      %v2247 = vtanh.pop %v2133
      %v2248 = vtanh.pop %v2136
      %v2249 = vtanh.pop %v2141
      %v2250 = vtanh.pop %v2144
      %v2251 = vtanh.pop %v2149
      %v2252 = vtanh.pop %v2152
      %v2253 = vtanh.pop %v2157
      %v2254 = vtanh.pop %v2160
      %v2255 = vtanh.pop %v2165
      %v2256 = vtanh.pop %v2168
      %v2257 = vtanh.pop %v2173
      %v2258 = vtanh.pop %v2176
      %v2259 = vtanh.pop %v2181
      %v2260 = vtanh.pop %v2184
      %v2261 = vtanh.pop %v2189
      %v2262 = vtanh.pop %v2192
      %v2263 = vtanh.pop %v2197
      %v2264 = vtanh.pop %v2200
      %v2265 = vtanh.pop %v2205
      %v2266 = vtanh.pop %v2208
      %v2267 = vtanh.pop %v2213
      %v2268 = vtanh.pop %v2216
      %v2269 = vmax.f32 %v1585, %v2219
      %v2270 = vmax.f32 %v1586, %v2220
      %v2271 = vmax.f32 %v1587, %v2221
      %v2272 = vmax.f32 %v1588, %v2222
      %v2273 = vmax.f32 %v1589, %v2223
      %v2274 = vmax.f32 %v1590, %v2224
      %v2275 = vmax.f32 %v1591, %v2225
      %v2276 = vmax.f32 %v1592, %v2226
      %v2277 = vmax.f32 %v1593, %v2227
      %v2278 = vmax.f32 %v1594, %v2228
      %v2279 = vmax.f32 %v1595, %v2229
      %v2280 = vmax.f32 %v1596, %v2230
      %v2281 = vmax.f32 %v1597, %v2231
      %v2282 = vmax.f32 %v1598, %v2232
      %v2283 = vmax.f32 %v1599, %v2233
      %v2284 = vmax.f32 %v1600, %v2234
      %v2285 = vmax.f32 %v1601, %v2235
      %v2286 = vmax.f32 %v1602, %v2236
      %v2287 = vmax.f32 %v1603, %v2237
      %v2288 = vmax.f32 %v1604, %v2238
      %v2289 = vmax.f32 %v1605, %v2239
      %v2290 = vmax.f32 %v1606, %v2240
      %v2291 = vmax.f32 %v1607, %v2241
      %v2292 = vmax.f32 %v1608, %v2242
      %v2293 = vmax.f32 %v1609, %v2243
      %v2294 = vmax.f32 %v1610, %v2244
      %v2295 = vmax.f32 %v1611, %v2245
      %v2296 = vmax.f32 %v1612, %v2246
      %v2297 = vmax.f32 %v1613, %v2247
      %v2298 = vmax.f32 %v1614, %v2248
      %v2299 = vmax.f32 %v1615, %v2249
      %v2300 = vmax.f32 %v1616, %v2250
      %v2301 = vmax.f32 %v1617, %v2251
      %v2302 = vmax.f32 %v1618, %v2252
      %v2303 = vmax.f32 %v1619, %v2253
      %v2304 = vmax.f32 %v1620, %v2254
      %v2305 = vmax.f32 %v1621, %v2255
      %v2306 = vmax.f32 %v1622, %v2256
      %v2307 = vmax.f32 %v1623, %v2257
      %v2308 = vmax.f32 %v1624, %v2258
      %v2309 = vmax.f32 %v1625, %v2259
      %v2310 = vmax.f32 %v1626, %v2260
      %v2311 = vmax.f32 %v1627, %v2261
      %v2312 = vmax.f32 %v1628, %v2262
      %v2313 = vmax.f32 %v1629, %v2263
      %v2314 = vmax.f32 %v1630, %v2264
      %v2315 = vmax.f32 %v1631, %v2265
      %v2316 = vmax.f32 %v1632, %v2266
      %v2317 = vmax.f32 %v1633, %v2267
      %v2318 = vmax.f32 %v1634, %v2268
      %s2319 = scalar_lea.vmem %s201, 1200
      %v2320 = vld [vmem:[%s2319] sm:$0xff]
      %v2321 = vld [vmem:[%s2319 + $0x8] sm:$0xff]
      %v2322 = vld [vmem:[%s2319 + $0x10] sm:$0xff]
      %v2323 = vld [vmem:[%s2319 + $0x18] sm:$0xff]
      %v2324 = vld [vmem:[%s2319 + $0x20] sm:$0xff]
      %v2325 = vld [vmem:[%s2319 + $0x28] sm:$0xff]
      %v2326 = vld [vmem:[%s2319 + $0x30] sm:$0xff]
      %v2327 = vld [vmem:[%s2319 + $0x38] sm:$0xff]
      %v2328 = vld [vmem:[%s2319 + $0x40] sm:$0xff]
      %v2329 = vld [vmem:[%s2319 + $0x48] sm:$0xff]
      %v2330 = vld [vmem:[%s2319 + $0x50] sm:$0xff]
      %v2331 = vld [vmem:[%s2319 + $0x58] sm:$0xff]
      %v2332 = vld [vmem:[%s2319 + $0x60] sm:$0xff]
      %v2333 = vld [vmem:[%s2319 + $0x68] sm:$0xff]
      %v2334 = vld [vmem:[%s2319 + $0x70] sm:$0xff]
      %v2335 = vld [vmem:[%s2319 + $0x78] sm:$0xff]
      %v2336 = vld [vmem:[%s2319 + $0x80] sm:$0xff]
      %v2337 = vld [vmem:[%s2319 + $0x88] sm:$0xff]
      %v2338 = vld [vmem:[%s2319 + $0x90] sm:$0xff]
      %v2339 = vld [vmem:[%s2319 + $0x98] sm:$0xff]
      %v2340 = vld [vmem:[%s2319 + $0xa0] sm:$0xff]
      %v2341 = vld [vmem:[%s2319 + $0xa8] sm:$0xff]
      %v2342 = vld [vmem:[%s2319 + $0xb0] sm:$0xff]
      %v2343 = vld [vmem:[%s2319 + $0xb8] sm:$0xff]
      %v2344 = vld [vmem:[%s2319 + $0xc0] sm:$0xff]
      %v2345 = vld [vmem:[%s2319 + $0xc8] sm:$0xff]
      %v2346 = vld [vmem:[%s2319 + $0xd0] sm:$0xff]
      %v2347 = vld [vmem:[%s2319 + $0xd8] sm:$0xff]
      %v2348 = vld [vmem:[%s2319 + $0xe0] sm:$0xff]
      %v2349 = vld [vmem:[%s2319 + $0xe8] sm:$0xff]
      %v2350 = vld [vmem:[%s2319 + $0xf0] sm:$0xff]
      %v2351 = vld [vmem:[%s2319 + $0xf8] sm:$0xff]
      %v2352 = vld [vmem:[%s2319 + $0x100] sm:$0xff]
      %v2353 = vld [vmem:[%s2319 + $0x108] sm:$0xff]
      %v2354 = vld [vmem:[%s2319 + $0x110] sm:$0xff]
      %v2355 = vld [vmem:[%s2319 + $0x118] sm:$0xff]
      %v2356 = vld [vmem:[%s2319 + $0x120] sm:$0xff]
      %v2357 = vld [vmem:[%s2319 + $0x128] sm:$0xff]
      %v2358 = vld [vmem:[%s2319 + $0x130] sm:$0xff]
      %v2359 = vld [vmem:[%s2319 + $0x138] sm:$0xff]
      %v2360 = vld [vmem:[%s2319 + $0x140] sm:$0xff]
      %v2361 = vld [vmem:[%s2319 + $0x148] sm:$0xff]
      %v2362 = vld [vmem:[%s2319 + $0x150] sm:$0xff]
      %v2363 = vld [vmem:[%s2319 + $0x158] sm:$0xff]
      %v2364 = vld [vmem:[%s2319 + $0x160] sm:$0xff]
      %v2365 = vld [vmem:[%s2319 + $0x168] sm:$0xff]
      %v2366 = vld [vmem:[%s2319 + $0x170] sm:$0xff]
      %v2367 = vld [vmem:[%s2319 + $0x178] sm:$0xff]
      %v2368 = vld [vmem:[%s2319 + $0x180] sm:$0xff]
      %v2369 = vld [vmem:[%s2319 + $0x188] sm:$0xff]
      %v2420 = vunpack.c.l.b16 %v2320
      %v2421 = vunpack.c.h.b16 %v2320
      %v2422 = vunpack.c.l.b16 %v2321
      %v2423 = vunpack.c.h.b16 %v2321
      %v2424 = vunpack.c.l.b16 %v2322
      %v2425 = vunpack.c.h.b16 %v2322
      %v2426 = vunpack.c.l.b16 %v2323
      %v2427 = vunpack.c.h.b16 %v2323
      %v2428 = vunpack.c.l.b16 %v2324
      %v2429 = vunpack.c.h.b16 %v2324
      %v2430 = vunpack.c.l.b16 %v2325
      %v2431 = vunpack.c.h.b16 %v2325
      %v2432 = vunpack.c.l.b16 %v2326
      %v2433 = vunpack.c.h.b16 %v2326
      %v2434 = vunpack.c.l.b16 %v2327
      %v2435 = vunpack.c.h.b16 %v2327
      %v2436 = vunpack.c.l.b16 %v2328
      %v2437 = vunpack.c.h.b16 %v2328
      %v2438 = vunpack.c.l.b16 %v2329
      %v2439 = vunpack.c.h.b16 %v2329
      %v2440 = vunpack.c.l.b16 %v2330
      %v2441 = vunpack.c.h.b16 %v2330
      %v2442 = vunpack.c.l.b16 %v2331
      %v2443 = vunpack.c.h.b16 %v2331
      %v2444 = vunpack.c.l.b16 %v2332
      %v2445 = vunpack.c.h.b16 %v2332
      %v2446 = vunpack.c.l.b16 %v2333
      %v2447 = vunpack.c.h.b16 %v2333
      %v2448 = vunpack.c.l.b16 %v2334
      %v2449 = vunpack.c.h.b16 %v2334
      %v2450 = vunpack.c.l.b16 %v2335
      %v2451 = vunpack.c.h.b16 %v2335
      %v2452 = vunpack.c.l.b16 %v2336
      %v2453 = vunpack.c.h.b16 %v2336
      %v2454 = vunpack.c.l.b16 %v2337
      %v2455 = vunpack.c.h.b16 %v2337
      %v2456 = vunpack.c.l.b16 %v2338
      %v2457 = vunpack.c.h.b16 %v2338
      %v2458 = vunpack.c.l.b16 %v2339
      %v2459 = vunpack.c.h.b16 %v2339
      %v2460 = vunpack.c.l.b16 %v2340
      %v2461 = vunpack.c.h.b16 %v2340
      %v2462 = vunpack.c.l.b16 %v2341
      %v2463 = vunpack.c.h.b16 %v2341
      %v2464 = vunpack.c.l.b16 %v2342
      %v2465 = vunpack.c.h.b16 %v2342
      %v2466 = vunpack.c.l.b16 %v2343
      %v2467 = vunpack.c.h.b16 %v2343
      %v2468 = vunpack.c.l.b16 %v2344
      %v2469 = vunpack.c.h.b16 %v2344
      %v2470 = vunpack.c.l.b16 %v2345
      %v2471 = vunpack.c.h.b16 %v2345
      %v2472 = vunpack.c.l.b16 %v2346
      %v2473 = vunpack.c.h.b16 %v2346
      %v2474 = vunpack.c.l.b16 %v2347
      %v2475 = vunpack.c.h.b16 %v2347
      %v2476 = vunpack.c.l.b16 %v2348
      %v2477 = vunpack.c.h.b16 %v2348
      %v2478 = vunpack.c.l.b16 %v2349
      %v2479 = vunpack.c.h.b16 %v2349
      %v2480 = vunpack.c.l.b16 %v2350
      %v2481 = vunpack.c.h.b16 %v2350
      %v2482 = vunpack.c.l.b16 %v2351
      %v2483 = vunpack.c.h.b16 %v2351
      %v2484 = vunpack.c.l.b16 %v2352
      %v2485 = vunpack.c.h.b16 %v2352
      %v2486 = vunpack.c.l.b16 %v2353
      %v2487 = vunpack.c.h.b16 %v2353
      %v2488 = vunpack.c.l.b16 %v2354
      %v2489 = vunpack.c.h.b16 %v2354
      %v2490 = vunpack.c.l.b16 %v2355
      %v2491 = vunpack.c.h.b16 %v2355
      %v2492 = vunpack.c.l.b16 %v2356
      %v2493 = vunpack.c.h.b16 %v2356
      %v2494 = vunpack.c.l.b16 %v2357
      %v2495 = vunpack.c.h.b16 %v2357
      %v2496 = vunpack.c.l.b16 %v2358
      %v2497 = vunpack.c.h.b16 %v2358
      %v2498 = vunpack.c.l.b16 %v2359
      %v2499 = vunpack.c.h.b16 %v2359
      %v2500 = vunpack.c.l.b16 %v2360
      %v2501 = vunpack.c.h.b16 %v2360
      %v2502 = vunpack.c.l.b16 %v2361
      %v2503 = vunpack.c.h.b16 %v2361
      %v2504 = vunpack.c.l.b16 %v2362
      %v2505 = vunpack.c.h.b16 %v2362
      %v2506 = vunpack.c.l.b16 %v2363
      %v2507 = vunpack.c.h.b16 %v2363
      %v2508 = vunpack.c.l.b16 %v2364
      %v2509 = vunpack.c.h.b16 %v2364
      %v2510 = vunpack.c.l.b16 %v2365
      %v2511 = vunpack.c.h.b16 %v2365
      %v2512 = vunpack.c.l.b16 %v2366
      %v2513 = vunpack.c.h.b16 %v2366
      %v2514 = vunpack.c.l.b16 %v2367
      %v2515 = vunpack.c.h.b16 %v2367
      %v2516 = vunpack.c.l.b16 %v2368
      %v2517 = vunpack.c.h.b16 %v2368
      %v2518 = vunpack.c.l.b16 %v2369
      %v2519 = vunpack.c.h.b16 %v2369
      %v2520 = vpack.c.b16 %v2422, %v2420
      %v2521 = vpack.c.b16 %v2423, %v2421
      %v2522 = vpack.c.b16 %v2426, %v2424
      %v2523 = vpack.c.b16 %v2427, %v2425
      %v2524 = vpack.c.b16 %v2430, %v2428
      %v2525 = vpack.c.b16 %v2431, %v2429
      %v2526 = vpack.c.b16 %v2434, %v2432
      %v2527 = vpack.c.b16 %v2435, %v2433
      %v2528 = vpack.c.b16 %v2438, %v2436
      %v2529 = vpack.c.b16 %v2439, %v2437
      %v2530 = vpack.c.b16 %v2442, %v2440
      %v2531 = vpack.c.b16 %v2443, %v2441
      %v2532 = vpack.c.b16 %v2446, %v2444
      %v2533 = vpack.c.b16 %v2447, %v2445
      %v2534 = vpack.c.b16 %v2450, %v2448
      %v2535 = vpack.c.b16 %v2451, %v2449
      %v2536 = vpack.c.b16 %v2454, %v2452
      %v2537 = vpack.c.b16 %v2455, %v2453
      %v2538 = vpack.c.b16 %v2458, %v2456
      %v2539 = vpack.c.b16 %v2459, %v2457
      %v2540 = vpack.c.b16 %v2462, %v2460
      %v2541 = vpack.c.b16 %v2463, %v2461
      %v2542 = vpack.c.b16 %v2466, %v2464
      %v2543 = vpack.c.b16 %v2467, %v2465
      %v2544 = vpack.c.b16 %v2470, %v2468
      %v2545 = vpack.c.b16 %v2471, %v2469
      %v2546 = vpack.c.b16 %v2474, %v2472
      %v2547 = vpack.c.b16 %v2475, %v2473
      %v2548 = vpack.c.b16 %v2478, %v2476
      %v2549 = vpack.c.b16 %v2479, %v2477
      %v2550 = vpack.c.b16 %v2482, %v2480
      %v2551 = vpack.c.b16 %v2483, %v2481
      %v2552 = vpack.c.b16 %v2486, %v2484
      %v2553 = vpack.c.b16 %v2487, %v2485
      %v2554 = vpack.c.b16 %v2490, %v2488
      %v2555 = vpack.c.b16 %v2491, %v2489
      %v2556 = vpack.c.b16 %v2494, %v2492
      %v2557 = vpack.c.b16 %v2495, %v2493
      %v2558 = vpack.c.b16 %v2498, %v2496
      %v2559 = vpack.c.b16 %v2499, %v2497
      %v2560 = vpack.c.b16 %v2502, %v2500
      %v2561 = vpack.c.b16 %v2503, %v2501
      %v2562 = vpack.c.b16 %v2506, %v2504
      %v2563 = vpack.c.b16 %v2507, %v2505
      %v2564 = vpack.c.b16 %v2510, %v2508
      %v2565 = vpack.c.b16 %v2511, %v2509
      %v2566 = vpack.c.b16 %v2514, %v2512
      %v2567 = vpack.c.b16 %v2515, %v2513
      %v2568 = vpack.c.b16 %v2518, %v2516
      %v2569 = vpack.c.b16 %v2519, %v2517
      %v2596 = vsel %vm592, %v2521, 0
      %v2599 = vsel %vm592, %v2523, 0
      %v2602 = vsel %vm592, %v2525, 0
      %v2605 = vsel %vm592, %v2527, 0
      %v2608 = vsel %vm592, %v2529, 0
      %v2611 = vsel %vm592, %v2531, 0
      %v2614 = vsel %vm592, %v2533, 0
      %v2617 = vsel %vm592, %v2535, 0
      %v2620 = vsel %vm592, %v2537, 0
      %v2623 = vsel %vm592, %v2539, 0
      %v2626 = vsel %vm592, %v2541, 0
      %v2629 = vsel %vm592, %v2543, 0
      %v2632 = vsel %vm592, %v2545, 0
      %v2635 = vsel %vm592, %v2547, 0
      %v2638 = vsel %vm592, %v2549, 0
      %v2641 = vsel %vm592, %v2551, 0
      %v2644 = vsel %vm592, %v2553, 0
      %v2647 = vsel %vm592, %v2555, 0
      %v2650 = vsel %vm592, %v2557, 0
      %v2653 = vsel %vm592, %v2559, 0
      %v2656 = vsel %vm592, %v2561, 0
      %v2659 = vsel %vm592, %v2563, 0
      %v2662 = vsel %vm592, %v2565, 0
      %v2665 = vsel %vm592, %v2567, 0
      %v2668 = vsel %vm592, %v2569, 0
      %2670 = vmatprep.subr.bf16.mxu0 0
      %2671 = vmatpush1.bf16.msra.mxu0 %v568
      %2672 = vmatprep.subr.bf16.mxu0 0
      %2673 = vmatpush1.bf16.msra.mxu0 %v569
      %2674 = vmatprep.subr.bf16.mxu0 0
      %2675 = vmatpush1.bf16.msra.mxu0 %v570
      %2676 = vmatprep.subr.bf16.mxu0 0
      %2677 = vmatpush1.bf16.msra.mxu0 %v571
      %2678 = vmatprep.subr.bf16.mxu0 0
      %2679 = vmatpush1.bf16.msra.mxu0 %v572
      %2680 = vmatprep.subr.bf16.mxu0 0
      %2681 = vmatpush1.bf16.msra.mxu0 %v573
      %2682 = vmatprep.subr.bf16.mxu0 0
      %2683 = vmatpush1.bf16.msra.mxu0 %v574
      %2684 = vmatprep.subr.bf16.mxu0 0
      %2685 = vmatpush1.bf16.msra.mxu0 %v575
      %2686 = vmatprep.subr.bf16.mxu0 0
      %2687 = vmatpush1.bf16.msra.mxu0 %v576
      %2688 = vmatprep.subr.bf16.mxu0 0
      %2689 = vmatpush1.bf16.msra.mxu0 %v577
      %2690 = vmatprep.subr.bf16.mxu0 0
      %2691 = vmatpush1.bf16.msra.mxu0 %v578
      %2692 = vmatprep.subr.bf16.mxu0 0
      %2693 = vmatpush1.bf16.msra.mxu0 %v579
      %2694 = vmatprep.subr.bf16.mxu0 0
      %2695 = vmatpush1.bf16.msra.mxu0 0
      %2696 = vmatprep.subr.bf16.mxu0 0
      %2697 = vmatpush1.bf16.msra.mxu0 0
      %2698 = vmatprep.subr.bf16.mxu0 0
      %2699 = vmatpush1.bf16.msra.mxu0 0
      %2700 = vmatprep.subr.bf16.mxu0 0
      %2701 = vmatpush1.bf16.msra.mxu0 0
      %2702 = vmatprep.mubr.bf16.mxu0 %v2596
      %2703 = vmatmul.mubr.bf16.gmra.mrb[0].mxu0 %v2520
      %v2704 = vpop.f32.mrb[0].mxu0
      %v2705 = vadd.f32 %v293, %v2704
      %v2706 = vpop.f32.mrb[0].mxu0
      %v2707 = vpop.f32.mrb[0].mxu0
      %v2708 = vadd.f32 %v293, %v2707
      %v2709 = vpop.f32.mrb[0].mxu0
      %2710 = vmatprep.mubr.bf16.mxu0 %v2599
      %2711 = vmatmul.mubr.bf16.gmra.mrb[0].mxu0 %v2522
      %v2712 = vpop.f32.mrb[0].mxu0
      %v2713 = vadd.f32 %v293, %v2712
      %v2714 = vpop.f32.mrb[0].mxu0
      %v2715 = vpop.f32.mrb[0].mxu0
      %v2716 = vadd.f32 %v293, %v2715
      %v2717 = vpop.f32.mrb[0].mxu0
      %2718 = vmatprep.mubr.bf16.mxu0 %v2602
      %2719 = vmatmul.mubr.bf16.gmra.mrb[0].mxu0 %v2524
      %v2720 = vpop.f32.mrb[0].mxu0
      %v2721 = vadd.f32 %v293, %v2720
      %v2722 = vpop.f32.mrb[0].mxu0
      %v2723 = vpop.f32.mrb[0].mxu0
      %v2724 = vadd.f32 %v293, %v2723
      %v2725 = vpop.f32.mrb[0].mxu0
      %2726 = vmatprep.mubr.bf16.mxu0 %v2605
      %2727 = vmatmul.mubr.bf16.gmra.mrb[0].mxu0 %v2526
      %v2728 = vpop.f32.mrb[0].mxu0
      %v2729 = vadd.f32 %v293, %v2728
      %v2730 = vpop.f32.mrb[0].mxu0
      %v2731 = vpop.f32.mrb[0].mxu0
      %v2732 = vadd.f32 %v293, %v2731
      %v2733 = vpop.f32.mrb[0].mxu0
      %2734 = vmatprep.mubr.bf16.mxu0 %v2608
      %2735 = vmatmul.mubr.bf16.gmra.mrb[0].mxu0 %v2528
      %v2736 = vpop.f32.mrb[0].mxu0
      %v2737 = vadd.f32 %v293, %v2736
      %v2738 = vpop.f32.mrb[0].mxu0
      %v2739 = vpop.f32.mrb[0].mxu0
      %v2740 = vadd.f32 %v293, %v2739
      %v2741 = vpop.f32.mrb[0].mxu0
      %2742 = vmatprep.mubr.bf16.mxu0 %v2611
      %2743 = vmatmul.mubr.bf16.gmra.mrb[0].mxu0 %v2530
      %v2744 = vpop.f32.mrb[0].mxu0
      %v2745 = vadd.f32 %v293, %v2744
      %v2746 = vpop.f32.mrb[0].mxu0
      %v2747 = vpop.f32.mrb[0].mxu0
      %v2748 = vadd.f32 %v293, %v2747
      %v2749 = vpop.f32.mrb[0].mxu0
      %2750 = vmatprep.mubr.bf16.mxu0 %v2614
      %2751 = vmatmul.mubr.bf16.gmra.mrb[0].mxu0 %v2532
      %v2752 = vpop.f32.mrb[0].mxu0
      %v2753 = vadd.f32 %v293, %v2752
      %v2754 = vpop.f32.mrb[0].mxu0
      %v2755 = vpop.f32.mrb[0].mxu0
      %v2756 = vadd.f32 %v293, %v2755
      %v2757 = vpop.f32.mrb[0].mxu0
      %2758 = vmatprep.mubr.bf16.mxu0 %v2617
      %2759 = vmatmul.mubr.bf16.gmra.mrb[0].mxu0 %v2534
      %v2760 = vpop.f32.mrb[0].mxu0
      %v2761 = vadd.f32 %v293, %v2760
      %v2762 = vpop.f32.mrb[0].mxu0
      %v2763 = vpop.f32.mrb[0].mxu0
      %v2764 = vadd.f32 %v293, %v2763
      %v2765 = vpop.f32.mrb[0].mxu0
      %2766 = vmatprep.mubr.bf16.mxu0 %v2620
      %2767 = vmatmul.mubr.bf16.gmra.mrb[0].mxu0 %v2536
      %v2768 = vpop.f32.mrb[0].mxu0
      %v2769 = vadd.f32 %v293, %v2768
      %v2770 = vpop.f32.mrb[0].mxu0
      %v2771 = vpop.f32.mrb[0].mxu0
      %v2772 = vadd.f32 %v293, %v2771
      %v2773 = vpop.f32.mrb[0].mxu0
      %2774 = vmatprep.mubr.bf16.mxu0 %v2623
      %2775 = vmatmul.mubr.bf16.gmra.mrb[0].mxu0 %v2538
      %v2776 = vpop.f32.mrb[0].mxu0
      %v2777 = vadd.f32 %v293, %v2776
      %v2778 = vpop.f32.mrb[0].mxu0
      %v2779 = vpop.f32.mrb[0].mxu0
      %v2780 = vadd.f32 %v293, %v2779
      %v2781 = vpop.f32.mrb[0].mxu0
      %2782 = vmatprep.mubr.bf16.mxu0 %v2626
      %2783 = vmatmul.mubr.bf16.gmra.mrb[0].mxu0 %v2540
      %v2784 = vpop.f32.mrb[0].mxu0
      %v2785 = vadd.f32 %v293, %v2784
      %v2786 = vpop.f32.mrb[0].mxu0
      %v2787 = vpop.f32.mrb[0].mxu0
      %v2788 = vadd.f32 %v293, %v2787
      %v2789 = vpop.f32.mrb[0].mxu0
      %2790 = vmatprep.mubr.bf16.mxu0 %v2629
      %2791 = vmatmul.mubr.bf16.gmra.mrb[0].mxu0 %v2542
      %v2792 = vpop.f32.mrb[0].mxu0
      %v2793 = vadd.f32 %v293, %v2792
      %v2794 = vpop.f32.mrb[0].mxu0
      %v2795 = vpop.f32.mrb[0].mxu0
      %v2796 = vadd.f32 %v293, %v2795
      %v2797 = vpop.f32.mrb[0].mxu0
      %2798 = vmatprep.mubr.bf16.mxu0 %v2632
      %2799 = vmatmul.mubr.bf16.gmra.mrb[0].mxu0 %v2544
      %v2800 = vpop.f32.mrb[0].mxu0
      %v2801 = vadd.f32 %v293, %v2800
      %v2802 = vpop.f32.mrb[0].mxu0
      %v2803 = vpop.f32.mrb[0].mxu0
      %v2804 = vadd.f32 %v293, %v2803
      %v2805 = vpop.f32.mrb[0].mxu0
      %2806 = vmatprep.mubr.bf16.mxu0 %v2635
      %2807 = vmatmul.mubr.bf16.gmra.mrb[0].mxu0 %v2546
      %v2808 = vpop.f32.mrb[0].mxu0
      %v2809 = vadd.f32 %v293, %v2808
      %v2810 = vpop.f32.mrb[0].mxu0
      %v2811 = vpop.f32.mrb[0].mxu0
      %v2812 = vadd.f32 %v293, %v2811
      %v2813 = vpop.f32.mrb[0].mxu0
      %2814 = vmatprep.mubr.bf16.mxu0 %v2638
      %2815 = vmatmul.mubr.bf16.gmra.mrb[0].mxu0 %v2548
      %v2816 = vpop.f32.mrb[0].mxu0
      %v2817 = vadd.f32 %v293, %v2816
      %v2818 = vpop.f32.mrb[0].mxu0
      %v2819 = vpop.f32.mrb[0].mxu0
      %v2820 = vadd.f32 %v293, %v2819
      %v2821 = vpop.f32.mrb[0].mxu0
      %2822 = vmatprep.mubr.bf16.mxu0 %v2641
      %2823 = vmatmul.mubr.bf16.gmra.mrb[0].mxu0 %v2550
      %v2824 = vpop.f32.mrb[0].mxu0
      %v2825 = vadd.f32 %v293, %v2824
      %v2826 = vpop.f32.mrb[0].mxu0
      %v2827 = vpop.f32.mrb[0].mxu0
      %v2828 = vadd.f32 %v293, %v2827
      %v2829 = vpop.f32.mrb[0].mxu0
      %2830 = vmatprep.mubr.bf16.mxu0 %v2644
      %2831 = vmatmul.mubr.bf16.gmra.mrb[0].mxu0 %v2552
      %v2832 = vpop.f32.mrb[0].mxu0
      %v2833 = vadd.f32 %v293, %v2832
      %v2834 = vpop.f32.mrb[0].mxu0
      %v2835 = vpop.f32.mrb[0].mxu0
      %v2836 = vadd.f32 %v293, %v2835
      %v2837 = vpop.f32.mrb[0].mxu0
      %2838 = vmatprep.mubr.bf16.mxu0 %v2647
      %2839 = vmatmul.mubr.bf16.gmra.mrb[0].mxu0 %v2554
      %v2840 = vpop.f32.mrb[0].mxu0
      %v2841 = vadd.f32 %v293, %v2840
      %v2842 = vpop.f32.mrb[0].mxu0
      %v2843 = vpop.f32.mrb[0].mxu0
      %v2844 = vadd.f32 %v293, %v2843
      %v2845 = vpop.f32.mrb[0].mxu0
      %2846 = vmatprep.mubr.bf16.mxu0 %v2650
      %2847 = vmatmul.mubr.bf16.gmra.mrb[0].mxu0 %v2556
      %v2848 = vpop.f32.mrb[0].mxu0
      %v2849 = vadd.f32 %v293, %v2848
      %v2850 = vpop.f32.mrb[0].mxu0
      %v2851 = vpop.f32.mrb[0].mxu0
      %v2852 = vadd.f32 %v293, %v2851
      %v2853 = vpop.f32.mrb[0].mxu0
      %2854 = vmatprep.mubr.bf16.mxu0 %v2653
      %2855 = vmatmul.mubr.bf16.gmra.mrb[0].mxu0 %v2558
      %v2856 = vpop.f32.mrb[0].mxu0
      %v2857 = vadd.f32 %v293, %v2856
      %v2858 = vpop.f32.mrb[0].mxu0
      %v2859 = vpop.f32.mrb[0].mxu0
      %v2860 = vadd.f32 %v293, %v2859
      %v2861 = vpop.f32.mrb[0].mxu0
      %2862 = vmatprep.mubr.bf16.mxu0 %v2656
      %2863 = vmatmul.mubr.bf16.gmra.mrb[0].mxu0 %v2560
      %v2864 = vpop.f32.mrb[0].mxu0
      %v2865 = vadd.f32 %v293, %v2864
      %v2866 = vpop.f32.mrb[0].mxu0
      %v2867 = vpop.f32.mrb[0].mxu0
      %v2868 = vadd.f32 %v293, %v2867
      %v2869 = vpop.f32.mrb[0].mxu0
      %2870 = vmatprep.mubr.bf16.mxu0 %v2659
      %2871 = vmatmul.mubr.bf16.gmra.mrb[0].mxu0 %v2562
      %v2872 = vpop.f32.mrb[0].mxu0
      %v2873 = vadd.f32 %v293, %v2872
      %v2874 = vpop.f32.mrb[0].mxu0
      %v2875 = vpop.f32.mrb[0].mxu0
      %v2876 = vadd.f32 %v293, %v2875
      %v2877 = vpop.f32.mrb[0].mxu0
      %2878 = vmatprep.mubr.bf16.mxu0 %v2662
      %2879 = vmatmul.mubr.bf16.gmra.mrb[0].mxu0 %v2564
      %v2880 = vpop.f32.mrb[0].mxu0
      %v2881 = vadd.f32 %v293, %v2880
      %v2882 = vpop.f32.mrb[0].mxu0
      %v2883 = vpop.f32.mrb[0].mxu0
      %v2884 = vadd.f32 %v293, %v2883
      %v2885 = vpop.f32.mrb[0].mxu0
      %2886 = vmatprep.mubr.bf16.mxu0 %v2665
      %2887 = vmatmul.mubr.bf16.gmra.mrb[0].mxu0 %v2566
      %v2888 = vpop.f32.mrb[0].mxu0
      %v2889 = vadd.f32 %v293, %v2888
      %v2890 = vpop.f32.mrb[0].mxu0
      %v2891 = vpop.f32.mrb[0].mxu0
      %v2892 = vadd.f32 %v293, %v2891
      %v2893 = vpop.f32.mrb[0].mxu0
      %2894 = vmatprep.mubr.bf16.mxu0 %v2668
      %2895 = vmatmul.mubr.bf16.gmra.mrb[0].mxu0 %v2568
      %v2896 = vpop.f32.mrb[0].mxu0
      %v2897 = vadd.f32 %v293, %v2896
      %v2898 = vpop.f32.mrb[0].mxu0
      %v2899 = vpop.f32.mrb[0].mxu0
      %v2900 = vadd.f32 %v293, %v2899
      %v2901 = vpop.f32.mrb[0].mxu0
      %2902 = vdwg.mxu0
      %v2903 = vtanh.pop %v2705
      %v2904 = vtanh.pop %v2708
      %v2905 = vtanh.pop %v2713
      %v2906 = vtanh.pop %v2716
      %v2907 = vtanh.pop %v2721
      %v2908 = vtanh.pop %v2724
      %v2909 = vtanh.pop %v2729
      %v2910 = vtanh.pop %v2732
      %v2911 = vtanh.pop %v2737
      %v2912 = vtanh.pop %v2740
      %v2913 = vtanh.pop %v2745
      %v2914 = vtanh.pop %v2748
      %v2915 = vtanh.pop %v2753
      %v2916 = vtanh.pop %v2756
      %v2917 = vtanh.pop %v2761
      %v2918 = vtanh.pop %v2764
      %v2919 = vtanh.pop %v2769
      %v2920 = vtanh.pop %v2772
      %v2921 = vtanh.pop %v2777
      %v2922 = vtanh.pop %v2780
      %v2923 = vtanh.pop %v2785
      %v2924 = vtanh.pop %v2788
      %v2925 = vtanh.pop %v2793
      %v2926 = vtanh.pop %v2796
      %v2927 = vtanh.pop %v2801
      %v2928 = vtanh.pop %v2804
      %v2929 = vtanh.pop %v2809
      %v2930 = vtanh.pop %v2812
      %v2931 = vtanh.pop %v2817
      %v2932 = vtanh.pop %v2820
      %v2933 = vtanh.pop %v2825
      %v2934 = vtanh.pop %v2828
      %v2935 = vtanh.pop %v2833
      %v2936 = vtanh.pop %v2836
      %v2937 = vtanh.pop %v2841
      %v2938 = vtanh.pop %v2844
      %v2939 = vtanh.pop %v2849
      %v2940 = vtanh.pop %v2852
      %v2941 = vtanh.pop %v2857
      %v2942 = vtanh.pop %v2860
      %v2943 = vtanh.pop %v2865
      %v2944 = vtanh.pop %v2868
      %v2945 = vtanh.pop %v2873
      %v2946 = vtanh.pop %v2876
      %v2947 = vtanh.pop %v2881
      %v2948 = vtanh.pop %v2884
      %v2949 = vtanh.pop %v2889
      %v2950 = vtanh.pop %v2892
      %v2951 = vtanh.pop %v2897
      %v2952 = vtanh.pop %v2900
      %v2953 = vmax.f32 %v2269, %v2903
      %v2954 = vmax.f32 %v2270, %v2904
      %v2955 = vmax.f32 %v2271, %v2905
      %v2956 = vmax.f32 %v2272, %v2906
      %v2957 = vmax.f32 %v2273, %v2907
      %v2958 = vmax.f32 %v2274, %v2908
      %v2959 = vmax.f32 %v2275, %v2909
      %v2960 = vmax.f32 %v2276, %v2910
      %v2961 = vmax.f32 %v2277, %v2911
      %v2962 = vmax.f32 %v2278, %v2912
      %v2963 = vmax.f32 %v2279, %v2913
      %v2964 = vmax.f32 %v2280, %v2914
      %v2965 = vmax.f32 %v2281, %v2915
      %v2966 = vmax.f32 %v2282, %v2916
      %v2967 = vmax.f32 %v2283, %v2917
      %v2968 = vmax.f32 %v2284, %v2918
      %v2969 = vmax.f32 %v2285, %v2919
      %v2970 = vmax.f32 %v2286, %v2920
      %v2971 = vmax.f32 %v2287, %v2921
      %v2972 = vmax.f32 %v2288, %v2922
      %v2973 = vmax.f32 %v2289, %v2923
      %v2974 = vmax.f32 %v2290, %v2924
      %v2975 = vmax.f32 %v2291, %v2925
      %v2976 = vmax.f32 %v2292, %v2926
      %v2977 = vmax.f32 %v2293, %v2927
      %v2978 = vmax.f32 %v2294, %v2928
      %v2979 = vmax.f32 %v2295, %v2929
      %v2980 = vmax.f32 %v2296, %v2930
      %v2981 = vmax.f32 %v2297, %v2931
      %v2982 = vmax.f32 %v2298, %v2932
      %v2983 = vmax.f32 %v2299, %v2933
      %v2984 = vmax.f32 %v2300, %v2934
      %v2985 = vmax.f32 %v2301, %v2935
      %v2986 = vmax.f32 %v2302, %v2936
      %v2987 = vmax.f32 %v2303, %v2937
      %v2988 = vmax.f32 %v2304, %v2938
      %v2989 = vmax.f32 %v2305, %v2939
      %v2990 = vmax.f32 %v2306, %v2940
      %v2991 = vmax.f32 %v2307, %v2941
      %v2992 = vmax.f32 %v2308, %v2942
      %v2993 = vmax.f32 %v2309, %v2943
      %v2994 = vmax.f32 %v2310, %v2944
      %v2995 = vmax.f32 %v2311, %v2945
      %v2996 = vmax.f32 %v2312, %v2946
      %v2997 = vmax.f32 %v2313, %v2947
      %v2998 = vmax.f32 %v2314, %v2948
      %v2999 = vmax.f32 %v2315, %v2949
      %v3000 = vmax.f32 %v2316, %v2950
      %v3001 = vmax.f32 %v2317, %v2951
      %v3002 = vmax.f32 %v2318, %v2952
      %v3003 = vpack.c.bf16 %v2954, %v2953
      %v3004 = vpack.c.bf16 %v2956, %v2955
      %v3005 = vpack.c.bf16 %v2958, %v2957
      %v3006 = vpack.c.bf16 %v2960, %v2959
      %v3007 = vpack.c.bf16 %v2962, %v2961
      %v3008 = vpack.c.bf16 %v2964, %v2963
      %v3009 = vpack.c.bf16 %v2966, %v2965
      %v3010 = vpack.c.bf16 %v2968, %v2967
      %v3011 = vpack.c.bf16 %v2970, %v2969
      %v3012 = vpack.c.bf16 %v2972, %v2971
      %v3013 = vpack.c.bf16 %v2974, %v2973
      %v3014 = vpack.c.bf16 %v2976, %v2975
      %v3015 = vpack.c.bf16 %v2978, %v2977
      %v3016 = vpack.c.bf16 %v2980, %v2979
      %v3017 = vpack.c.bf16 %v2982, %v2981
      %v3018 = vpack.c.bf16 %v2984, %v2983
      %v3019 = vpack.c.bf16 %v2986, %v2985
      %v3020 = vpack.c.bf16 %v2988, %v2987
      %v3021 = vpack.c.bf16 %v2990, %v2989
      %v3022 = vpack.c.bf16 %v2992, %v2991
      %v3023 = vpack.c.bf16 %v2994, %v2993
      %v3024 = vpack.c.bf16 %v2996, %v2995
      %v3025 = vpack.c.bf16 %v2998, %v2997
      %v3026 = vpack.c.bf16 %v3000, %v2999
      %v3027 = vpack.c.bf16 %v3002, %v3001
      %v3053 = vunpack.c.l.b16 %v3003
      %v3054 = vunpack.c.h.b16 %v3003
      %v3055 = vunpack.c.l.b16 %v3004
      %v3056 = vunpack.c.h.b16 %v3004
      %v3057 = vunpack.c.l.b16 %v3005
      %v3058 = vunpack.c.h.b16 %v3005
      %v3059 = vunpack.c.l.b16 %v3006
      %v3060 = vunpack.c.h.b16 %v3006
      %v3061 = vunpack.c.l.b16 %v3007
      %v3062 = vunpack.c.h.b16 %v3007
      %v3063 = vunpack.c.l.b16 %v3008
      %v3064 = vunpack.c.h.b16 %v3008
      %v3065 = vunpack.c.l.b16 %v3009
      %v3066 = vunpack.c.h.b16 %v3009
      %v3067 = vunpack.c.l.b16 %v3010
      %v3068 = vunpack.c.h.b16 %v3010
      %v3069 = vunpack.c.l.b16 %v3011
      %v3070 = vunpack.c.h.b16 %v3011
      %v3071 = vunpack.c.l.b16 %v3012
      %v3072 = vunpack.c.h.b16 %v3012
      %v3073 = vunpack.c.l.b16 %v3013
      %v3074 = vunpack.c.h.b16 %v3013
      %v3075 = vunpack.c.l.b16 %v3014
      %v3076 = vunpack.c.h.b16 %v3014
      %v3077 = vunpack.c.l.b16 %v3015
      %v3078 = vunpack.c.h.b16 %v3015
      %v3079 = vunpack.c.l.b16 %v3016
      %v3080 = vunpack.c.h.b16 %v3016
      %v3081 = vunpack.c.l.b16 %v3017
      %v3082 = vunpack.c.h.b16 %v3017
      %v3083 = vunpack.c.l.b16 %v3018
      %v3084 = vunpack.c.h.b16 %v3018
      %v3085 = vunpack.c.l.b16 %v3019
      %v3086 = vunpack.c.h.b16 %v3019
      %v3087 = vunpack.c.l.b16 %v3020
      %v3088 = vunpack.c.h.b16 %v3020
      %v3089 = vunpack.c.l.b16 %v3021
      %v3090 = vunpack.c.h.b16 %v3021
      %v3091 = vunpack.c.l.b16 %v3022
      %v3092 = vunpack.c.h.b16 %v3022
      %v3093 = vunpack.c.l.b16 %v3023
      %v3094 = vunpack.c.h.b16 %v3023
      %v3095 = vunpack.c.l.b16 %v3024
      %v3096 = vunpack.c.h.b16 %v3024
      %v3097 = vunpack.c.l.b16 %v3025
      %v3098 = vunpack.c.h.b16 %v3025
      %v3099 = vunpack.c.l.b16 %v3026
      %v3100 = vunpack.c.h.b16 %v3026
      %v3101 = vunpack.c.l.b16 %v3027
      %v3102 = vunpack.c.h.b16 %v3027
      %v3103 = vpack.c.b16 %v3053, %v3053
      %v3104 = vpack.c.b16 %v3054, %v3054
      %v3105 = vpack.c.b16 %v3055, %v3055
      %v3106 = vpack.c.b16 %v3056, %v3056
      %v3107 = vpack.c.b16 %v3057, %v3057
      %v3108 = vpack.c.b16 %v3058, %v3058
      %v3109 = vpack.c.b16 %v3059, %v3059
      %v3110 = vpack.c.b16 %v3060, %v3060
      %v3111 = vpack.c.b16 %v3061, %v3061
      %v3112 = vpack.c.b16 %v3062, %v3062
      %v3113 = vpack.c.b16 %v3063, %v3063
      %v3114 = vpack.c.b16 %v3064, %v3064
      %v3115 = vpack.c.b16 %v3065, %v3065
      %v3116 = vpack.c.b16 %v3066, %v3066
      %v3117 = vpack.c.b16 %v3067, %v3067
      %v3118 = vpack.c.b16 %v3068, %v3068
      %v3119 = vpack.c.b16 %v3069, %v3069
      %v3120 = vpack.c.b16 %v3070, %v3070
      %v3121 = vpack.c.b16 %v3071, %v3071
      %v3122 = vpack.c.b16 %v3072, %v3072
      %v3123 = vpack.c.b16 %v3073, %v3073
      %v3124 = vpack.c.b16 %v3074, %v3074
      %v3125 = vpack.c.b16 %v3075, %v3075
      %v3126 = vpack.c.b16 %v3076, %v3076
      %v3127 = vpack.c.b16 %v3077, %v3077
      %v3128 = vpack.c.b16 %v3078, %v3078
      %v3129 = vpack.c.b16 %v3079, %v3079
      %v3130 = vpack.c.b16 %v3080, %v3080
      %v3131 = vpack.c.b16 %v3081, %v3081
      %v3132 = vpack.c.b16 %v3082, %v3082
      %v3133 = vpack.c.b16 %v3083, %v3083
      %v3134 = vpack.c.b16 %v3084, %v3084
      %v3135 = vpack.c.b16 %v3085, %v3085
      %v3136 = vpack.c.b16 %v3086, %v3086
      %v3137 = vpack.c.b16 %v3087, %v3087
      %v3138 = vpack.c.b16 %v3088, %v3088
      %v3139 = vpack.c.b16 %v3089, %v3089
      %v3140 = vpack.c.b16 %v3090, %v3090
      %v3141 = vpack.c.b16 %v3091, %v3091
      %v3142 = vpack.c.b16 %v3092, %v3092
      %v3143 = vpack.c.b16 %v3093, %v3093
      %v3144 = vpack.c.b16 %v3094, %v3094
      %v3145 = vpack.c.b16 %v3095, %v3095
      %v3146 = vpack.c.b16 %v3096, %v3096
      %v3147 = vpack.c.b16 %v3097, %v3097
      %v3148 = vpack.c.b16 %v3098, %v3098
      %v3149 = vpack.c.b16 %v3099, %v3099
      %v3150 = vpack.c.b16 %v3100, %v3100
      %v3151 = vpack.c.b16 %v3101, %v3101
      %v3152 = vpack.c.b16 %v3102, %v3102
      %vm3203 = vcmask 519168
      %3204 = vst.msk [vmem:[%s211] sm:$0xf] %vm3203, %v3103
      %3205 = vst.msk [vmem:[%s211 + $0x4] sm:$0xf] %vm3203, %v3104
      %3206 = vst.msk [vmem:[%s211 + $0x8] sm:$0xf] %vm3203, %v3105
      %3207 = vst.msk [vmem:[%s211 + $0xc] sm:$0xf] %vm3203, %v3106
      %3208 = vst.msk [vmem:[%s211 + $0x10] sm:$0xf] %vm3203, %v3107
      %3209 = vst.msk [vmem:[%s211 + $0x14] sm:$0xf] %vm3203, %v3108
      %3210 = vst.msk [vmem:[%s211 + $0x18] sm:$0xf] %vm3203, %v3109
      %3211 = vst.msk [vmem:[%s211 + $0x1c] sm:$0xf] %vm3203, %v3110
      %3212 = vst.msk [vmem:[%s211 + $0x20] sm:$0xf] %vm3203, %v3111
      %3213 = vst.msk [vmem:[%s211 + $0x24] sm:$0xf] %vm3203, %v3112
      %3214 = vst.msk [vmem:[%s211 + $0x28] sm:$0xf] %vm3203, %v3113
      %3215 = vst.msk [vmem:[%s211 + $0x2c] sm:$0xf] %vm3203, %v3114
      %3216 = vst.msk [vmem:[%s211 + $0x30] sm:$0xf] %vm3203, %v3115
      %3217 = vst.msk [vmem:[%s211 + $0x34] sm:$0xf] %vm3203, %v3116
      %3218 = vst.msk [vmem:[%s211 + $0x38] sm:$0xf] %vm3203, %v3117
      %3219 = vst.msk [vmem:[%s211 + $0x3c] sm:$0xf] %vm3203, %v3118
      %3220 = vst.msk [vmem:[%s211 + $0x40] sm:$0xf] %vm3203, %v3119
      %3221 = vst.msk [vmem:[%s211 + $0x44] sm:$0xf] %vm3203, %v3120
      %3222 = vst.msk [vmem:[%s211 + $0x48] sm:$0xf] %vm3203, %v3121
      %3223 = vst.msk [vmem:[%s211 + $0x4c] sm:$0xf] %vm3203, %v3122
      %3224 = vst.msk [vmem:[%s211 + $0x50] sm:$0xf] %vm3203, %v3123
      %3225 = vst.msk [vmem:[%s211 + $0x54] sm:$0xf] %vm3203, %v3124
      %3226 = vst.msk [vmem:[%s211 + $0x58] sm:$0xf] %vm3203, %v3125
      %3227 = vst.msk [vmem:[%s211 + $0x5c] sm:$0xf] %vm3203, %v3126
      %3228 = vst.msk [vmem:[%s211 + $0x60] sm:$0xf] %vm3203, %v3127
      %3229 = vst.msk [vmem:[%s211 + $0x64] sm:$0xf] %vm3203, %v3128
      %3230 = vst.msk [vmem:[%s211 + $0x68] sm:$0xf] %vm3203, %v3129
      %3231 = vst.msk [vmem:[%s211 + $0x6c] sm:$0xf] %vm3203, %v3130
      %3232 = vst.msk [vmem:[%s211 + $0x70] sm:$0xf] %vm3203, %v3131
      %3233 = vst.msk [vmem:[%s211 + $0x74] sm:$0xf] %vm3203, %v3132
      %3234 = vst.msk [vmem:[%s211 + $0x78] sm:$0xf] %vm3203, %v3133
      %3235 = vst.msk [vmem:[%s211 + $0x7c] sm:$0xf] %vm3203, %v3134
      %3236 = vst.msk [vmem:[%s211 + $0x80] sm:$0xf] %vm3203, %v3135
      %3237 = vst.msk [vmem:[%s211 + $0x84] sm:$0xf] %vm3203, %v3136
      %3238 = vst.msk [vmem:[%s211 + $0x88] sm:$0xf] %vm3203, %v3137
      %3239 = vst.msk [vmem:[%s211 + $0x8c] sm:$0xf] %vm3203, %v3138
      %3240 = vst.msk [vmem:[%s211 + $0x90] sm:$0xf] %vm3203, %v3139
      %3241 = vst.msk [vmem:[%s211 + $0x94] sm:$0xf] %vm3203, %v3140
      %3242 = vst.msk [vmem:[%s211 + $0x98] sm:$0xf] %vm3203, %v3141
      %3243 = vst.msk [vmem:[%s211 + $0x9c] sm:$0xf] %vm3203, %v3142
      %3244 = vst.msk [vmem:[%s211 + $0xa0] sm:$0xf] %vm3203, %v3143
      %3245 = vst.msk [vmem:[%s211 + $0xa4] sm:$0xf] %vm3203, %v3144
      %3246 = vst.msk [vmem:[%s211 + $0xa8] sm:$0xf] %vm3203, %v3145
      %3247 = vst.msk [vmem:[%s211 + $0xac] sm:$0xf] %vm3203, %v3146
      %3248 = vst.msk [vmem:[%s211 + $0xb0] sm:$0xf] %vm3203, %v3147
      %3249 = vst.msk [vmem:[%s211 + $0xb4] sm:$0xf] %vm3203, %v3148
      %3250 = vst.msk [vmem:[%s211 + $0xb8] sm:$0xf] %vm3203, %v3149
      %3251 = vst.msk [vmem:[%s211 + $0xbc] sm:$0xf] %vm3203, %v3150
      %3252 = vst.msk [vmem:[%s211 + $0xc0] sm:$0xf] %vm3203, %v3151
      %3253 = vst.msk [vmem:[%s211 + $0xc4] sm:$0xf] %vm3203, %v3152
      %s3254 = smul.u32 50, %s19
      %p3255 = scmp.lt.s32.totalorder %s18, 1
      %s3256 = scalar_select %p3255, %s18, 1
      %p3257 = scmp.lt.s32.totalorder %s3254, 49
      %s3258 = scalar_select %p3257, %s3254, 49
      %s3259 = smul.addr %s3256, 50
      %s3260 = sadd.s32 %s3258, %s3259
      %s3261 = smul.addr %s3260, 4
      %s3262 = scalar_lea.vmem %s3, %s3261
      // Predicated region
      $region33: #{evaluate.3} parent=31 // pred_check
        %p3263 = pneg %p116
      $region34: #{evaluate.3} parent=31 // pred_check_branch
        %3265 = sbr.rel (%p3263) target = $region36
      $region35: #{evaluate.3} parent=31 // pred_region
        %s3266 = smul.u32 50, %s19
      $region36: #{evaluate.3} parent=31 // pred_fallthru
        _
    $region32: #{evaluate.3} parent=5 // pred_fallthru
      _
    %p3267 = scmp.le.s32.totalorder 2, %s9
    // Predicated region
    $region37: #{evaluate.3} parent=5 // pred_check
      %p3268 = pneg %p3267
    $region38: #{evaluate.3} parent=5 // pred_check_branch
      %3270 = sbr.rel (%p3268) target = $region40
    $region39: #{evaluate.3} parent=5 // pred_region
      %s3271 = ssub.s32 %s9, 2
      // Predicated region
      $region41: #{evaluate.3} parent=39 // pred_check
        %p3272 = pneg %p122
      $region42: #{evaluate.3} parent=39 // pred_check_branch
        %3274 = sbr.rel (%p3272) target = $region44
      $region43: #{evaluate.3} parent=39 // pred_region
        %s3275 = smul.u32 50, %s21
        %p3276 = scmp.lt.s32.totalorder %s20, 1
        %s3277 = scalar_select %p3276, %s20, 1
        %p3278 = scmp.lt.s32.totalorder %s3275, 49
        %s3279 = scalar_select %p3278, %s3275, 49
        %s3280 = smul.addr %s3277, 50
        %s3281 = sadd.s32 %s3279, %s3280
        %s3282 = smul.addr %s3281, 4
        %s3283 = scalar_lea.vmem %s3, %s3282
      $region44: #{evaluate.3} parent=39 // pred_fallthru
        _
    $region40: #{evaluate.3} parent=5 // pred_fallthru
      _
  $region6: #{evaluate.3} parent=0 // loop_footer
    %s13 = sadd.s32 1, %s9
  $region7: #{evaluate.3} parent=0 // loop_footer_branch
    %8 = sbr.rel target = $region3
  $region8: #{evaluate.3} parent=0 // loop_exit
    _

// kernel: evaluate.4
$region0: #{evaluate.4}
  #allocation0 [shape = 'u32[]', space=smem, size = 0x4, offset = 0x4, fixed_abs, tag = 'smem constant byte address 0x4 - core index']
  #allocation1 [shape = 'u32[144,128]{1,0:T(1,128)}', space=vmem, size = 0x12000, scoped, tag = 'internal scratch']
  %s0 = inlined_call_operand.vmem [shape: bf16[2,4,25,1024], index: 0, kind: input, shape index: {}]
  %s1 = inlined_call_operand.vmem [shape: bf16[1024,64], index: 1, kind: input, shape index: {}]
  %s2 = inlined_call_operand.vmem [shape: f32[1,64], index: 2, kind: input, shape index: {}]
  %s3 = inlined_call_operand.vmem [shape: bf16[2,25,64], index: 3, kind: output, shape index: {}]
  %s4 = sld [smem:[#allocation0]]
  $region45: #{evaluate.4} parent=0
    _
  %s6 = ssub.s32 1, %s4
  %s7 = scalar_select 0, %s6, %s4
  loop: start=0, step=1, limit=4
  $region2: #{evaluate.4} parent=0 // loop_pre_header
    _
  $region3: #{evaluate.4} parent=0 // loop_header
    %s9 = sphi 0, %s13
    %p10 = scmp.ge.s32.totalorder %s9, 4
    %s16 = sphi 0, %s28
    %s17 = sphi 0, %s24
    %s18 = sphi 0, %s16
    %s19 = sphi 0, %s17
    %s20 = sphi 0, %s18
    %s21 = sphi 0, %s19
    %s33 = sphi 0, %s35
    %s36 = sphi 0, %s33
    %s37 = sphi 0, %s36
    %s53 = sphi 0, %s37
    %s57 = sphi 0, %s57
    %s59 = sphi 0, %s57
    %s60 = sphi 0, %s59
    %s74 = sphi 0, %s60
    %s78 = sphi 0, %s78
    %s80 = sphi 0, %s78
    %s81 = sphi 0, %s80
    %s95 = sphi 0, %s81
    %s103 = sphi 0, %s105
    %s106 = sphi 0, %s103
    %s107 = sphi 0, %s106
    %s123 = sphi 0, %s107
  $region4: #{evaluate.4} parent=0 // loop_header_branch
    %12 = sbr.rel (%p10) target = $region8
  $region5: #{evaluate.4} parent=0 // loop_body
    %s14 = ssub.s32 %s9, 1
    %s15 = ssub.s32 %s9, 2
    %s22 = sadd.s32 1, %s17
    %p23 = scmp.ge.s32.totalorder %s22, 1
    %s24 = scalar_select %p23, 0, %s22
    %s25 = sadd.s32 1, %s16
    %s26 = scalar_select %p23, %s25, %s16
    %p27 = scmp.ge.s32.totalorder %s26, 2
    %s28 = scalar_select %p27, 0, %s26
    %s29 = ssub.s32 %s16, %s28
    %s30 = ssub.s32 %s17, %s24
    %s31 = sor.u32 %s29, %s30
    %p32 = scmp.eq.s32.totalorder %s31, 0
    %s34 = sadd.s32 %s33, 1
    %s35 = scalar_select %p32, %s33, %s34
    %p38 = pneg %p32
    %p39 = scmp.eq.s32.totalorder %s9, 1
    %p40 = por %p38, %p39
    %p41 = scmp.ne.s32.totalorder %s33, %s36
    %p42 = scmp.eq.s32.totalorder %s9, 0
    %p43 = por %p41, %p42
    %p44 = scmp.ne.s32.totalorder %s33, %s36
    %p45 = scmp.eq.s32.totalorder %s14, 1
    %p46 = por %p44, %p45
    %p47 = scmp.ne.s32.totalorder %s36, %s37
    %p48 = scmp.eq.s32.totalorder %s14, 0
    %p49 = por %p47, %p48
    %p50 = scmp.ne.s32.totalorder %s36, %s37
    %p51 = scmp.eq.s32.totalorder %s15, 1
    %p52 = por %p50, %p51
    %p54 = scmp.ne.s32.totalorder %s37, %s53
    %p55 = scmp.eq.s32.totalorder %s15, 0
    %p56 = por %p54, %p55
    %s58 = sadd.s32 %s57, 1
    %p61 = scmp.eq.s32.totalorder %s9, 1
    %p62 = scmp.ne.s32.totalorder %s57, %s59
    %p63 = scmp.eq.s32.totalorder %s9, 0
    %p64 = por %p62, %p63
    %p65 = scmp.ne.s32.totalorder %s57, %s59
    %p66 = scmp.eq.s32.totalorder %s14, 1
    %p67 = por %p65, %p66
    %p68 = scmp.ne.s32.totalorder %s59, %s60
    %p69 = scmp.eq.s32.totalorder %s14, 0
    %p70 = por %p68, %p69
    %p71 = scmp.ne.s32.totalorder %s59, %s60
    %p72 = scmp.eq.s32.totalorder %s15, 1
    %p73 = por %p71, %p72
    %p75 = scmp.ne.s32.totalorder %s60, %s74
    %p76 = scmp.eq.s32.totalorder %s15, 0
    %p77 = por %p75, %p76
    %s79 = sadd.s32 %s78, 1
    %p82 = scmp.eq.s32.totalorder %s9, 1
    %p83 = scmp.ne.s32.totalorder %s78, %s80
    %p84 = scmp.eq.s32.totalorder %s9, 0
    %p85 = por %p83, %p84
    %p86 = scmp.ne.s32.totalorder %s78, %s80
    %p87 = scmp.eq.s32.totalorder %s14, 1
    %p88 = por %p86, %p87
    %p89 = scmp.ne.s32.totalorder %s80, %s81
    %p90 = scmp.eq.s32.totalorder %s14, 0
    %p91 = por %p89, %p90
    %p92 = scmp.ne.s32.totalorder %s80, %s81
    %p93 = scmp.eq.s32.totalorder %s15, 1
    %p94 = por %p92, %p93
    %p96 = scmp.ne.s32.totalorder %s81, %s95
    %p97 = scmp.eq.s32.totalorder %s15, 0
    %p98 = por %p96, %p97
    %s99 = ssub.s32 %s16, %s28
    %s100 = ssub.s32 %s17, %s24
    %s101 = sor.u32 %s99, %s100
    %p102 = scmp.eq.s32.totalorder %s101, 0
    %s104 = sadd.s32 %s103, 1
    %s105 = scalar_select %p102, %s103, %s104
    %p108 = pneg %p102
    %p109 = scmp.eq.s32.totalorder %s9, 1
    %p110 = por %p108, %p109
    %p111 = scmp.ne.s32.totalorder %s103, %s106
    %p112 = scmp.eq.s32.totalorder %s9, 0
    %p113 = por %p111, %p112
    %p114 = scmp.ne.s32.totalorder %s103, %s106
    %p115 = scmp.eq.s32.totalorder %s14, 1
    %p116 = por %p114, %p115
    %p117 = scmp.ne.s32.totalorder %s106, %s107
    %p118 = scmp.eq.s32.totalorder %s14, 0
    %p119 = por %p117, %p118
    %p120 = scmp.ne.s32.totalorder %s106, %s107
    %p121 = scmp.eq.s32.totalorder %s15, 1
    %p122 = por %p120, %p121
    %p124 = scmp.ne.s32.totalorder %s107, %s123
    %p125 = scmp.eq.s32.totalorder %s15, 0
    %p126 = por %p124, %p125
    %p127 = scmp.le.s32.totalorder 1, %s9
    %p128 = scmp.lt.s32.totalorder %s9, 3
    %p129 = pnand %p127, %p128
    %p130 = pneg %p129
    // Predicated region
    $region9: #{evaluate.4} parent=5 // pred_check
      _
    $region10: #{evaluate.4} parent=5 // pred_check_branch
      %132 = sbr.rel (%p129) target = $region12
    $region11: #{evaluate.4} parent=5 // pred_region
      %s133 = ssub.s32 %s9, 1
      // Predicated region
      $region13: #{evaluate.4} parent=11 // pred_check
        %p134 = pneg %p70
      $region14: #{evaluate.4} parent=11 // pred_check_branch
        %136 = sbr.rel (%p134) target = $region16
      $region15: #{evaluate.4} parent=11 // pred_region
        _
      $region16: #{evaluate.4} parent=11 // pred_fallthru
        _
      // Predicated region
      $region17: #{evaluate.4} parent=11 // pred_check
        %p137 = pneg %p91
      $region18: #{evaluate.4} parent=11 // pred_check_branch
        %139 = sbr.rel (%p137) target = $region20
      $region19: #{evaluate.4} parent=11 // pred_region
        _
      $region20: #{evaluate.4} parent=11 // pred_fallthru
        _
    $region12: #{evaluate.4} parent=5 // pred_fallthru
      _
    %p140 = scmp.lt.s32.totalorder %s9, 2
    // Predicated region
    $region21: #{evaluate.4} parent=5 // pred_check
      %p141 = pneg %p140
    $region22: #{evaluate.4} parent=5 // pred_check_branch
      %143 = sbr.rel (%p141) target = $region24
    $region23: #{evaluate.4} parent=5 // pred_region
      // Predicated region
      $region25: #{evaluate.4} parent=23 // pred_check
        %p144 = pneg %p43
      $region26: #{evaluate.4} parent=23 // pred_check_branch
        %146 = sbr.rel (%p144) target = $region28
      $region27: #{evaluate.4} parent=23 // pred_region
        %s147 = smul.u32 4, %s17
        %p148 = scmp.lt.s32.totalorder %s16, 1
        %s149 = scalar_select %p148, %s16, 1
        %p150 = scmp.lt.s32.totalorder %s147, 3
        %s151 = scalar_select %p150, %s147, 3
        %s152 = smul.addr %s151, 8
        %s153 = smul.addr %s149, 128
        %s154 = sadd.s32 %s152, %s153
        %s155 = smul.addr %s154, 4
        %s156 = scalar_lea.vmem %s0, %s155
        %s157 = smul.u32 4, %s17
      $region28: #{evaluate.4} parent=23 // pred_fallthru
        _
    $region24: #{evaluate.4} parent=5 // pred_fallthru
      _
    %p158 = scmp.le.s32.totalorder 1, %s9
    %p159 = scmp.lt.s32.totalorder %s9, 3
    %p160 = pnand %p158, %p159
    %p161 = pneg %p160
    // Predicated region
    $region29: #{evaluate.4} parent=5 // pred_check
      _
    $region30: #{evaluate.4} parent=5 // pred_check_branch
      %163 = sbr.rel (%p160) target = $region32
    $region31: #{evaluate.4} parent=5 // pred_region
      %s164 = ssub.s32 %s9, 1
      %s165 = smul.u32 4, %s19
      %p166 = scmp.lt.s32.totalorder %s18, 1
      %s167 = scalar_select %p166, %s18, 1
      %p168 = scmp.lt.s32.totalorder %s165, 3
      %s169 = scalar_select %p168, %s165, 3
      %s170 = smul.addr %s169, 8
      %s171 = smul.addr %s167, 128
      %s172 = sadd.s32 %s170, %s171
      %s173 = smul.addr %s172, 4
      %s174 = scalar_lea.vmem %s0, %s173
      %p175 = pneg %p49
      %p176 = pneg %p46
      %p177 = pneg %p70
      %p178 = pneg %p67
      %p179 = pneg %p91
      %p180 = pneg %p88
      %p181 = pneg %p119
      %p182 = pneg %p116
      %s183 = smul.u32 4, %s19
      %p184 = scmp.lt.s32.totalorder %s18, 1
      %s185 = scalar_select %p184, %s18, 1
      %p186 = scmp.lt.s32.totalorder %s183, 3
      %s187 = scalar_select %p186, %s183, 3
      %s188 = smul.addr %s185, 4
      %s189 = sadd.s32 %s187, %s188
      %s190 = smul.addr %s189, 4
      %s191 = scalar_lea.vmem %s3, %s190
      %s192 = smul.u32 4, %s19
      %p193 = scmp.lt.s32.totalorder %s18, 1
      %s194 = scalar_select %p193, %s18, 1
      %p195 = scmp.lt.s32.totalorder %s192, 3
      %s196 = scalar_select %p195, %s192, 3
      %s197 = smul.addr %s196, 8
      %s198 = smul.addr %s194, 128
      %s199 = sadd.s32 %s197, %s198
      %s200 = smul.addr %s199, 4
      %s201 = scalar_lea.vmem %s0, %s200
      %s202 = smul.u32 4, %s19
      %s203 = smul.u32 4, %s19
      %p204 = scmp.lt.s32.totalorder %s18, 1
      %s205 = scalar_select %p204, %s18, 1
      %p206 = scmp.lt.s32.totalorder %s203, 3
      %s207 = scalar_select %p206, %s203, 3
      %s208 = smul.addr %s205, 4
      %s209 = sadd.s32 %s207, %s208
      %s210 = smul.addr %s209, 4
      %s211 = scalar_lea.vmem %s3, %s210
      %s212 = smul.u32 4, %s19
      %v214 = vld [vmem:[%s1] sm:$0xf]
      %v215 = vld [vmem:[%s1 + $0x4] sm:$0xf]
      %v216 = vld [vmem:[%s1 + $0x8] sm:$0xf]
      %v217 = vld [vmem:[%s1 + $0xc] sm:$0xf]
      %v218 = vld [vmem:[%s1 + $0x10] sm:$0xf]
      %v219 = vld [vmem:[%s1 + $0x14] sm:$0xf]
      %v220 = vld [vmem:[%s1 + $0x18] sm:$0xf]
      %v221 = vld [vmem:[%s1 + $0x1c] sm:$0xf]
      %v222 = vld [vmem:[%s1 + $0x20] sm:$0xf]
      %v223 = vld [vmem:[%s1 + $0x24] sm:$0xf]
      %v224 = vld [vmem:[%s1 + $0x28] sm:$0xf]
      %v225 = vld [vmem:[%s1 + $0x2c] sm:$0xf]
      %v226 = vld [vmem:[%s1 + $0x30] sm:$0xf]
      %v227 = vld [vmem:[%s1 + $0x34] sm:$0xf]
      %v228 = vld [vmem:[%s1 + $0x38] sm:$0xf]
      %v229 = vld [vmem:[%s1 + $0x3c] sm:$0xf]
      %v230 = vld [vmem:[%s1 + $0x40] sm:$0xf]
      %v231 = vld [vmem:[%s1 + $0x44] sm:$0xf]
      %v232 = vld [vmem:[%s1 + $0x48] sm:$0xf]
      %v233 = vld [vmem:[%s1 + $0x4c] sm:$0xf]
      %v234 = vld [vmem:[%s1 + $0x50] sm:$0xf]
      %v235 = vld [vmem:[%s1 + $0x54] sm:$0xf]
      %v236 = vld [vmem:[%s1 + $0x58] sm:$0xf]
      %v237 = vld [vmem:[%s1 + $0x5c] sm:$0xf]
      %v238 = vld [vmem:[%s1 + $0x60] sm:$0xf]
      %v239 = vld [vmem:[%s1 + $0x64] sm:$0xf]
      %v240 = vld [vmem:[%s1 + $0x68] sm:$0xf]
      %v241 = vld [vmem:[%s1 + $0x6c] sm:$0xf]
      %v242 = vld [vmem:[%s1 + $0x70] sm:$0xf]
      %v243 = vld [vmem:[%s1 + $0x74] sm:$0xf]
      %v244 = vld [vmem:[%s1 + $0x78] sm:$0xf]
      %v245 = vld [vmem:[%s1 + $0x7c] sm:$0xf]
      %v246 = vld [vmem:[%s1 + $0x80] sm:$0xf]
      %v247 = vld [vmem:[%s1 + $0x84] sm:$0xf]
      %v248 = vld [vmem:[%s1 + $0x88] sm:$0xf]
      %v249 = vld [vmem:[%s1 + $0x8c] sm:$0xf]
      %v250 = vld [vmem:[%s1 + $0x90] sm:$0xf]
      %v251 = vld [vmem:[%s1 + $0x94] sm:$0xf]
      %v252 = vld [vmem:[%s1 + $0x98] sm:$0xf]
      %v253 = vld [vmem:[%s1 + $0x9c] sm:$0xf]
      %v254 = vld [vmem:[%s1 + $0xa0] sm:$0xf]
      %v255 = vld [vmem:[%s1 + $0xa4] sm:$0xf]
      %v256 = vld [vmem:[%s1 + $0xa8] sm:$0xf]
      %v257 = vld [vmem:[%s1 + $0xac] sm:$0xf]
      %v258 = vld [vmem:[%s1 + $0xb0] sm:$0xf]
      %v259 = vld [vmem:[%s1 + $0xb4] sm:$0xf]
      %v260 = vld [vmem:[%s1 + $0xb8] sm:$0xf]
      %v261 = vld [vmem:[%s1 + $0xbc] sm:$0xf]
      %v262 = vld [vmem:[%s1 + $0xc0] sm:$0xf]
      %v263 = vld [vmem:[%s1 + $0xc4] sm:$0xf]
      %v264 = vld [vmem:[%s1 + $0xc8] sm:$0xf]
      %v265 = vld [vmem:[%s1 + $0xcc] sm:$0xf]
      %v266 = vld [vmem:[%s1 + $0xd0] sm:$0xf]
      %v267 = vld [vmem:[%s1 + $0xd4] sm:$0xf]
      %v268 = vld [vmem:[%s1 + $0xd8] sm:$0xf]
      %v269 = vld [vmem:[%s1 + $0xdc] sm:$0xf]
      %v270 = vld [vmem:[%s1 + $0xe0] sm:$0xf]
      %v271 = vld [vmem:[%s1 + $0xe4] sm:$0xf]
      %v272 = vld [vmem:[%s1 + $0xe8] sm:$0xf]
      %v273 = vld [vmem:[%s1 + $0xec] sm:$0xf]
      %v274 = vld [vmem:[%s1 + $0xf0] sm:$0xf]
      %v275 = vld [vmem:[%s1 + $0xf4] sm:$0xf]
      %v276 = vld [vmem:[%s1 + $0xf8] sm:$0xf]
      %v277 = vld [vmem:[%s1 + $0xfc] sm:$0xf]
      %v278 = vld [vmem:[%s1 + $0x100] sm:$0xf]
      %v279 = vld [vmem:[%s1 + $0x104] sm:$0xf]
      %v280 = vld [vmem:[%s1 + $0x108] sm:$0xf]
      %v281 = vld [vmem:[%s1 + $0x10c] sm:$0xf]
      %v282 = vld [vmem:[%s1 + $0x110] sm:$0xf]
      %v283 = vld [vmem:[%s1 + $0x114] sm:$0xf]
      %v284 = vld [vmem:[%s1 + $0x118] sm:$0xf]
      %v285 = vld [vmem:[%s1 + $0x11c] sm:$0xf]
      %v286 = vld [vmem:[%s1 + $0x120] sm:$0xf]
      %v287 = vld [vmem:[%s1 + $0x124] sm:$0xf]
      %v288 = vld [vmem:[%s1 + $0x128] sm:$0xf]
      %v289 = vld [vmem:[%s1 + $0x12c] sm:$0xf]
      %v290 = vld [vmem:[%s1 + $0x130] sm:$0xf]
      %v291 = vld [vmem:[%s1 + $0x134] sm:$0xf]
      %v292 = vld [vmem:[%s1 + $0x138] sm:$0xf]
      %v293 = vld [vmem:[%s1 + $0x13c] sm:$0xf]
      %v294 = vld [vmem:[%s1 + $0x140] sm:$0xf]
      %v295 = vld [vmem:[%s1 + $0x144] sm:$0xf]
      %v296 = vld [vmem:[%s1 + $0x148] sm:$0xf]
      %v297 = vld [vmem:[%s1 + $0x14c] sm:$0xf]
      %v298 = vld [vmem:[%s1 + $0x150] sm:$0xf]
      %v299 = vld [vmem:[%s1 + $0x154] sm:$0xf]
      %v300 = vld [vmem:[%s1 + $0x158] sm:$0xf]
      %v301 = vld [vmem:[%s1 + $0x15c] sm:$0xf]
      %v302 = vld [vmem:[%s1 + $0x160] sm:$0xf]
      %v303 = vld [vmem:[%s1 + $0x164] sm:$0xf]
      %v304 = vld [vmem:[%s1 + $0x168] sm:$0xf]
      %v305 = vld [vmem:[%s1 + $0x16c] sm:$0xf]
      %v306 = vld [vmem:[%s1 + $0x170] sm:$0xf]
      %v307 = vld [vmem:[%s1 + $0x174] sm:$0xf]
      %v308 = vld [vmem:[%s1 + $0x178] sm:$0xf]
      %v309 = vld [vmem:[%s1 + $0x17c] sm:$0xf]
      %v310 = vld [vmem:[%s1 + $0x180] sm:$0xf]
      %v311 = vld [vmem:[%s1 + $0x184] sm:$0xf]
      %v312 = vld [vmem:[%s1 + $0x188] sm:$0xf]
      %v313 = vld [vmem:[%s1 + $0x18c] sm:$0xf]
      %v314 = vld [vmem:[%s1 + $0x190] sm:$0xf]
      %v315 = vld [vmem:[%s1 + $0x194] sm:$0xf]
      %v316 = vld [vmem:[%s1 + $0x198] sm:$0xf]
      %v317 = vld [vmem:[%s1 + $0x19c] sm:$0xf]
      %v318 = vld [vmem:[%s1 + $0x1a0] sm:$0xf]
      %v319 = vld [vmem:[%s1 + $0x1a4] sm:$0xf]
      %v320 = vld [vmem:[%s1 + $0x1a8] sm:$0xf]
      %v321 = vld [vmem:[%s1 + $0x1ac] sm:$0xf]
      %v322 = vld [vmem:[%s1 + $0x1b0] sm:$0xf]
      %v323 = vld [vmem:[%s1 + $0x1b4] sm:$0xf]
      %v324 = vld [vmem:[%s1 + $0x1b8] sm:$0xf]
      %v325 = vld [vmem:[%s1 + $0x1bc] sm:$0xf]
      %v326 = vld [vmem:[%s1 + $0x1c0] sm:$0xf]
      %v327 = vld [vmem:[%s1 + $0x1c4] sm:$0xf]
      %v328 = vld [vmem:[%s1 + $0x1c8] sm:$0xf]
      %v329 = vld [vmem:[%s1 + $0x1cc] sm:$0xf]
      %v330 = vld [vmem:[%s1 + $0x1d0] sm:$0xf]
      %v331 = vld [vmem:[%s1 + $0x1d4] sm:$0xf]
      %v332 = vld [vmem:[%s1 + $0x1d8] sm:$0xf]
      %v333 = vld [vmem:[%s1 + $0x1dc] sm:$0xf]
      %v334 = vld [vmem:[%s1 + $0x1e0] sm:$0xf]
      %v335 = vld [vmem:[%s1 + $0x1e4] sm:$0xf]
      %v336 = vld [vmem:[%s1 + $0x1e8] sm:$0xf]
      %v337 = vld [vmem:[%s1 + $0x1ec] sm:$0xf]
      %v338 = vld [vmem:[%s1 + $0x1f0] sm:$0xf]
      %v339 = vld [vmem:[%s1 + $0x1f4] sm:$0xf]
      %v340 = vld [vmem:[%s1 + $0x1f8] sm:$0xf]
      %v341 = vld [vmem:[%s1 + $0x1fc] sm:$0xf]
      %v342 = vld [vmem:[%s2] sm:$0x1]
      %v343 = vld [vmem:[%s201] sm:$0xff]
      %v344 = vld [vmem:[%s201 + $0x8] sm:$0xff]
      %v345 = vld [vmem:[%s201 + $0x10] sm:$0xff]
      %v346 = vld [vmem:[%s201 + $0x18] sm:$0xff]
      %v347 = vld [vmem:[%s201 + $0x20] sm:$0xff]
      %v348 = vld [vmem:[%s201 + $0x28] sm:$0xff]
      %v349 = vld [vmem:[%s201 + $0x30] sm:$0xff]
      %v350 = vld [vmem:[%s201 + $0x38] sm:$0xff]
      %v351 = vld [vmem:[%s201 + $0x40] sm:$0xff]
      %v352 = vld [vmem:[%s201 + $0x48] sm:$0xff]
      %v353 = vld [vmem:[%s201 + $0x50] sm:$0xff]
      %v354 = vld [vmem:[%s201 + $0x58] sm:$0xff]
      %v355 = vld [vmem:[%s201 + $0x60] sm:$0x11]
      %v356 = vld [vmem:[%s201 + $0x68] sm:$0x11]
      %v357 = vld [vmem:[%s201 + $0x70] sm:$0x11]
      %v358 = vld [vmem:[%s201 + $0x78] sm:$0x11]
      %v360 = vlaneseq
      %v361 = vshrl.u32 %v360, 7
      %v362 = vsub.s32 0, %v361
      %v363 = vrot.slane %v342, %v362
      %v381 = vunpack.c.l.b16 %v343
      %v382 = vunpack.c.h.b16 %v343
      %v383 = vunpack.c.l.b16 %v344
      %v384 = vunpack.c.h.b16 %v344
      %v385 = vunpack.c.l.b16 %v345
      %v386 = vunpack.c.h.b16 %v345
      %v387 = vunpack.c.l.b16 %v346
      %v388 = vunpack.c.h.b16 %v346
      %v389 = vunpack.c.l.b16 %v347
      %v390 = vunpack.c.h.b16 %v347
      %v391 = vunpack.c.l.b16 %v348
      %v392 = vunpack.c.h.b16 %v348
      %v393 = vunpack.c.l.b16 %v349
      %v394 = vunpack.c.h.b16 %v349
      %v395 = vunpack.c.l.b16 %v350
      %v396 = vunpack.c.h.b16 %v350
      %v397 = vunpack.c.l.b16 %v351
      %v398 = vunpack.c.h.b16 %v351
      %v399 = vunpack.c.l.b16 %v352
      %v400 = vunpack.c.h.b16 %v352
      %v401 = vunpack.c.l.b16 %v353
      %v402 = vunpack.c.h.b16 %v353
      %v403 = vunpack.c.l.b16 %v354
      %v404 = vunpack.c.h.b16 %v354
      %v405 = vunpack.c.l.b16 %v355
      %v406 = vunpack.c.h.b16 %v355
      %v407 = vunpack.c.l.b16 %v356
      %v408 = vunpack.c.h.b16 %v356
      %v409 = vunpack.c.l.b16 %v357
      %v410 = vunpack.c.h.b16 %v357
      %v411 = vunpack.c.l.b16 %v358
      %v412 = vunpack.c.h.b16 %v358
      %v413 = vpack.c.b16 %v389, %v381
      %v414 = vpack.c.b16 %v390, %v382
      %v415 = vpack.c.b16 %v391, %v383
      %v416 = vpack.c.b16 %v392, %v384
      %v417 = vpack.c.b16 %v393, %v385
      %v418 = vpack.c.b16 %v394, %v386
      %v419 = vpack.c.b16 %v395, %v387
      %v420 = vpack.c.b16 %v396, %v388
      %v421 = vpack.c.b16 %v405, %v397
      %v422 = vpack.c.b16 %v406, %v398
      %v423 = vpack.c.b16 %v407, %v399
      %v424 = vpack.c.b16 %v408, %v400
      %v425 = vpack.c.b16 %v409, %v401
      %v426 = vpack.c.b16 %v410, %v402
      %v427 = vpack.c.b16 %v411, %v403
      %v428 = vpack.c.b16 %v412, %v404
      %v573 = vunpack.c.l.b16 %v214
      %v574 = vunpack.c.l.b16 %v215
      %v575 = vunpack.c.l.b16 %v216
      %v576 = vunpack.c.l.b16 %v217
      %v577 = vunpack.c.l.b16 %v218
      %v578 = vunpack.c.l.b16 %v219
      %v579 = vunpack.c.l.b16 %v220
      %v580 = vunpack.c.l.b16 %v221
      %v581 = vunpack.c.l.b16 %v222
      %v582 = vunpack.c.l.b16 %v223
      %v583 = vunpack.c.l.b16 %v224
      %v584 = vunpack.c.l.b16 %v225
      %v585 = vunpack.c.l.b16 %v226
      %v586 = vunpack.c.l.b16 %v227
      %v587 = vunpack.c.l.b16 %v228
      %v588 = vunpack.c.l.b16 %v229
      %v589 = vunpack.c.l.b16 %v230
      %v590 = vunpack.c.l.b16 %v231
      %v591 = vunpack.c.l.b16 %v232
      %v592 = vunpack.c.l.b16 %v233
      %v593 = vunpack.c.l.b16 %v234
      %v594 = vunpack.c.l.b16 %v235
      %v595 = vunpack.c.l.b16 %v236
      %v596 = vunpack.c.l.b16 %v237
      %v597 = vunpack.c.l.b16 %v238
      %v598 = vunpack.c.l.b16 %v239
      %v599 = vunpack.c.l.b16 %v240
      %v600 = vunpack.c.l.b16 %v241
      %v601 = vunpack.c.l.b16 %v242
      %v602 = vunpack.c.l.b16 %v243
      %v603 = vunpack.c.l.b16 %v244
      %v604 = vunpack.c.l.b16 %v245
      %v605 = vunpack.c.l.b16 %v246
      %v606 = vunpack.c.l.b16 %v247
      %v607 = vunpack.c.l.b16 %v248
      %v608 = vunpack.c.l.b16 %v249
      %v609 = vunpack.c.l.b16 %v250
      %v610 = vunpack.c.l.b16 %v251
      %v611 = vunpack.c.l.b16 %v252
      %v612 = vunpack.c.l.b16 %v253
      %v613 = vunpack.c.l.b16 %v254
      %v614 = vunpack.c.l.b16 %v255
      %v615 = vunpack.c.l.b16 %v256
      %v616 = vunpack.c.l.b16 %v257
      %v617 = vunpack.c.l.b16 %v258
      %v618 = vunpack.c.l.b16 %v259
      %v619 = vunpack.c.l.b16 %v260
      %v620 = vunpack.c.l.b16 %v261
      %v621 = vunpack.c.l.b16 %v262
      %v622 = vunpack.c.l.b16 %v263
      %v623 = vunpack.c.l.b16 %v264
      %v624 = vunpack.c.l.b16 %v265
      %v625 = vunpack.c.l.b16 %v266
      %v626 = vunpack.c.l.b16 %v267
      %v627 = vunpack.c.l.b16 %v268
      %v628 = vunpack.c.l.b16 %v269
      %v629 = vunpack.c.l.b16 %v270
      %v630 = vunpack.c.l.b16 %v271
      %v631 = vunpack.c.l.b16 %v272
      %v632 = vunpack.c.l.b16 %v273
      %v633 = vunpack.c.l.b16 %v274
      %v634 = vunpack.c.l.b16 %v275
      %v635 = vunpack.c.l.b16 %v276
      %v636 = vunpack.c.l.b16 %v277
      %v637 = vunpack.c.l.b16 %v278
      %v638 = vunpack.c.l.b16 %v279
      %v639 = vunpack.c.l.b16 %v280
      %v640 = vunpack.c.l.b16 %v281
      %v641 = vunpack.c.l.b16 %v282
      %v642 = vunpack.c.l.b16 %v283
      %v643 = vunpack.c.l.b16 %v284
      %v644 = vunpack.c.l.b16 %v285
      %v645 = vunpack.c.l.b16 %v286
      %v646 = vunpack.c.l.b16 %v287
      %v647 = vunpack.c.l.b16 %v288
      %v648 = vunpack.c.l.b16 %v289
      %v649 = vunpack.c.l.b16 %v290
      %v650 = vunpack.c.l.b16 %v291
      %v651 = vunpack.c.l.b16 %v292
      %v652 = vunpack.c.l.b16 %v293
      %v653 = vunpack.c.l.b16 %v294
      %v654 = vunpack.c.l.b16 %v295
      %v655 = vunpack.c.l.b16 %v296
      %v656 = vunpack.c.l.b16 %v297
      %v657 = vunpack.c.l.b16 %v298
      %v658 = vunpack.c.l.b16 %v299
      %v659 = vunpack.c.l.b16 %v300
      %v660 = vunpack.c.l.b16 %v301
      %v661 = vunpack.c.l.b16 %v302
      %v662 = vunpack.c.l.b16 %v303
      %v663 = vunpack.c.l.b16 %v304
      %v664 = vunpack.c.l.b16 %v305
      %v665 = vunpack.c.l.b16 %v306
      %v666 = vunpack.c.l.b16 %v307
      %v667 = vunpack.c.l.b16 %v308
      %v668 = vunpack.c.l.b16 %v309
      %v669 = vunpack.c.l.b16 %v310
      %v670 = vunpack.c.l.b16 %v311
      %v671 = vunpack.c.l.b16 %v312
      %v672 = vunpack.c.l.b16 %v313
      %v673 = vunpack.c.l.b16 %v314
      %v674 = vunpack.c.l.b16 %v315
      %v675 = vunpack.c.l.b16 %v316
      %v676 = vunpack.c.l.b16 %v317
      %v677 = vunpack.c.l.b16 %v318
      %v678 = vunpack.c.l.b16 %v319
      %v679 = vunpack.c.l.b16 %v320
      %v680 = vunpack.c.l.b16 %v321
      %v681 = vunpack.c.l.b16 %v322
      %v682 = vunpack.c.l.b16 %v323
      %v683 = vunpack.c.l.b16 %v324
      %v684 = vunpack.c.l.b16 %v325
      %v685 = vunpack.c.l.b16 %v326
      %v686 = vunpack.c.l.b16 %v327
      %v687 = vunpack.c.l.b16 %v328
      %v688 = vunpack.c.l.b16 %v329
      %v689 = vunpack.c.l.b16 %v330
      %v690 = vunpack.c.l.b16 %v331
      %v691 = vunpack.c.l.b16 %v332
      %v692 = vunpack.c.l.b16 %v333
      %v693 = vunpack.c.l.b16 %v334
      %v694 = vunpack.c.l.b16 %v335
      %v695 = vunpack.c.l.b16 %v336
      %v696 = vunpack.c.l.b16 %v337
      %v697 = vunpack.c.l.b16 %v338
      %v698 = vunpack.c.l.b16 %v339
      %v699 = vunpack.c.l.b16 %v340
      %v700 = vunpack.c.l.b16 %v341
      %v701 = vpack.c.b16 %v574, %v573
      %v702 = vpack.c.b16 %v576, %v575
      %v703 = vpack.c.b16 %v578, %v577
      %v704 = vpack.c.b16 %v580, %v579
      %v705 = vpack.c.b16 %v582, %v581
      %v706 = vpack.c.b16 %v584, %v583
      %v707 = vpack.c.b16 %v586, %v585
      %v708 = vpack.c.b16 %v588, %v587
      %v709 = vpack.c.b16 %v590, %v589
      %v710 = vpack.c.b16 %v592, %v591
      %v711 = vpack.c.b16 %v594, %v593
      %v712 = vpack.c.b16 %v596, %v595
      %v713 = vpack.c.b16 %v598, %v597
      %v714 = vpack.c.b16 %v600, %v599
      %v715 = vpack.c.b16 %v602, %v601
      %v716 = vpack.c.b16 %v604, %v603
      %v717 = vpack.c.b16 %v606, %v605
      %v718 = vpack.c.b16 %v608, %v607
      %v719 = vpack.c.b16 %v610, %v609
      %v720 = vpack.c.b16 %v612, %v611
      %v721 = vpack.c.b16 %v614, %v613
      %v722 = vpack.c.b16 %v616, %v615
      %v723 = vpack.c.b16 %v618, %v617
      %v724 = vpack.c.b16 %v620, %v619
      %v725 = vpack.c.b16 %v622, %v621
      %v726 = vpack.c.b16 %v624, %v623
      %v727 = vpack.c.b16 %v626, %v625
      %v728 = vpack.c.b16 %v628, %v627
      %v729 = vpack.c.b16 %v630, %v629
      %v730 = vpack.c.b16 %v632, %v631
      %v731 = vpack.c.b16 %v634, %v633
      %v732 = vpack.c.b16 %v636, %v635
      %v733 = vpack.c.b16 %v638, %v637
      %v734 = vpack.c.b16 %v640, %v639
      %v735 = vpack.c.b16 %v642, %v641
      %v736 = vpack.c.b16 %v644, %v643
      %v737 = vpack.c.b16 %v646, %v645
      %v738 = vpack.c.b16 %v648, %v647
      %v739 = vpack.c.b16 %v650, %v649
      %v740 = vpack.c.b16 %v652, %v651
      %v741 = vpack.c.b16 %v654, %v653
      %v742 = vpack.c.b16 %v656, %v655
      %v743 = vpack.c.b16 %v658, %v657
      %v744 = vpack.c.b16 %v660, %v659
      %v745 = vpack.c.b16 %v662, %v661
      %v746 = vpack.c.b16 %v664, %v663
      %v747 = vpack.c.b16 %v666, %v665
      %v748 = vpack.c.b16 %v668, %v667
      %v749 = vpack.c.b16 %v670, %v669
      %v750 = vpack.c.b16 %v672, %v671
      %v751 = vpack.c.b16 %v674, %v673
      %v752 = vpack.c.b16 %v676, %v675
      %v753 = vpack.c.b16 %v678, %v677
      %v754 = vpack.c.b16 %v680, %v679
      %v755 = vpack.c.b16 %v682, %v681
      %v756 = vpack.c.b16 %v684, %v683
      %v757 = vpack.c.b16 %v686, %v685
      %v758 = vpack.c.b16 %v688, %v687
      %v759 = vpack.c.b16 %v690, %v689
      %v760 = vpack.c.b16 %v692, %v691
      %v761 = vpack.c.b16 %v694, %v693
      %v762 = vpack.c.b16 %v696, %v695
      %v763 = vpack.c.b16 %v698, %v697
      %v764 = vpack.c.b16 %v700, %v699
      %829 = vmatprep.subr.bf16.mxu0 0
      %830 = vmatpush1.bf16.msra.mxu0 %v701
      %831 = vmatprep.subr.bf16.mxu0 0
      %832 = vmatpush1.bf16.msra.mxu0 %v702
      %833 = vmatprep.subr.bf16.mxu0 0
      %834 = vmatpush1.bf16.msra.mxu0 %v703
      %835 = vmatprep.subr.bf16.mxu0 0
      %836 = vmatpush1.bf16.msra.mxu0 %v704
      %837 = vmatprep.subr.bf16.mxu0 0
      %838 = vmatpush1.bf16.msra.mxu0 %v705
      %839 = vmatprep.subr.bf16.mxu0 0
      %840 = vmatpush1.bf16.msra.mxu0 %v706
      %841 = vmatprep.subr.bf16.mxu0 0
      %842 = vmatpush1.bf16.msra.mxu0 %v707
      %843 = vmatprep.subr.bf16.mxu0 0
      %844 = vmatpush1.bf16.msra.mxu0 %v708
      %845 = vmatprep.subr.bf16.mxu0 0
      %846 = vmatpush1.bf16.msra.mxu0 %v709
      %847 = vmatprep.subr.bf16.mxu0 0
      %848 = vmatpush1.bf16.msra.mxu0 %v710
      %849 = vmatprep.subr.bf16.mxu0 0
      %850 = vmatpush1.bf16.msra.mxu0 %v711
      %851 = vmatprep.subr.bf16.mxu0 0
      %852 = vmatpush1.bf16.msra.mxu0 %v712
      %853 = vmatprep.subr.bf16.mxu0 0
      %854 = vmatpush1.bf16.msra.mxu0 %v713
      %855 = vmatprep.subr.bf16.mxu0 0
      %856 = vmatpush1.bf16.msra.mxu0 %v714
      %857 = vmatprep.subr.bf16.mxu0 0
      %858 = vmatpush1.bf16.msra.mxu0 %v715
      %859 = vmatprep.subr.bf16.mxu0 0
      %860 = vmatpush1.bf16.msra.mxu0 %v716
      %861 = vmatprep.mubr.bf16.mxu0 %v414
      %862 = vmatmul.mubr.bf16.gmra.mrb[0].mxu0 %v413
      %v863 = vpop.f32.mrb[0].mxu0
      %v864 = vadd.f32 %v363, %v863
      %v865 = vpop.f32.mrb[0].mxu0
      %v866 = vpop.f32.mrb[0].mxu0
      %v867 = vadd.f32 %v363, %v866
      %v868 = vpop.f32.mrb[0].mxu0
      %869 = vmatprep.mubr.bf16.mxu0 %v422
      %870 = vmatmul.mubr.bf16.gmra.mrb[0].mxu0 %v421
      %v871 = vpop.f32.mrb[0].mxu0
      %v872 = vadd.f32 %v363, %v871
      %v873 = vpop.f32.mrb[0].mxu0
      %v874 = vpop.f32.mrb[0].mxu0
      %v875 = vadd.f32 %v363, %v874
      %v876 = vpop.f32.mrb[0].mxu0
      %877 = vdwg.mxu0
      %878 = vmatprep.subr.bf16.mxu0 0
      %879 = vmatpush1.bf16.msra.mxu0 %v717
      %880 = vmatprep.subr.bf16.mxu0 0
      %881 = vmatpush1.bf16.msra.mxu0 %v718
      %882 = vmatprep.subr.bf16.mxu0 0
      %883 = vmatpush1.bf16.msra.mxu0 %v719
      %884 = vmatprep.subr.bf16.mxu0 0
      %885 = vmatpush1.bf16.msra.mxu0 %v720
      %886 = vmatprep.subr.bf16.mxu0 0
      %887 = vmatpush1.bf16.msra.mxu0 %v721
      %888 = vmatprep.subr.bf16.mxu0 0
      %889 = vmatpush1.bf16.msra.mxu0 %v722
      %890 = vmatprep.subr.bf16.mxu0 0
      %891 = vmatpush1.bf16.msra.mxu0 %v723
      %892 = vmatprep.subr.bf16.mxu0 0
      %893 = vmatpush1.bf16.msra.mxu0 %v724
      %894 = vmatprep.subr.bf16.mxu0 0
      %895 = vmatpush1.bf16.msra.mxu0 %v725
      %896 = vmatprep.subr.bf16.mxu0 0
      %897 = vmatpush1.bf16.msra.mxu0 %v726
      %898 = vmatprep.subr.bf16.mxu0 0
      %899 = vmatpush1.bf16.msra.mxu0 %v727
      %900 = vmatprep.subr.bf16.mxu0 0
      %901 = vmatpush1.bf16.msra.mxu0 %v728
      %902 = vmatprep.subr.bf16.mxu0 0
      %903 = vmatpush1.bf16.msra.mxu0 %v729
      %904 = vmatprep.subr.bf16.mxu0 0
      %905 = vmatpush1.bf16.msra.mxu0 %v730
      %906 = vmatprep.subr.bf16.mxu0 0
      %907 = vmatpush1.bf16.msra.mxu0 %v731
      %908 = vmatprep.subr.bf16.mxu0 0
      %909 = vmatpush1.bf16.msra.mxu0 %v732
      %910 = vmatprep.mubr.bf16.mxu0 %v416
      %911 = vmatmul.mubr.bf16.gmra.mrb[0].mxu0 %v415
      %v912 = vpop.f32.mrb[0].mxu0
      %v913 = vadd.f32 %v864, %v912
      %v914 = vpop.f32.mrb[0].mxu0
      %v915 = vpop.f32.mrb[0].mxu0
      %v916 = vadd.f32 %v867, %v915
      %v917 = vpop.f32.mrb[0].mxu0
      %918 = vmatprep.mubr.bf16.mxu0 %v424
      %919 = vmatmul.mubr.bf16.gmra.mrb[0].mxu0 %v423
      %v920 = vpop.f32.mrb[0].mxu0
      %v921 = vadd.f32 %v872, %v920
      %v922 = vpop.f32.mrb[0].mxu0
      %v923 = vpop.f32.mrb[0].mxu0
      %v924 = vadd.f32 %v875, %v923
      %v925 = vpop.f32.mrb[0].mxu0
      %926 = vdwg.mxu0
      %927 = vmatprep.subr.bf16.mxu0 0
      %928 = vmatpush1.bf16.msra.mxu0 %v733
      %929 = vmatprep.subr.bf16.mxu0 0
      %930 = vmatpush1.bf16.msra.mxu0 %v734
      %931 = vmatprep.subr.bf16.mxu0 0
      %932 = vmatpush1.bf16.msra.mxu0 %v735
      %933 = vmatprep.subr.bf16.mxu0 0
      %934 = vmatpush1.bf16.msra.mxu0 %v736
      %935 = vmatprep.subr.bf16.mxu0 0
      %936 = vmatpush1.bf16.msra.mxu0 %v737
      %937 = vmatprep.subr.bf16.mxu0 0
      %938 = vmatpush1.bf16.msra.mxu0 %v738
      %939 = vmatprep.subr.bf16.mxu0 0
      %940 = vmatpush1.bf16.msra.mxu0 %v739
      %941 = vmatprep.subr.bf16.mxu0 0
      %942 = vmatpush1.bf16.msra.mxu0 %v740
      %943 = vmatprep.subr.bf16.mxu0 0
      %944 = vmatpush1.bf16.msra.mxu0 %v741
      %945 = vmatprep.subr.bf16.mxu0 0
      %946 = vmatpush1.bf16.msra.mxu0 %v742
      %947 = vmatprep.subr.bf16.mxu0 0
      %948 = vmatpush1.bf16.msra.mxu0 %v743
      %949 = vmatprep.subr.bf16.mxu0 0
      %950 = vmatpush1.bf16.msra.mxu0 %v744
      %951 = vmatprep.subr.bf16.mxu0 0
      %952 = vmatpush1.bf16.msra.mxu0 %v745
      %953 = vmatprep.subr.bf16.mxu0 0
      %954 = vmatpush1.bf16.msra.mxu0 %v746
      %955 = vmatprep.subr.bf16.mxu0 0
      %956 = vmatpush1.bf16.msra.mxu0 %v747
      %957 = vmatprep.subr.bf16.mxu0 0
      %958 = vmatpush1.bf16.msra.mxu0 %v748
      %959 = vmatprep.mubr.bf16.mxu0 %v418
      %960 = vmatmul.mubr.bf16.gmra.mrb[0].mxu0 %v417
      %v961 = vpop.f32.mrb[0].mxu0
      %v962 = vadd.f32 %v913, %v961
      %v963 = vpop.f32.mrb[0].mxu0
      %v964 = vpop.f32.mrb[0].mxu0
      %v965 = vadd.f32 %v916, %v964
      %v966 = vpop.f32.mrb[0].mxu0
      %967 = vmatprep.mubr.bf16.mxu0 %v426
      %968 = vmatmul.mubr.bf16.gmra.mrb[0].mxu0 %v425
      %v969 = vpop.f32.mrb[0].mxu0
      %v970 = vadd.f32 %v921, %v969
      %v971 = vpop.f32.mrb[0].mxu0
      %v972 = vpop.f32.mrb[0].mxu0
      %v973 = vadd.f32 %v924, %v972
      %v974 = vpop.f32.mrb[0].mxu0
      %975 = vdwg.mxu0
      %976 = vmatprep.subr.bf16.mxu0 0
      %977 = vmatpush1.bf16.msra.mxu0 %v749
      %978 = vmatprep.subr.bf16.mxu0 0
      %979 = vmatpush1.bf16.msra.mxu0 %v750
      %980 = vmatprep.subr.bf16.mxu0 0
      %981 = vmatpush1.bf16.msra.mxu0 %v751
      %982 = vmatprep.subr.bf16.mxu0 0
      %983 = vmatpush1.bf16.msra.mxu0 %v752
      %984 = vmatprep.subr.bf16.mxu0 0
      %985 = vmatpush1.bf16.msra.mxu0 %v753
      %986 = vmatprep.subr.bf16.mxu0 0
      %987 = vmatpush1.bf16.msra.mxu0 %v754
      %988 = vmatprep.subr.bf16.mxu0 0
      %989 = vmatpush1.bf16.msra.mxu0 %v755
      %990 = vmatprep.subr.bf16.mxu0 0
      %991 = vmatpush1.bf16.msra.mxu0 %v756
      %992 = vmatprep.subr.bf16.mxu0 0
      %993 = vmatpush1.bf16.msra.mxu0 %v757
      %994 = vmatprep.subr.bf16.mxu0 0
      %995 = vmatpush1.bf16.msra.mxu0 %v758
      %996 = vmatprep.subr.bf16.mxu0 0
      %997 = vmatpush1.bf16.msra.mxu0 %v759
      %998 = vmatprep.subr.bf16.mxu0 0
      %999 = vmatpush1.bf16.msra.mxu0 %v760
      %1000 = vmatprep.subr.bf16.mxu0 0
      %1001 = vmatpush1.bf16.msra.mxu0 %v761
      %1002 = vmatprep.subr.bf16.mxu0 0
      %1003 = vmatpush1.bf16.msra.mxu0 %v762
      %1004 = vmatprep.subr.bf16.mxu0 0
      %1005 = vmatpush1.bf16.msra.mxu0 %v763
      %1006 = vmatprep.subr.bf16.mxu0 0
      %1007 = vmatpush1.bf16.msra.mxu0 %v764
      %1008 = vmatprep.mubr.bf16.mxu0 %v420
      %1009 = vmatmul.mubr.bf16.gmra.mrb[0].mxu0 %v419
      %v1010 = vpop.f32.mrb[0].mxu0
      %v1011 = vadd.f32 %v962, %v1010
      %v1012 = vpop.f32.mrb[0].mxu0
      %v1013 = vpop.f32.mrb[0].mxu0
      %v1014 = vadd.f32 %v965, %v1013
      %v1015 = vpop.f32.mrb[0].mxu0
      %1016 = vmatprep.mubr.bf16.mxu0 %v428
      %1017 = vmatmul.mubr.bf16.gmra.mrb[0].mxu0 %v427
      %v1018 = vpop.f32.mrb[0].mxu0
      %v1019 = vadd.f32 %v970, %v1018
      %v1020 = vpop.f32.mrb[0].mxu0
      %v1021 = vpop.f32.mrb[0].mxu0
      %v1022 = vadd.f32 %v973, %v1021
      %v1023 = vpop.f32.mrb[0].mxu0
      %1024 = vdwg.mxu0
      %v1025 = vtanh.pop %v1011
      %v1026 = vtanh.pop %v1014
      %v1027 = vtanh.pop %v1019
      %v1028 = vtanh.pop %v1022
      %s1029 = scalar_lea.vmem %s201, 128
      %v1030 = vld [vmem:[%s1029] sm:$0xff]
      %v1031 = vld [vmem:[%s1029 + $0x8] sm:$0xff]
      %v1032 = vld [vmem:[%s1029 + $0x10] sm:$0xff]
      %v1033 = vld [vmem:[%s1029 + $0x18] sm:$0xff]
      %v1034 = vld [vmem:[%s1029 + $0x20] sm:$0xff]
      %v1035 = vld [vmem:[%s1029 + $0x28] sm:$0xff]
      %v1036 = vld [vmem:[%s1029 + $0x30] sm:$0xff]
      %v1037 = vld [vmem:[%s1029 + $0x38] sm:$0xff]
      %v1038 = vld [vmem:[%s1029 + $0x40] sm:$0xff]
      %v1039 = vld [vmem:[%s1029 + $0x48] sm:$0xff]
      %v1040 = vld [vmem:[%s1029 + $0x50] sm:$0xff]
      %v1041 = vld [vmem:[%s1029 + $0x58] sm:$0xff]
      %v1042 = vld [vmem:[%s1029 + $0x60] sm:$0x11]
      %v1043 = vld [vmem:[%s1029 + $0x68] sm:$0x11]
      %v1044 = vld [vmem:[%s1029 + $0x70] sm:$0x11]
      %v1045 = vld [vmem:[%s1029 + $0x78] sm:$0x11]
      %v1062 = vunpack.c.l.b16 %v1030
      %v1063 = vunpack.c.h.b16 %v1030
      %v1064 = vunpack.c.l.b16 %v1031
      %v1065 = vunpack.c.h.b16 %v1031
      %v1066 = vunpack.c.l.b16 %v1032
      %v1067 = vunpack.c.h.b16 %v1032
      %v1068 = vunpack.c.l.b16 %v1033
      %v1069 = vunpack.c.h.b16 %v1033
      %v1070 = vunpack.c.l.b16 %v1034
      %v1071 = vunpack.c.h.b16 %v1034
      %v1072 = vunpack.c.l.b16 %v1035
      %v1073 = vunpack.c.h.b16 %v1035
      %v1074 = vunpack.c.l.b16 %v1036
      %v1075 = vunpack.c.h.b16 %v1036
      %v1076 = vunpack.c.l.b16 %v1037
      %v1077 = vunpack.c.h.b16 %v1037
      %v1078 = vunpack.c.l.b16 %v1038
      %v1079 = vunpack.c.h.b16 %v1038
      %v1080 = vunpack.c.l.b16 %v1039
      %v1081 = vunpack.c.h.b16 %v1039
      %v1082 = vunpack.c.l.b16 %v1040
      %v1083 = vunpack.c.h.b16 %v1040
      %v1084 = vunpack.c.l.b16 %v1041
      %v1085 = vunpack.c.h.b16 %v1041
      %v1086 = vunpack.c.l.b16 %v1042
      %v1087 = vunpack.c.h.b16 %v1042
      %v1088 = vunpack.c.l.b16 %v1043
      %v1089 = vunpack.c.h.b16 %v1043
      %v1090 = vunpack.c.l.b16 %v1044
      %v1091 = vunpack.c.h.b16 %v1044
      %v1092 = vunpack.c.l.b16 %v1045
      %v1093 = vunpack.c.h.b16 %v1045
      %v1094 = vpack.c.b16 %v1070, %v1062
      %v1095 = vpack.c.b16 %v1071, %v1063
      %v1096 = vpack.c.b16 %v1072, %v1064
      %v1097 = vpack.c.b16 %v1073, %v1065
      %v1098 = vpack.c.b16 %v1074, %v1066
      %v1099 = vpack.c.b16 %v1075, %v1067
      %v1100 = vpack.c.b16 %v1076, %v1068
      %v1101 = vpack.c.b16 %v1077, %v1069
      %v1102 = vpack.c.b16 %v1086, %v1078
      %v1103 = vpack.c.b16 %v1087, %v1079
      %v1104 = vpack.c.b16 %v1088, %v1080
      %v1105 = vpack.c.b16 %v1089, %v1081
      %v1106 = vpack.c.b16 %v1090, %v1082
      %v1107 = vpack.c.b16 %v1091, %v1083
      %v1108 = vpack.c.b16 %v1092, %v1084
      %v1109 = vpack.c.b16 %v1093, %v1085
      %1126 = vmatprep.subr.bf16.mxu0 0
      %1127 = vmatpush1.bf16.msra.mxu0 %v701
      %1128 = vmatprep.subr.bf16.mxu0 0
      %1129 = vmatpush1.bf16.msra.mxu0 %v702
      %1130 = vmatprep.subr.bf16.mxu0 0
      %1131 = vmatpush1.bf16.msra.mxu0 %v703
      %1132 = vmatprep.subr.bf16.mxu0 0
      %1133 = vmatpush1.bf16.msra.mxu0 %v704
      %1134 = vmatprep.subr.bf16.mxu0 0
      %1135 = vmatpush1.bf16.msra.mxu0 %v705
      %1136 = vmatprep.subr.bf16.mxu0 0
      %1137 = vmatpush1.bf16.msra.mxu0 %v706
      %1138 = vmatprep.subr.bf16.mxu0 0
      %1139 = vmatpush1.bf16.msra.mxu0 %v707
      %1140 = vmatprep.subr.bf16.mxu0 0
      %1141 = vmatpush1.bf16.msra.mxu0 %v708
      %1142 = vmatprep.subr.bf16.mxu0 0
      %1143 = vmatpush1.bf16.msra.mxu0 %v709
      %1144 = vmatprep.subr.bf16.mxu0 0
      %1145 = vmatpush1.bf16.msra.mxu0 %v710
      %1146 = vmatprep.subr.bf16.mxu0 0
      %1147 = vmatpush1.bf16.msra.mxu0 %v711
      %1148 = vmatprep.subr.bf16.mxu0 0
      %1149 = vmatpush1.bf16.msra.mxu0 %v712
      %1150 = vmatprep.subr.bf16.mxu0 0
      %1151 = vmatpush1.bf16.msra.mxu0 %v713
      %1152 = vmatprep.subr.bf16.mxu0 0
      %1153 = vmatpush1.bf16.msra.mxu0 %v714
      %1154 = vmatprep.subr.bf16.mxu0 0
      %1155 = vmatpush1.bf16.msra.mxu0 %v715
      %1156 = vmatprep.subr.bf16.mxu0 0
      %1157 = vmatpush1.bf16.msra.mxu0 %v716
      %1158 = vmatprep.mubr.bf16.mxu0 %v1095
      %1159 = vmatmul.mubr.bf16.gmra.mrb[0].mxu0 %v1094
      %v1160 = vpop.f32.mrb[0].mxu0
      %v1161 = vadd.f32 %v363, %v1160
      %v1162 = vpop.f32.mrb[0].mxu0
      %v1163 = vpop.f32.mrb[0].mxu0
      %v1164 = vadd.f32 %v363, %v1163
      %v1165 = vpop.f32.mrb[0].mxu0
      %1166 = vmatprep.mubr.bf16.mxu0 %v1103
      %1167 = vmatmul.mubr.bf16.gmra.mrb[0].mxu0 %v1102
      %v1168 = vpop.f32.mrb[0].mxu0
      %v1169 = vadd.f32 %v363, %v1168
      %v1170 = vpop.f32.mrb[0].mxu0
      %v1171 = vpop.f32.mrb[0].mxu0
      %v1172 = vadd.f32 %v363, %v1171
      %v1173 = vpop.f32.mrb[0].mxu0
      %1174 = vdwg.mxu0
      %1175 = vmatprep.subr.bf16.mxu0 0
      %1176 = vmatpush1.bf16.msra.mxu0 %v717
      %1177 = vmatprep.subr.bf16.mxu0 0
      %1178 = vmatpush1.bf16.msra.mxu0 %v718
      %1179 = vmatprep.subr.bf16.mxu0 0
      %1180 = vmatpush1.bf16.msra.mxu0 %v719
      %1181 = vmatprep.subr.bf16.mxu0 0
      %1182 = vmatpush1.bf16.msra.mxu0 %v720
      %1183 = vmatprep.subr.bf16.mxu0 0
      %1184 = vmatpush1.bf16.msra.mxu0 %v721
      %1185 = vmatprep.subr.bf16.mxu0 0
      %1186 = vmatpush1.bf16.msra.mxu0 %v722
      %1187 = vmatprep.subr.bf16.mxu0 0
      %1188 = vmatpush1.bf16.msra.mxu0 %v723
      %1189 = vmatprep.subr.bf16.mxu0 0
      %1190 = vmatpush1.bf16.msra.mxu0 %v724
      %1191 = vmatprep.subr.bf16.mxu0 0
      %1192 = vmatpush1.bf16.msra.mxu0 %v725
      %1193 = vmatprep.subr.bf16.mxu0 0
      %1194 = vmatpush1.bf16.msra.mxu0 %v726
      %1195 = vmatprep.subr.bf16.mxu0 0
      %1196 = vmatpush1.bf16.msra.mxu0 %v727
      %1197 = vmatprep.subr.bf16.mxu0 0
      %1198 = vmatpush1.bf16.msra.mxu0 %v728
      %1199 = vmatprep.subr.bf16.mxu0 0
      %1200 = vmatpush1.bf16.msra.mxu0 %v729
      %1201 = vmatprep.subr.bf16.mxu0 0
      %1202 = vmatpush1.bf16.msra.mxu0 %v730
      %1203 = vmatprep.subr.bf16.mxu0 0
      %1204 = vmatpush1.bf16.msra.mxu0 %v731
      %1205 = vmatprep.subr.bf16.mxu0 0
      %1206 = vmatpush1.bf16.msra.mxu0 %v732
      %1207 = vmatprep.mubr.bf16.mxu0 %v1097
      %1208 = vmatmul.mubr.bf16.gmra.mrb[0].mxu0 %v1096
      %v1209 = vpop.f32.mrb[0].mxu0
      %v1210 = vadd.f32 %v1161, %v1209
      %v1211 = vpop.f32.mrb[0].mxu0
      %v1212 = vpop.f32.mrb[0].mxu0
      %v1213 = vadd.f32 %v1164, %v1212
      %v1214 = vpop.f32.mrb[0].mxu0
      %1215 = vmatprep.mubr.bf16.mxu0 %v1105
      %1216 = vmatmul.mubr.bf16.gmra.mrb[0].mxu0 %v1104
      %v1217 = vpop.f32.mrb[0].mxu0
      %v1218 = vadd.f32 %v1169, %v1217
      %v1219 = vpop.f32.mrb[0].mxu0
      %v1220 = vpop.f32.mrb[0].mxu0
      %v1221 = vadd.f32 %v1172, %v1220
      %v1222 = vpop.f32.mrb[0].mxu0
      %1223 = vdwg.mxu0
      %1224 = vmatprep.subr.bf16.mxu0 0
      %1225 = vmatpush1.bf16.msra.mxu0 %v733
      %1226 = vmatprep.subr.bf16.mxu0 0
      %1227 = vmatpush1.bf16.msra.mxu0 %v734
      %1228 = vmatprep.subr.bf16.mxu0 0
      %1229 = vmatpush1.bf16.msra.mxu0 %v735
      %1230 = vmatprep.subr.bf16.mxu0 0
      %1231 = vmatpush1.bf16.msra.mxu0 %v736
      %1232 = vmatprep.subr.bf16.mxu0 0
      %1233 = vmatpush1.bf16.msra.mxu0 %v737
      %1234 = vmatprep.subr.bf16.mxu0 0
      %1235 = vmatpush1.bf16.msra.mxu0 %v738
      %1236 = vmatprep.subr.bf16.mxu0 0
      %1237 = vmatpush1.bf16.msra.mxu0 %v739
      %1238 = vmatprep.subr.bf16.mxu0 0
      %1239 = vmatpush1.bf16.msra.mxu0 %v740
      %1240 = vmatprep.subr.bf16.mxu0 0
      %1241 = vmatpush1.bf16.msra.mxu0 %v741
      %1242 = vmatprep.subr.bf16.mxu0 0
      %1243 = vmatpush1.bf16.msra.mxu0 %v742
      %1244 = vmatprep.subr.bf16.mxu0 0
      %1245 = vmatpush1.bf16.msra.mxu0 %v743
      %1246 = vmatprep.subr.bf16.mxu0 0
      %1247 = vmatpush1.bf16.msra.mxu0 %v744
      %1248 = vmatprep.subr.bf16.mxu0 0
      %1249 = vmatpush1.bf16.msra.mxu0 %v745
      %1250 = vmatprep.subr.bf16.mxu0 0
      %1251 = vmatpush1.bf16.msra.mxu0 %v746
      %1252 = vmatprep.subr.bf16.mxu0 0
      %1253 = vmatpush1.bf16.msra.mxu0 %v747
      %1254 = vmatprep.subr.bf16.mxu0 0
      %1255 = vmatpush1.bf16.msra.mxu0 %v748
      %1256 = vmatprep.mubr.bf16.mxu0 %v1099
      %1257 = vmatmul.mubr.bf16.gmra.mrb[0].mxu0 %v1098
      %v1258 = vpop.f32.mrb[0].mxu0
      %v1259 = vadd.f32 %v1210, %v1258
      %v1260 = vpop.f32.mrb[0].mxu0
      %v1261 = vpop.f32.mrb[0].mxu0
      %v1262 = vadd.f32 %v1213, %v1261
      %v1263 = vpop.f32.mrb[0].mxu0
      %1264 = vmatprep.mubr.bf16.mxu0 %v1107
      %1265 = vmatmul.mubr.bf16.gmra.mrb[0].mxu0 %v1106
      %v1266 = vpop.f32.mrb[0].mxu0
      %v1267 = vadd.f32 %v1218, %v1266
      %v1268 = vpop.f32.mrb[0].mxu0
      %v1269 = vpop.f32.mrb[0].mxu0
      %v1270 = vadd.f32 %v1221, %v1269
      %v1271 = vpop.f32.mrb[0].mxu0
      %1272 = vdwg.mxu0
      %1273 = vmatprep.subr.bf16.mxu0 0
      %1274 = vmatpush1.bf16.msra.mxu0 %v749
      %1275 = vmatprep.subr.bf16.mxu0 0
      %1276 = vmatpush1.bf16.msra.mxu0 %v750
      %1277 = vmatprep.subr.bf16.mxu0 0
      %1278 = vmatpush1.bf16.msra.mxu0 %v751
      %1279 = vmatprep.subr.bf16.mxu0 0
      %1280 = vmatpush1.bf16.msra.mxu0 %v752
      %1281 = vmatprep.subr.bf16.mxu0 0
      %1282 = vmatpush1.bf16.msra.mxu0 %v753
      %1283 = vmatprep.subr.bf16.mxu0 0
      %1284 = vmatpush1.bf16.msra.mxu0 %v754
      %1285 = vmatprep.subr.bf16.mxu0 0
      %1286 = vmatpush1.bf16.msra.mxu0 %v755
      %1287 = vmatprep.subr.bf16.mxu0 0
      %1288 = vmatpush1.bf16.msra.mxu0 %v756
      %1289 = vmatprep.subr.bf16.mxu0 0
      %1290 = vmatpush1.bf16.msra.mxu0 %v757
      %1291 = vmatprep.subr.bf16.mxu0 0
      %1292 = vmatpush1.bf16.msra.mxu0 %v758
      %1293 = vmatprep.subr.bf16.mxu0 0
      %1294 = vmatpush1.bf16.msra.mxu0 %v759
      %1295 = vmatprep.subr.bf16.mxu0 0
      %1296 = vmatpush1.bf16.msra.mxu0 %v760
      %1297 = vmatprep.subr.bf16.mxu0 0
      %1298 = vmatpush1.bf16.msra.mxu0 %v761
      %1299 = vmatprep.subr.bf16.mxu0 0
      %1300 = vmatpush1.bf16.msra.mxu0 %v762
      %1301 = vmatprep.subr.bf16.mxu0 0
      %1302 = vmatpush1.bf16.msra.mxu0 %v763
      %1303 = vmatprep.subr.bf16.mxu0 0
      %1304 = vmatpush1.bf16.msra.mxu0 %v764
      %1305 = vmatprep.mubr.bf16.mxu0 %v1101
      %1306 = vmatmul.mubr.bf16.gmra.mrb[0].mxu0 %v1100
      %v1307 = vpop.f32.mrb[0].mxu0
      %v1308 = vadd.f32 %v1259, %v1307
      %v1309 = vpop.f32.mrb[0].mxu0
      %v1310 = vpop.f32.mrb[0].mxu0
      %v1311 = vadd.f32 %v1262, %v1310
      %v1312 = vpop.f32.mrb[0].mxu0
      %1313 = vmatprep.mubr.bf16.mxu0 %v1109
      %1314 = vmatmul.mubr.bf16.gmra.mrb[0].mxu0 %v1108
      %v1315 = vpop.f32.mrb[0].mxu0
      %v1316 = vadd.f32 %v1267, %v1315
      %v1317 = vpop.f32.mrb[0].mxu0
      %v1318 = vpop.f32.mrb[0].mxu0
      %v1319 = vadd.f32 %v1270, %v1318
      %v1320 = vpop.f32.mrb[0].mxu0
      %1321 = vdwg.mxu0
      %v1322 = vtanh.pop %v1308
      %v1323 = vtanh.pop %v1311
      %v1324 = vtanh.pop %v1316
      %v1325 = vtanh.pop %v1319
      %v1326 = vmax.f32 %v1025, %v1322
      %v1327 = vmax.f32 %v1026, %v1323
      %v1328 = vmax.f32 %v1027, %v1324
      %v1329 = vmax.f32 %v1028, %v1325
      %s1330 = scalar_lea.vmem %s201, 256
      %v1331 = vld [vmem:[%s1330] sm:$0xff]
      %v1332 = vld [vmem:[%s1330 + $0x8] sm:$0xff]
      %v1333 = vld [vmem:[%s1330 + $0x10] sm:$0xff]
      %v1334 = vld [vmem:[%s1330 + $0x18] sm:$0xff]
      %v1335 = vld [vmem:[%s1330 + $0x20] sm:$0xff]
      %v1336 = vld [vmem:[%s1330 + $0x28] sm:$0xff]
      %v1337 = vld [vmem:[%s1330 + $0x30] sm:$0xff]
      %v1338 = vld [vmem:[%s1330 + $0x38] sm:$0xff]
      %v1339 = vld [vmem:[%s1330 + $0x40] sm:$0xff]
      %v1340 = vld [vmem:[%s1330 + $0x48] sm:$0xff]
      %v1341 = vld [vmem:[%s1330 + $0x50] sm:$0xff]
      %v1342 = vld [vmem:[%s1330 + $0x58] sm:$0xff]
      %v1343 = vld [vmem:[%s1330 + $0x60] sm:$0x11]
      %v1344 = vld [vmem:[%s1330 + $0x68] sm:$0x11]
      %v1345 = vld [vmem:[%s1330 + $0x70] sm:$0x11]
      %v1346 = vld [vmem:[%s1330 + $0x78] sm:$0x11]
      %v1363 = vunpack.c.l.b16 %v1331
      %v1364 = vunpack.c.h.b16 %v1331
      %v1365 = vunpack.c.l.b16 %v1332
      %v1366 = vunpack.c.h.b16 %v1332
      %v1367 = vunpack.c.l.b16 %v1333
      %v1368 = vunpack.c.h.b16 %v1333
      %v1369 = vunpack.c.l.b16 %v1334
      %v1370 = vunpack.c.h.b16 %v1334
      %v1371 = vunpack.c.l.b16 %v1335
      %v1372 = vunpack.c.h.b16 %v1335
      %v1373 = vunpack.c.l.b16 %v1336
      %v1374 = vunpack.c.h.b16 %v1336
      %v1375 = vunpack.c.l.b16 %v1337
      %v1376 = vunpack.c.h.b16 %v1337
      %v1377 = vunpack.c.l.b16 %v1338
      %v1378 = vunpack.c.h.b16 %v1338
      %v1379 = vunpack.c.l.b16 %v1339
      %v1380 = vunpack.c.h.b16 %v1339
      %v1381 = vunpack.c.l.b16 %v1340
      %v1382 = vunpack.c.h.b16 %v1340
      %v1383 = vunpack.c.l.b16 %v1341
      %v1384 = vunpack.c.h.b16 %v1341
      %v1385 = vunpack.c.l.b16 %v1342
      %v1386 = vunpack.c.h.b16 %v1342
      %v1387 = vunpack.c.l.b16 %v1343
      %v1388 = vunpack.c.h.b16 %v1343
      %v1389 = vunpack.c.l.b16 %v1344
      %v1390 = vunpack.c.h.b16 %v1344
      %v1391 = vunpack.c.l.b16 %v1345
      %v1392 = vunpack.c.h.b16 %v1345
      %v1393 = vunpack.c.l.b16 %v1346
      %v1394 = vunpack.c.h.b16 %v1346
      %v1395 = vpack.c.b16 %v1371, %v1363
      %v1396 = vpack.c.b16 %v1372, %v1364
      %v1397 = vpack.c.b16 %v1373, %v1365
      %v1398 = vpack.c.b16 %v1374, %v1366
      %v1399 = vpack.c.b16 %v1375, %v1367
      %v1400 = vpack.c.b16 %v1376, %v1368
      %v1401 = vpack.c.b16 %v1377, %v1369
      %v1402 = vpack.c.b16 %v1378, %v1370
      %v1403 = vpack.c.b16 %v1387, %v1379
      %v1404 = vpack.c.b16 %v1388, %v1380
      %v1405 = vpack.c.b16 %v1389, %v1381
      %v1406 = vpack.c.b16 %v1390, %v1382
      %v1407 = vpack.c.b16 %v1391, %v1383
      %v1408 = vpack.c.b16 %v1392, %v1384
      %v1409 = vpack.c.b16 %v1393, %v1385
      %v1410 = vpack.c.b16 %v1394, %v1386
      %1427 = vmatprep.subr.bf16.mxu0 0
      %1428 = vmatpush1.bf16.msra.mxu0 %v701
      %1429 = vmatprep.subr.bf16.mxu0 0
      %1430 = vmatpush1.bf16.msra.mxu0 %v702
      %1431 = vmatprep.subr.bf16.mxu0 0
      %1432 = vmatpush1.bf16.msra.mxu0 %v703
      %1433 = vmatprep.subr.bf16.mxu0 0
      %1434 = vmatpush1.bf16.msra.mxu0 %v704
      %1435 = vmatprep.subr.bf16.mxu0 0
      %1436 = vmatpush1.bf16.msra.mxu0 %v705
      %1437 = vmatprep.subr.bf16.mxu0 0
      %1438 = vmatpush1.bf16.msra.mxu0 %v706
      %1439 = vmatprep.subr.bf16.mxu0 0
      %1440 = vmatpush1.bf16.msra.mxu0 %v707
      %1441 = vmatprep.subr.bf16.mxu0 0
      %1442 = vmatpush1.bf16.msra.mxu0 %v708
      %1443 = vmatprep.subr.bf16.mxu0 0
      %1444 = vmatpush1.bf16.msra.mxu0 %v709
      %1445 = vmatprep.subr.bf16.mxu0 0
      %1446 = vmatpush1.bf16.msra.mxu0 %v710
      %1447 = vmatprep.subr.bf16.mxu0 0
      %1448 = vmatpush1.bf16.msra.mxu0 %v711
      %1449 = vmatprep.subr.bf16.mxu0 0
      %1450 = vmatpush1.bf16.msra.mxu0 %v712
      %1451 = vmatprep.subr.bf16.mxu0 0
      %1452 = vmatpush1.bf16.msra.mxu0 %v713
      %1453 = vmatprep.subr.bf16.mxu0 0
      %1454 = vmatpush1.bf16.msra.mxu0 %v714
      %1455 = vmatprep.subr.bf16.mxu0 0
      %1456 = vmatpush1.bf16.msra.mxu0 %v715
      %1457 = vmatprep.subr.bf16.mxu0 0
      %1458 = vmatpush1.bf16.msra.mxu0 %v716
      %1459 = vmatprep.mubr.bf16.mxu0 %v1396
      %1460 = vmatmul.mubr.bf16.gmra.mrb[0].mxu0 %v1395
      %v1461 = vpop.f32.mrb[0].mxu0
      %v1462 = vadd.f32 %v363, %v1461
      %v1463 = vpop.f32.mrb[0].mxu0
      %v1464 = vpop.f32.mrb[0].mxu0
      %v1465 = vadd.f32 %v363, %v1464
      %v1466 = vpop.f32.mrb[0].mxu0
      %1467 = vmatprep.mubr.bf16.mxu0 %v1404
      %1468 = vmatmul.mubr.bf16.gmra.mrb[0].mxu0 %v1403
      %v1469 = vpop.f32.mrb[0].mxu0
      %v1470 = vadd.f32 %v363, %v1469
      %v1471 = vpop.f32.mrb[0].mxu0
      %v1472 = vpop.f32.mrb[0].mxu0
      %v1473 = vadd.f32 %v363, %v1472
      %v1474 = vpop.f32.mrb[0].mxu0
      %1475 = vdwg.mxu0
      %1476 = vmatprep.subr.bf16.mxu0 0
      %1477 = vmatpush1.bf16.msra.mxu0 %v717
      %1478 = vmatprep.subr.bf16.mxu0 0
      %1479 = vmatpush1.bf16.msra.mxu0 %v718
      %1480 = vmatprep.subr.bf16.mxu0 0
      %1481 = vmatpush1.bf16.msra.mxu0 %v719
      %1482 = vmatprep.subr.bf16.mxu0 0
      %1483 = vmatpush1.bf16.msra.mxu0 %v720
      %1484 = vmatprep.subr.bf16.mxu0 0
      %1485 = vmatpush1.bf16.msra.mxu0 %v721
      %1486 = vmatprep.subr.bf16.mxu0 0
      %1487 = vmatpush1.bf16.msra.mxu0 %v722
      %1488 = vmatprep.subr.bf16.mxu0 0
      %1489 = vmatpush1.bf16.msra.mxu0 %v723
      %1490 = vmatprep.subr.bf16.mxu0 0
      %1491 = vmatpush1.bf16.msra.mxu0 %v724
      %1492 = vmatprep.subr.bf16.mxu0 0
      %1493 = vmatpush1.bf16.msra.mxu0 %v725
      %1494 = vmatprep.subr.bf16.mxu0 0
      %1495 = vmatpush1.bf16.msra.mxu0 %v726
      %1496 = vmatprep.subr.bf16.mxu0 0
      %1497 = vmatpush1.bf16.msra.mxu0 %v727
      %1498 = vmatprep.subr.bf16.mxu0 0
      %1499 = vmatpush1.bf16.msra.mxu0 %v728
      %1500 = vmatprep.subr.bf16.mxu0 0
      %1501 = vmatpush1.bf16.msra.mxu0 %v729
      %1502 = vmatprep.subr.bf16.mxu0 0
      %1503 = vmatpush1.bf16.msra.mxu0 %v730
      %1504 = vmatprep.subr.bf16.mxu0 0
      %1505 = vmatpush1.bf16.msra.mxu0 %v731
      %1506 = vmatprep.subr.bf16.mxu0 0
      %1507 = vmatpush1.bf16.msra.mxu0 %v732
      %1508 = vmatprep.mubr.bf16.mxu0 %v1398
      %1509 = vmatmul.mubr.bf16.gmra.mrb[0].mxu0 %v1397
      %v1510 = vpop.f32.mrb[0].mxu0
      %v1511 = vadd.f32 %v1462, %v1510
      %v1512 = vpop.f32.mrb[0].mxu0
      %v1513 = vpop.f32.mrb[0].mxu0
      %v1514 = vadd.f32 %v1465, %v1513
      %v1515 = vpop.f32.mrb[0].mxu0
      %1516 = vmatprep.mubr.bf16.mxu0 %v1406
      %1517 = vmatmul.mubr.bf16.gmra.mrb[0].mxu0 %v1405
      %v1518 = vpop.f32.mrb[0].mxu0
      %v1519 = vadd.f32 %v1470, %v1518
      %v1520 = vpop.f32.mrb[0].mxu0
      %v1521 = vpop.f32.mrb[0].mxu0
      %v1522 = vadd.f32 %v1473, %v1521
      %v1523 = vpop.f32.mrb[0].mxu0
      %1524 = vdwg.mxu0
      %1525 = vmatprep.subr.bf16.mxu0 0
      %1526 = vmatpush1.bf16.msra.mxu0 %v733
      %1527 = vmatprep.subr.bf16.mxu0 0
      %1528 = vmatpush1.bf16.msra.mxu0 %v734
      %1529 = vmatprep.subr.bf16.mxu0 0
      %1530 = vmatpush1.bf16.msra.mxu0 %v735
      %1531 = vmatprep.subr.bf16.mxu0 0
      %1532 = vmatpush1.bf16.msra.mxu0 %v736
      %1533 = vmatprep.subr.bf16.mxu0 0
      %1534 = vmatpush1.bf16.msra.mxu0 %v737
      %1535 = vmatprep.subr.bf16.mxu0 0
      %1536 = vmatpush1.bf16.msra.mxu0 %v738
      %1537 = vmatprep.subr.bf16.mxu0 0
      %1538 = vmatpush1.bf16.msra.mxu0 %v739
      %1539 = vmatprep.subr.bf16.mxu0 0
      %1540 = vmatpush1.bf16.msra.mxu0 %v740
      %1541 = vmatprep.subr.bf16.mxu0 0
      %1542 = vmatpush1.bf16.msra.mxu0 %v741
      %1543 = vmatprep.subr.bf16.mxu0 0
      %1544 = vmatpush1.bf16.msra.mxu0 %v742
      %1545 = vmatprep.subr.bf16.mxu0 0
      %1546 = vmatpush1.bf16.msra.mxu0 %v743
      %1547 = vmatprep.subr.bf16.mxu0 0
      %1548 = vmatpush1.bf16.msra.mxu0 %v744
      %1549 = vmatprep.subr.bf16.mxu0 0
      %1550 = vmatpush1.bf16.msra.mxu0 %v745
      %1551 = vmatprep.subr.bf16.mxu0 0
      %1552 = vmatpush1.bf16.msra.mxu0 %v746
      %1553 = vmatprep.subr.bf16.mxu0 0
      %1554 = vmatpush1.bf16.msra.mxu0 %v747
      %1555 = vmatprep.subr.bf16.mxu0 0
      %1556 = vmatpush1.bf16.msra.mxu0 %v748
      %1557 = vmatprep.mubr.bf16.mxu0 %v1400
      %1558 = vmatmul.mubr.bf16.gmra.mrb[0].mxu0 %v1399
      %v1559 = vpop.f32.mrb[0].mxu0
      %v1560 = vadd.f32 %v1511, %v1559
      %v1561 = vpop.f32.mrb[0].mxu0
      %v1562 = vpop.f32.mrb[0].mxu0
      %v1563 = vadd.f32 %v1514, %v1562
      %v1564 = vpop.f32.mrb[0].mxu0
      %1565 = vmatprep.mubr.bf16.mxu0 %v1408
      %1566 = vmatmul.mubr.bf16.gmra.mrb[0].mxu0 %v1407
      %v1567 = vpop.f32.mrb[0].mxu0
      %v1568 = vadd.f32 %v1519, %v1567
      %v1569 = vpop.f32.mrb[0].mxu0
      %v1570 = vpop.f32.mrb[0].mxu0
      %v1571 = vadd.f32 %v1522, %v1570
      %v1572 = vpop.f32.mrb[0].mxu0
      %1573 = vdwg.mxu0
      %1574 = vmatprep.subr.bf16.mxu0 0
      %1575 = vmatpush1.bf16.msra.mxu0 %v749
      %1576 = vmatprep.subr.bf16.mxu0 0
      %1577 = vmatpush1.bf16.msra.mxu0 %v750
      %1578 = vmatprep.subr.bf16.mxu0 0
      %1579 = vmatpush1.bf16.msra.mxu0 %v751
      %1580 = vmatprep.subr.bf16.mxu0 0
      %1581 = vmatpush1.bf16.msra.mxu0 %v752
      %1582 = vmatprep.subr.bf16.mxu0 0
      %1583 = vmatpush1.bf16.msra.mxu0 %v753
      %1584 = vmatprep.subr.bf16.mxu0 0
      %1585 = vmatpush1.bf16.msra.mxu0 %v754
      %1586 = vmatprep.subr.bf16.mxu0 0
      %1587 = vmatpush1.bf16.msra.mxu0 %v755
      %1588 = vmatprep.subr.bf16.mxu0 0
      %1589 = vmatpush1.bf16.msra.mxu0 %v756
      %1590 = vmatprep.subr.bf16.mxu0 0
      %1591 = vmatpush1.bf16.msra.mxu0 %v757
      %1592 = vmatprep.subr.bf16.mxu0 0
      %1593 = vmatpush1.bf16.msra.mxu0 %v758
      %1594 = vmatprep.subr.bf16.mxu0 0
      %1595 = vmatpush1.bf16.msra.mxu0 %v759
      %1596 = vmatprep.subr.bf16.mxu0 0
      %1597 = vmatpush1.bf16.msra.mxu0 %v760
      %1598 = vmatprep.subr.bf16.mxu0 0
      %1599 = vmatpush1.bf16.msra.mxu0 %v761
      %1600 = vmatprep.subr.bf16.mxu0 0
      %1601 = vmatpush1.bf16.msra.mxu0 %v762
      %1602 = vmatprep.subr.bf16.mxu0 0
      %1603 = vmatpush1.bf16.msra.mxu0 %v763
      %1604 = vmatprep.subr.bf16.mxu0 0
      %1605 = vmatpush1.bf16.msra.mxu0 %v764
      %1606 = vmatprep.mubr.bf16.mxu0 %v1402
      %1607 = vmatmul.mubr.bf16.gmra.mrb[0].mxu0 %v1401
      %v1608 = vpop.f32.mrb[0].mxu0
      %v1609 = vadd.f32 %v1560, %v1608
      %v1610 = vpop.f32.mrb[0].mxu0
      %v1611 = vpop.f32.mrb[0].mxu0
      %v1612 = vadd.f32 %v1563, %v1611
      %v1613 = vpop.f32.mrb[0].mxu0
      %1614 = vmatprep.mubr.bf16.mxu0 %v1410
      %1615 = vmatmul.mubr.bf16.gmra.mrb[0].mxu0 %v1409
      %v1616 = vpop.f32.mrb[0].mxu0
      %v1617 = vadd.f32 %v1568, %v1616
      %v1618 = vpop.f32.mrb[0].mxu0
      %v1619 = vpop.f32.mrb[0].mxu0
      %v1620 = vadd.f32 %v1571, %v1619
      %v1621 = vpop.f32.mrb[0].mxu0
      %1622 = vdwg.mxu0
      %v1623 = vtanh.pop %v1609
      %v1624 = vtanh.pop %v1612
      %v1625 = vtanh.pop %v1617
      %v1626 = vtanh.pop %v1620
      %v1627 = vmax.f32 %v1326, %v1623
      %v1628 = vmax.f32 %v1327, %v1624
      %v1629 = vmax.f32 %v1328, %v1625
      %v1630 = vmax.f32 %v1329, %v1626
      %s1631 = scalar_lea.vmem %s201, 384
      %v1632 = vld [vmem:[%s1631] sm:$0xff]
      %v1633 = vld [vmem:[%s1631 + $0x8] sm:$0xff]
      %v1634 = vld [vmem:[%s1631 + $0x10] sm:$0xff]
      %v1635 = vld [vmem:[%s1631 + $0x18] sm:$0xff]
      %v1636 = vld [vmem:[%s1631 + $0x20] sm:$0xff]
      %v1637 = vld [vmem:[%s1631 + $0x28] sm:$0xff]
      %v1638 = vld [vmem:[%s1631 + $0x30] sm:$0xff]
      %v1639 = vld [vmem:[%s1631 + $0x38] sm:$0xff]
      %v1640 = vld [vmem:[%s1631 + $0x40] sm:$0xff]
      %v1641 = vld [vmem:[%s1631 + $0x48] sm:$0xff]
      %v1642 = vld [vmem:[%s1631 + $0x50] sm:$0xff]
      %v1643 = vld [vmem:[%s1631 + $0x58] sm:$0xff]
      %v1644 = vld [vmem:[%s1631 + $0x60] sm:$0x11]
      %v1645 = vld [vmem:[%s1631 + $0x68] sm:$0x11]
      %v1646 = vld [vmem:[%s1631 + $0x70] sm:$0x11]
      %v1647 = vld [vmem:[%s1631 + $0x78] sm:$0x11]
      %v1664 = vunpack.c.l.b16 %v1632
      %v1665 = vunpack.c.h.b16 %v1632
      %v1666 = vunpack.c.l.b16 %v1633
      %v1667 = vunpack.c.h.b16 %v1633
      %v1668 = vunpack.c.l.b16 %v1634
      %v1669 = vunpack.c.h.b16 %v1634
      %v1670 = vunpack.c.l.b16 %v1635
      %v1671 = vunpack.c.h.b16 %v1635
      %v1672 = vunpack.c.l.b16 %v1636
      %v1673 = vunpack.c.h.b16 %v1636
      %v1674 = vunpack.c.l.b16 %v1637
      %v1675 = vunpack.c.h.b16 %v1637
      %v1676 = vunpack.c.l.b16 %v1638
      %v1677 = vunpack.c.h.b16 %v1638
      %v1678 = vunpack.c.l.b16 %v1639
      %v1679 = vunpack.c.h.b16 %v1639
      %v1680 = vunpack.c.l.b16 %v1640
      %v1681 = vunpack.c.h.b16 %v1640
      %v1682 = vunpack.c.l.b16 %v1641
      %v1683 = vunpack.c.h.b16 %v1641
      %v1684 = vunpack.c.l.b16 %v1642
      %v1685 = vunpack.c.h.b16 %v1642
      %v1686 = vunpack.c.l.b16 %v1643
      %v1687 = vunpack.c.h.b16 %v1643
      %v1688 = vunpack.c.l.b16 %v1644
      %v1689 = vunpack.c.h.b16 %v1644
      %v1690 = vunpack.c.l.b16 %v1645
      %v1691 = vunpack.c.h.b16 %v1645
      %v1692 = vunpack.c.l.b16 %v1646
      %v1693 = vunpack.c.h.b16 %v1646
      %v1694 = vunpack.c.l.b16 %v1647
      %v1695 = vunpack.c.h.b16 %v1647
      %v1696 = vpack.c.b16 %v1672, %v1664
      %v1697 = vpack.c.b16 %v1673, %v1665
      %v1698 = vpack.c.b16 %v1674, %v1666
      %v1699 = vpack.c.b16 %v1675, %v1667
      %v1700 = vpack.c.b16 %v1676, %v1668
      %v1701 = vpack.c.b16 %v1677, %v1669
      %v1702 = vpack.c.b16 %v1678, %v1670
      %v1703 = vpack.c.b16 %v1679, %v1671
      %v1704 = vpack.c.b16 %v1688, %v1680
      %v1705 = vpack.c.b16 %v1689, %v1681
      %v1706 = vpack.c.b16 %v1690, %v1682
      %v1707 = vpack.c.b16 %v1691, %v1683
      %v1708 = vpack.c.b16 %v1692, %v1684
      %v1709 = vpack.c.b16 %v1693, %v1685
      %v1710 = vpack.c.b16 %v1694, %v1686
      %v1711 = vpack.c.b16 %v1695, %v1687
      %1728 = vmatprep.subr.bf16.mxu0 0
      %1729 = vmatpush1.bf16.msra.mxu0 %v701
      %1730 = vmatprep.subr.bf16.mxu0 0
      %1731 = vmatpush1.bf16.msra.mxu0 %v702
      %1732 = vmatprep.subr.bf16.mxu0 0
      %1733 = vmatpush1.bf16.msra.mxu0 %v703
      %1734 = vmatprep.subr.bf16.mxu0 0
      %1735 = vmatpush1.bf16.msra.mxu0 %v704
      %1736 = vmatprep.subr.bf16.mxu0 0
      %1737 = vmatpush1.bf16.msra.mxu0 %v705
      %1738 = vmatprep.subr.bf16.mxu0 0
      %1739 = vmatpush1.bf16.msra.mxu0 %v706
      %1740 = vmatprep.subr.bf16.mxu0 0
      %1741 = vmatpush1.bf16.msra.mxu0 %v707
      %1742 = vmatprep.subr.bf16.mxu0 0
      %1743 = vmatpush1.bf16.msra.mxu0 %v708
      %1744 = vmatprep.subr.bf16.mxu0 0
      %1745 = vmatpush1.bf16.msra.mxu0 %v709
      %1746 = vmatprep.subr.bf16.mxu0 0
      %1747 = vmatpush1.bf16.msra.mxu0 %v710
      %1748 = vmatprep.subr.bf16.mxu0 0
      %1749 = vmatpush1.bf16.msra.mxu0 %v711
      %1750 = vmatprep.subr.bf16.mxu0 0
      %1751 = vmatpush1.bf16.msra.mxu0 %v712
      %1752 = vmatprep.subr.bf16.mxu0 0
      %1753 = vmatpush1.bf16.msra.mxu0 %v713
      %1754 = vmatprep.subr.bf16.mxu0 0
      %1755 = vmatpush1.bf16.msra.mxu0 %v714
      %1756 = vmatprep.subr.bf16.mxu0 0
      %1757 = vmatpush1.bf16.msra.mxu0 %v715
      %1758 = vmatprep.subr.bf16.mxu0 0
      %1759 = vmatpush1.bf16.msra.mxu0 %v716
      %1760 = vmatprep.mubr.bf16.mxu0 %v1697
      %1761 = vmatmul.mubr.bf16.gmra.mrb[0].mxu0 %v1696
      %v1762 = vpop.f32.mrb[0].mxu0
      %v1763 = vadd.f32 %v363, %v1762
      %v1764 = vpop.f32.mrb[0].mxu0
      %v1765 = vpop.f32.mrb[0].mxu0
      %v1766 = vadd.f32 %v363, %v1765
      %v1767 = vpop.f32.mrb[0].mxu0
      %1768 = vmatprep.mubr.bf16.mxu0 %v1705
      %1769 = vmatmul.mubr.bf16.gmra.mrb[0].mxu0 %v1704
      %v1770 = vpop.f32.mrb[0].mxu0
      %v1771 = vadd.f32 %v363, %v1770
      %v1772 = vpop.f32.mrb[0].mxu0
      %v1773 = vpop.f32.mrb[0].mxu0
      %v1774 = vadd.f32 %v363, %v1773
      %v1775 = vpop.f32.mrb[0].mxu0
      %1776 = vdwg.mxu0
      %1777 = vmatprep.subr.bf16.mxu0 0
      %1778 = vmatpush1.bf16.msra.mxu0 %v717
      %1779 = vmatprep.subr.bf16.mxu0 0
      %1780 = vmatpush1.bf16.msra.mxu0 %v718
      %1781 = vmatprep.subr.bf16.mxu0 0
      %1782 = vmatpush1.bf16.msra.mxu0 %v719
      %1783 = vmatprep.subr.bf16.mxu0 0
      %1784 = vmatpush1.bf16.msra.mxu0 %v720
      %1785 = vmatprep.subr.bf16.mxu0 0
      %1786 = vmatpush1.bf16.msra.mxu0 %v721
      %1787 = vmatprep.subr.bf16.mxu0 0
      %1788 = vmatpush1.bf16.msra.mxu0 %v722
      %1789 = vmatprep.subr.bf16.mxu0 0
      %1790 = vmatpush1.bf16.msra.mxu0 %v723
      %1791 = vmatprep.subr.bf16.mxu0 0
      %1792 = vmatpush1.bf16.msra.mxu0 %v724
      %1793 = vmatprep.subr.bf16.mxu0 0
      %1794 = vmatpush1.bf16.msra.mxu0 %v725
      %1795 = vmatprep.subr.bf16.mxu0 0
      %1796 = vmatpush1.bf16.msra.mxu0 %v726
      %1797 = vmatprep.subr.bf16.mxu0 0
      %1798 = vmatpush1.bf16.msra.mxu0 %v727
      %1799 = vmatprep.subr.bf16.mxu0 0
      %1800 = vmatpush1.bf16.msra.mxu0 %v728
      %1801 = vmatprep.subr.bf16.mxu0 0
      %1802 = vmatpush1.bf16.msra.mxu0 %v729
      %1803 = vmatprep.subr.bf16.mxu0 0
      %1804 = vmatpush1.bf16.msra.mxu0 %v730
      %1805 = vmatprep.subr.bf16.mxu0 0
      %1806 = vmatpush1.bf16.msra.mxu0 %v731
      %1807 = vmatprep.subr.bf16.mxu0 0
      %1808 = vmatpush1.bf16.msra.mxu0 %v732
      %1809 = vmatprep.mubr.bf16.mxu0 %v1699
      %1810 = vmatmul.mubr.bf16.gmra.mrb[0].mxu0 %v1698
      %v1811 = vpop.f32.mrb[0].mxu0
      %v1812 = vadd.f32 %v1763, %v1811
      %v1813 = vpop.f32.mrb[0].mxu0
      %v1814 = vpop.f32.mrb[0].mxu0
      %v1815 = vadd.f32 %v1766, %v1814
      %v1816 = vpop.f32.mrb[0].mxu0
      %1817 = vmatprep.mubr.bf16.mxu0 %v1707
      %1818 = vmatmul.mubr.bf16.gmra.mrb[0].mxu0 %v1706
      %v1819 = vpop.f32.mrb[0].mxu0
      %v1820 = vadd.f32 %v1771, %v1819
      %v1821 = vpop.f32.mrb[0].mxu0
      %v1822 = vpop.f32.mrb[0].mxu0
      %v1823 = vadd.f32 %v1774, %v1822
      %v1824 = vpop.f32.mrb[0].mxu0
      %1825 = vdwg.mxu0
      %1826 = vmatprep.subr.bf16.mxu0 0
      %1827 = vmatpush1.bf16.msra.mxu0 %v733
      %1828 = vmatprep.subr.bf16.mxu0 0
      %1829 = vmatpush1.bf16.msra.mxu0 %v734
      %1830 = vmatprep.subr.bf16.mxu0 0
      %1831 = vmatpush1.bf16.msra.mxu0 %v735
      %1832 = vmatprep.subr.bf16.mxu0 0
      %1833 = vmatpush1.bf16.msra.mxu0 %v736
      %1834 = vmatprep.subr.bf16.mxu0 0
      %1835 = vmatpush1.bf16.msra.mxu0 %v737
      %1836 = vmatprep.subr.bf16.mxu0 0
      %1837 = vmatpush1.bf16.msra.mxu0 %v738
      %1838 = vmatprep.subr.bf16.mxu0 0
      %1839 = vmatpush1.bf16.msra.mxu0 %v739
      %1840 = vmatprep.subr.bf16.mxu0 0
      %1841 = vmatpush1.bf16.msra.mxu0 %v740
      %1842 = vmatprep.subr.bf16.mxu0 0
      %1843 = vmatpush1.bf16.msra.mxu0 %v741
      %1844 = vmatprep.subr.bf16.mxu0 0
      %1845 = vmatpush1.bf16.msra.mxu0 %v742
      %1846 = vmatprep.subr.bf16.mxu0 0
      %1847 = vmatpush1.bf16.msra.mxu0 %v743
      %1848 = vmatprep.subr.bf16.mxu0 0
      %1849 = vmatpush1.bf16.msra.mxu0 %v744
      %1850 = vmatprep.subr.bf16.mxu0 0
      %1851 = vmatpush1.bf16.msra.mxu0 %v745
      %1852 = vmatprep.subr.bf16.mxu0 0
      %1853 = vmatpush1.bf16.msra.mxu0 %v746
      %1854 = vmatprep.subr.bf16.mxu0 0
      %1855 = vmatpush1.bf16.msra.mxu0 %v747
      %1856 = vmatprep.subr.bf16.mxu0 0
      %1857 = vmatpush1.bf16.msra.mxu0 %v748
      %1858 = vmatprep.mubr.bf16.mxu0 %v1701
      %1859 = vmatmul.mubr.bf16.gmra.mrb[0].mxu0 %v1700
      %v1860 = vpop.f32.mrb[0].mxu0
      %v1861 = vadd.f32 %v1812, %v1860
      %v1862 = vpop.f32.mrb[0].mxu0
      %v1863 = vpop.f32.mrb[0].mxu0
      %v1864 = vadd.f32 %v1815, %v1863
      %v1865 = vpop.f32.mrb[0].mxu0
      %1866 = vmatprep.mubr.bf16.mxu0 %v1709
      %1867 = vmatmul.mubr.bf16.gmra.mrb[0].mxu0 %v1708
      %v1868 = vpop.f32.mrb[0].mxu0
      %v1869 = vadd.f32 %v1820, %v1868
      %v1870 = vpop.f32.mrb[0].mxu0
      %v1871 = vpop.f32.mrb[0].mxu0
      %v1872 = vadd.f32 %v1823, %v1871
      %v1873 = vpop.f32.mrb[0].mxu0
      %1874 = vdwg.mxu0
      %1875 = vmatprep.subr.bf16.mxu0 0
      %1876 = vmatpush1.bf16.msra.mxu0 %v749
      %1877 = vmatprep.subr.bf16.mxu0 0
      %1878 = vmatpush1.bf16.msra.mxu0 %v750
      %1879 = vmatprep.subr.bf16.mxu0 0
      %1880 = vmatpush1.bf16.msra.mxu0 %v751
      %1881 = vmatprep.subr.bf16.mxu0 0
      %1882 = vmatpush1.bf16.msra.mxu0 %v752
      %1883 = vmatprep.subr.bf16.mxu0 0
      %1884 = vmatpush1.bf16.msra.mxu0 %v753
      %1885 = vmatprep.subr.bf16.mxu0 0
      %1886 = vmatpush1.bf16.msra.mxu0 %v754
      %1887 = vmatprep.subr.bf16.mxu0 0
      %1888 = vmatpush1.bf16.msra.mxu0 %v755
      %1889 = vmatprep.subr.bf16.mxu0 0
      %1890 = vmatpush1.bf16.msra.mxu0 %v756
      %1891 = vmatprep.subr.bf16.mxu0 0
      %1892 = vmatpush1.bf16.msra.mxu0 %v757
      %1893 = vmatprep.subr.bf16.mxu0 0
      %1894 = vmatpush1.bf16.msra.mxu0 %v758
      %1895 = vmatprep.subr.bf16.mxu0 0
      %1896 = vmatpush1.bf16.msra.mxu0 %v759
      %1897 = vmatprep.subr.bf16.mxu0 0
      %1898 = vmatpush1.bf16.msra.mxu0 %v760
      %1899 = vmatprep.subr.bf16.mxu0 0
      %1900 = vmatpush1.bf16.msra.mxu0 %v761
      %1901 = vmatprep.subr.bf16.mxu0 0
      %1902 = vmatpush1.bf16.msra.mxu0 %v762
      %1903 = vmatprep.subr.bf16.mxu0 0
      %1904 = vmatpush1.bf16.msra.mxu0 %v763
      %1905 = vmatprep.subr.bf16.mxu0 0
      %1906 = vmatpush1.bf16.msra.mxu0 %v764
      %1907 = vmatprep.mubr.bf16.mxu0 %v1703
      %1908 = vmatmul.mubr.bf16.gmra.mrb[0].mxu0 %v1702
      %v1909 = vpop.f32.mrb[0].mxu0
      %v1910 = vadd.f32 %v1861, %v1909
      %v1911 = vpop.f32.mrb[0].mxu0
      %v1912 = vpop.f32.mrb[0].mxu0
      %v1913 = vadd.f32 %v1864, %v1912
      %v1914 = vpop.f32.mrb[0].mxu0
      %1915 = vmatprep.mubr.bf16.mxu0 %v1711
      %1916 = vmatmul.mubr.bf16.gmra.mrb[0].mxu0 %v1710
      %v1917 = vpop.f32.mrb[0].mxu0
      %v1918 = vadd.f32 %v1869, %v1917
      %v1919 = vpop.f32.mrb[0].mxu0
      %v1920 = vpop.f32.mrb[0].mxu0
      %v1921 = vadd.f32 %v1872, %v1920
      %v1922 = vpop.f32.mrb[0].mxu0
      %1923 = vdwg.mxu0
      %v1924 = vtanh.pop %v1910
      %v1925 = vtanh.pop %v1913
      %v1926 = vtanh.pop %v1918
      %v1927 = vtanh.pop %v1921
      %v1928 = vmax.f32 %v1627, %v1924
      %v1929 = vmax.f32 %v1628, %v1925
      %v1930 = vmax.f32 %v1629, %v1926
      %v1931 = vmax.f32 %v1630, %v1927
      %v1932 = vpack.c.bf16 %v1929, %v1928
      %v1933 = vpack.c.bf16 %v1931, %v1930
      %v1936 = vunpack.c.l.b16 %v1932
      %v1937 = vunpack.c.h.b16 %v1932
      %v1938 = vunpack.c.l.b16 %v1933
      %v1939 = vunpack.c.h.b16 %v1933
      %v1940 = vpack.c.b16 %v1936, %v1936
      %v1941 = vpack.c.b16 %v1937, %v1937
      %v1942 = vpack.c.b16 %v1938, %v1938
      %v1943 = vpack.c.b16 %v1939, %v1939
      %vm1948 = vcmask 519168
      %1949 = vst.msk [vmem:[%s211] sm:$0xf] %vm1948, %v1940
      %1950 = vst.msk [vmem:[%s211 + $0x4] sm:$0xf] %vm1948, %v1941
      %1951 = vst.msk [vmem:[%s211 + $0x8] sm:$0xf] %vm1948, %v1942
      %vm1952 = vcmask 516096
      %vm1953 = vsmask.f32 256
      %vm1954 = vmand %vm1952, %vm1953
      %v1955 = vld [vmem:[%s211 + $0xc] sm:$0x1]
      %v1956 = vsel %vm1954, %v1943, %v1955
      %1957 = vst [vmem:[%s211 + $0xc] sm:$0x1] %v1956
      %s1958 = smul.u32 4, %s19
      %p1959 = scmp.lt.s32.totalorder %s18, 1
      %s1960 = scalar_select %p1959, %s18, 1
      %p1961 = scmp.lt.s32.totalorder %s1958, 3
      %s1962 = scalar_select %p1961, %s1958, 3
      %s1963 = smul.addr %s1960, 4
      %s1964 = sadd.s32 %s1962, %s1963
      %s1965 = smul.addr %s1964, 4
      %s1966 = scalar_lea.vmem %s3, %s1965
      // Predicated region
      $region33: #{evaluate.4} parent=31 // pred_check
        %p1967 = pneg %p116
      $region34: #{evaluate.4} parent=31 // pred_check_branch
        %1969 = sbr.rel (%p1967) target = $region36
      $region35: #{evaluate.4} parent=31 // pred_region
        %s1970 = smul.u32 4, %s19
      $region36: #{evaluate.4} parent=31 // pred_fallthru
        _
    $region32: #{evaluate.4} parent=5 // pred_fallthru
      _
    %p1971 = scmp.le.s32.totalorder 2, %s9
    // Predicated region
    $region37: #{evaluate.4} parent=5 // pred_check
      %p1972 = pneg %p1971
    $region38: #{evaluate.4} parent=5 // pred_check_branch
      %1974 = sbr.rel (%p1972) target = $region40
    $region39: #{evaluate.4} parent=5 // pred_region
      %s1975 = ssub.s32 %s9, 2
      // Predicated region
      $region41: #{evaluate.4} parent=39 // pred_check
        %p1976 = pneg %p122
      $region42: #{evaluate.4} parent=39 // pred_check_branch
        %1978 = sbr.rel (%p1976) target = $region44
      $region43: #{evaluate.4} parent=39 // pred_region
        %s1979 = smul.u32 4, %s21
        %p1980 = scmp.lt.s32.totalorder %s20, 1
        %s1981 = scalar_select %p1980, %s20, 1
        %p1982 = scmp.lt.s32.totalorder %s1979, 3
        %s1983 = scalar_select %p1982, %s1979, 3
        %s1984 = smul.addr %s1981, 4
        %s1985 = sadd.s32 %s1983, %s1984
        %s1986 = smul.addr %s1985, 4
        %s1987 = scalar_lea.vmem %s3, %s1986
      $region44: #{evaluate.4} parent=39 // pred_fallthru
        _
    $region40: #{evaluate.4} parent=5 // pred_fallthru
      _
  $region6: #{evaluate.4} parent=0 // loop_footer
    %s13 = sadd.s32 1, %s9
  $region7: #{evaluate.4} parent=0 // loop_footer_branch
    %8 = sbr.rel target = $region3
  $region8: #{evaluate.4} parent=0 // loop_exit
    _

// kernel: evaluate.5
$region0: #{evaluate.5}
  #allocation0 [shape = 'u32[]', space=smem, size = 0x4, offset = 0x4, fixed_abs, tag = 'smem constant byte address 0x4 - core index']
  #allocation1 [shape = 'u32[144,128]{1,0:T(1,128)}', space=vmem, size = 0x12000, scoped, tag = 'internal scratch']
  %s0 = inlined_call_operand.vmem [shape: bf16[2,1600], index: 0, kind: input, shape index: {}]
  %s1 = inlined_call_operand.vmem [shape: f32[2,3], index: 1, kind: input, shape index: {}]
  %s2 = inlined_call_operand.vmem [shape: f32[1,3], index: 2, kind: input, shape index: {}]
  %s3 = inlined_call_operand.vmem [shape: bf16[1600,128], index: 3, kind: input, shape index: {}]
  %s4 = inlined_call_operand.vmem [shape: f32[1,128], index: 4, kind: input, shape index: {}]
  %s5 = inlined_call_operand.vmem [shape: f32[128,128], index: 5, kind: input, shape index: {}]
  %s6 = inlined_call_operand.vmem [shape: f32[1,128], index: 6, kind: input, shape index: {}]
  %s7 = inlined_call_operand.vmem [shape: f32[128,4], index: 7, kind: input, shape index: {}]
  %s8 = inlined_call_operand.vmem [shape: f32[1,4], index: 8, kind: input, shape index: {}]
  %s9 = inlined_call_operand.vmem [shape: f32[2,128], index: 9, kind: output, shape index: {}]
  %s10 = sld [smem:[#allocation0]]
  $region46: #{evaluate.5} parent=0
    _
  %s12 = ssub.s32 1, %s10
  %s13 = scalar_select 0, %s12, %s10
  // Predicated region
  $region2: #{evaluate.5} parent=0 // pred_check
    _
  $region3: #{evaluate.5} parent=0 // pred_check_branch
    %15 = sbr.rel (0) target = $region5
  $region4: #{evaluate.5} parent=0 // pred_region
    _
  $region5: #{evaluate.5} parent=0 // pred_fallthru
    _
  // Predicated region
  $region6: #{evaluate.5} parent=0 // pred_check
    _
  $region7: #{evaluate.5} parent=0 // pred_check_branch
    %17 = sbr.rel (0) target = $region9
  $region8: #{evaluate.5} parent=0 // pred_region
    _
  $region9: #{evaluate.5} parent=0 // pred_fallthru
    _
  // Predicated region
  $region10: #{evaluate.5} parent=0 // pred_check
    _
  $region11: #{evaluate.5} parent=0 // pred_check_branch
    %19 = sbr.rel (0) target = $region13
  $region12: #{evaluate.5} parent=0 // pred_region
    _
  $region13: #{evaluate.5} parent=0 // pred_fallthru
    _
  // Predicated region
  $region14: #{evaluate.5} parent=0 // pred_check
    _
  $region15: #{evaluate.5} parent=0 // pred_check_branch
    %21 = sbr.rel (0) target = $region17
  $region16: #{evaluate.5} parent=0 // pred_region
    _
  $region17: #{evaluate.5} parent=0 // pred_fallthru
    _
  // Predicated region
  $region18: #{evaluate.5} parent=0 // pred_check
    _
  $region19: #{evaluate.5} parent=0 // pred_check_branch
    %23 = sbr.rel (0) target = $region21
  $region20: #{evaluate.5} parent=0 // pred_region
    _
  $region21: #{evaluate.5} parent=0 // pred_fallthru
    _
  // Predicated region
  $region22: #{evaluate.5} parent=0 // pred_check
    _
  $region23: #{evaluate.5} parent=0 // pred_check_branch
    %25 = sbr.rel (0) target = $region25
  $region24: #{evaluate.5} parent=0 // pred_region
    _
  $region25: #{evaluate.5} parent=0 // pred_fallthru
    _
  // Predicated region
  $region26: #{evaluate.5} parent=0 // pred_check
    _
  $region27: #{evaluate.5} parent=0 // pred_check_branch
    %27 = sbr.rel (0) target = $region29
  $region28: #{evaluate.5} parent=0 // pred_region
    _
  $region29: #{evaluate.5} parent=0 // pred_fallthru
    _
  // Predicated region
  $region30: #{evaluate.5} parent=0 // pred_check
    _
  $region31: #{evaluate.5} parent=0 // pred_check_branch
    %29 = sbr.rel (0) target = $region33
  $region32: #{evaluate.5} parent=0 // pred_region
    _
  $region33: #{evaluate.5} parent=0 // pred_fallthru
    _
  // Predicated region
  $region34: #{evaluate.5} parent=0 // pred_check
    _
  $region35: #{evaluate.5} parent=0 // pred_check_branch
    %31 = sbr.rel (0) target = $region37
  $region36: #{evaluate.5} parent=0 // pred_region
    _
  $region37: #{evaluate.5} parent=0 // pred_fallthru
    _
  %v33 = vld [vmem:[%s0] sm:$0xff]
  %v34 = vld [vmem:[%s0 + $0x8] sm:$0x1f]
  %v35 = vld [vmem:[%s3] sm:$0xf]
  %v36 = vld [vmem:[%s3 + $0x4] sm:$0xf]
  %v37 = vld [vmem:[%s3 + $0x8] sm:$0xf]
  %v38 = vld [vmem:[%s3 + $0xc] sm:$0xf]
  %v39 = vld [vmem:[%s3 + $0x10] sm:$0xf]
  %v40 = vld [vmem:[%s3 + $0x14] sm:$0xf]
  %v41 = vld [vmem:[%s3 + $0x18] sm:$0xf]
  %v42 = vld [vmem:[%s3 + $0x1c] sm:$0xf]
  %v43 = vld [vmem:[%s3 + $0x20] sm:$0xf]
  %v44 = vld [vmem:[%s3 + $0x24] sm:$0xf]
  %v45 = vld [vmem:[%s3 + $0x28] sm:$0xf]
  %v46 = vld [vmem:[%s3 + $0x2c] sm:$0xf]
  %v47 = vld [vmem:[%s3 + $0x30] sm:$0xf]
  %v48 = vld [vmem:[%s3 + $0x34] sm:$0xf]
  %v49 = vld [vmem:[%s3 + $0x38] sm:$0xf]
  %v50 = vld [vmem:[%s3 + $0x3c] sm:$0xf]
  %v51 = vld [vmem:[%s3 + $0x40] sm:$0xf]
  %v52 = vld [vmem:[%s3 + $0x44] sm:$0xf]
  %v53 = vld [vmem:[%s3 + $0x48] sm:$0xf]
  %v54 = vld [vmem:[%s3 + $0x4c] sm:$0xf]
  %v55 = vld [vmem:[%s3 + $0x50] sm:$0xf]
  %v56 = vld [vmem:[%s3 + $0x54] sm:$0xf]
  %v57 = vld [vmem:[%s3 + $0x58] sm:$0xf]
  %v58 = vld [vmem:[%s3 + $0x5c] sm:$0xf]
  %v59 = vld [vmem:[%s3 + $0x60] sm:$0xf]
  %v60 = vld [vmem:[%s3 + $0x64] sm:$0xf]
  %v61 = vld [vmem:[%s3 + $0x68] sm:$0xf]
  %v62 = vld [vmem:[%s3 + $0x6c] sm:$0xf]
  %v63 = vld [vmem:[%s3 + $0x70] sm:$0xf]
  %v64 = vld [vmem:[%s3 + $0x74] sm:$0xf]
  %v65 = vld [vmem:[%s3 + $0x78] sm:$0xf]
  %v66 = vld [vmem:[%s3 + $0x7c] sm:$0xf]
  %v67 = vld [vmem:[%s3 + $0x80] sm:$0xf]
  %v68 = vld [vmem:[%s3 + $0x84] sm:$0xf]
  %v69 = vld [vmem:[%s3 + $0x88] sm:$0xf]
  %v70 = vld [vmem:[%s3 + $0x8c] sm:$0xf]
  %v71 = vld [vmem:[%s3 + $0x90] sm:$0xf]
  %v72 = vld [vmem:[%s3 + $0x94] sm:$0xf]
  %v73 = vld [vmem:[%s3 + $0x98] sm:$0xf]
  %v74 = vld [vmem:[%s3 + $0x9c] sm:$0xf]
  %v75 = vld [vmem:[%s3 + $0xa0] sm:$0xf]
  %v76 = vld [vmem:[%s3 + $0xa4] sm:$0xf]
  %v77 = vld [vmem:[%s3 + $0xa8] sm:$0xf]
  %v78 = vld [vmem:[%s3 + $0xac] sm:$0xf]
  %v79 = vld [vmem:[%s3 + $0xb0] sm:$0xf]
  %v80 = vld [vmem:[%s3 + $0xb4] sm:$0xf]
  %v81 = vld [vmem:[%s3 + $0xb8] sm:$0xf]
  %v82 = vld [vmem:[%s3 + $0xbc] sm:$0xf]
  %v83 = vld [vmem:[%s3 + $0xc0] sm:$0xf]
  %v84 = vld [vmem:[%s3 + $0xc4] sm:$0xf]
  %v85 = vld [vmem:[%s3 + $0xc8] sm:$0xf]
  %v86 = vld [vmem:[%s3 + $0xcc] sm:$0xf]
  %v87 = vld [vmem:[%s3 + $0xd0] sm:$0xf]
  %v88 = vld [vmem:[%s3 + $0xd4] sm:$0xf]
  %v89 = vld [vmem:[%s3 + $0xd8] sm:$0xf]
  %v90 = vld [vmem:[%s3 + $0xdc] sm:$0xf]
  %v91 = vld [vmem:[%s3 + $0xe0] sm:$0xf]
  %v92 = vld [vmem:[%s3 + $0xe4] sm:$0xf]
  %v93 = vld [vmem:[%s3 + $0xe8] sm:$0xf]
  %v94 = vld [vmem:[%s3 + $0xec] sm:$0xf]
  %v95 = vld [vmem:[%s3 + $0xf0] sm:$0xf]
  %v96 = vld [vmem:[%s3 + $0xf4] sm:$0xf]
  %v97 = vld [vmem:[%s3 + $0xf8] sm:$0xf]
  %v98 = vld [vmem:[%s3 + $0xfc] sm:$0xf]
  %v99 = vld [vmem:[%s3 + $0x100] sm:$0xf]
  %v100 = vld [vmem:[%s3 + $0x104] sm:$0xf]
  %v101 = vld [vmem:[%s3 + $0x108] sm:$0xf]
  %v102 = vld [vmem:[%s3 + $0x10c] sm:$0xf]
  %v103 = vld [vmem:[%s3 + $0x110] sm:$0xf]
  %v104 = vld [vmem:[%s3 + $0x114] sm:$0xf]
  %v105 = vld [vmem:[%s3 + $0x118] sm:$0xf]
  %v106 = vld [vmem:[%s3 + $0x11c] sm:$0xf]
  %v107 = vld [vmem:[%s3 + $0x120] sm:$0xf]
  %v108 = vld [vmem:[%s3 + $0x124] sm:$0xf]
  %v109 = vld [vmem:[%s3 + $0x128] sm:$0xf]
  %v110 = vld [vmem:[%s3 + $0x12c] sm:$0xf]
  %v111 = vld [vmem:[%s3 + $0x130] sm:$0xf]
  %v112 = vld [vmem:[%s3 + $0x134] sm:$0xf]
  %v113 = vld [vmem:[%s3 + $0x138] sm:$0xf]
  %v114 = vld [vmem:[%s3 + $0x13c] sm:$0xf]
  %v115 = vld [vmem:[%s3 + $0x140] sm:$0xf]
  %v116 = vld [vmem:[%s3 + $0x144] sm:$0xf]
  %v117 = vld [vmem:[%s3 + $0x148] sm:$0xf]
  %v118 = vld [vmem:[%s3 + $0x14c] sm:$0xf]
  %v119 = vld [vmem:[%s3 + $0x150] sm:$0xf]
  %v120 = vld [vmem:[%s3 + $0x154] sm:$0xf]
  %v121 = vld [vmem:[%s3 + $0x158] sm:$0xf]
  %v122 = vld [vmem:[%s3 + $0x15c] sm:$0xf]
  %v123 = vld [vmem:[%s3 + $0x160] sm:$0xf]
  %v124 = vld [vmem:[%s3 + $0x164] sm:$0xf]
  %v125 = vld [vmem:[%s3 + $0x168] sm:$0xf]
  %v126 = vld [vmem:[%s3 + $0x16c] sm:$0xf]
  %v127 = vld [vmem:[%s3 + $0x170] sm:$0xf]
  %v128 = vld [vmem:[%s3 + $0x174] sm:$0xf]
  %v129 = vld [vmem:[%s3 + $0x178] sm:$0xf]
  %v130 = vld [vmem:[%s3 + $0x17c] sm:$0xf]
  %v131 = vld [vmem:[%s3 + $0x180] sm:$0xf]
  %v132 = vld [vmem:[%s3 + $0x184] sm:$0xf]
  %v133 = vld [vmem:[%s3 + $0x188] sm:$0xf]
  %v134 = vld [vmem:[%s3 + $0x18c] sm:$0xf]
  %v135 = vld [vmem:[%s3 + $0x190] sm:$0xf]
  %v136 = vld [vmem:[%s3 + $0x194] sm:$0xf]
  %v137 = vld [vmem:[%s3 + $0x198] sm:$0xf]
  %v138 = vld [vmem:[%s3 + $0x19c] sm:$0xf]
  %v139 = vld [vmem:[%s3 + $0x1a0] sm:$0xf]
  %v140 = vld [vmem:[%s3 + $0x1a4] sm:$0xf]
  %v141 = vld [vmem:[%s3 + $0x1a8] sm:$0xf]
  %v142 = vld [vmem:[%s3 + $0x1ac] sm:$0xf]
  %v143 = vld [vmem:[%s3 + $0x1b0] sm:$0xf]
  %v144 = vld [vmem:[%s3 + $0x1b4] sm:$0xf]
  %v145 = vld [vmem:[%s3 + $0x1b8] sm:$0xf]
  %v146 = vld [vmem:[%s3 + $0x1bc] sm:$0xf]
  %v147 = vld [vmem:[%s3 + $0x1c0] sm:$0xf]
  %v148 = vld [vmem:[%s3 + $0x1c4] sm:$0xf]
  %v149 = vld [vmem:[%s3 + $0x1c8] sm:$0xf]
  %v150 = vld [vmem:[%s3 + $0x1cc] sm:$0xf]
  %v151 = vld [vmem:[%s3 + $0x1d0] sm:$0xf]
  %v152 = vld [vmem:[%s3 + $0x1d4] sm:$0xf]
  %v153 = vld [vmem:[%s3 + $0x1d8] sm:$0xf]
  %v154 = vld [vmem:[%s3 + $0x1dc] sm:$0xf]
  %v155 = vld [vmem:[%s3 + $0x1e0] sm:$0xf]
  %v156 = vld [vmem:[%s3 + $0x1e4] sm:$0xf]
  %v157 = vld [vmem:[%s3 + $0x1e8] sm:$0xf]
  %v158 = vld [vmem:[%s3 + $0x1ec] sm:$0xf]
  %v159 = vld [vmem:[%s3 + $0x1f0] sm:$0xf]
  %v160 = vld [vmem:[%s3 + $0x1f4] sm:$0xf]
  %v161 = vld [vmem:[%s3 + $0x1f8] sm:$0xf]
  %v162 = vld [vmem:[%s3 + $0x1fc] sm:$0xf]
  %v163 = vld [vmem:[%s3 + $0x200] sm:$0xf]
  %v164 = vld [vmem:[%s3 + $0x204] sm:$0xf]
  %v165 = vld [vmem:[%s3 + $0x208] sm:$0xf]
  %v166 = vld [vmem:[%s3 + $0x20c] sm:$0xf]
  %v167 = vld [vmem:[%s3 + $0x210] sm:$0xf]
  %v168 = vld [vmem:[%s3 + $0x214] sm:$0xf]
  %v169 = vld [vmem:[%s3 + $0x218] sm:$0xf]
  %v170 = vld [vmem:[%s3 + $0x21c] sm:$0xf]
  %v171 = vld [vmem:[%s3 + $0x220] sm:$0xf]
  %v172 = vld [vmem:[%s3 + $0x224] sm:$0xf]
  %v173 = vld [vmem:[%s3 + $0x228] sm:$0xf]
  %v174 = vld [vmem:[%s3 + $0x22c] sm:$0xf]
  %v175 = vld [vmem:[%s3 + $0x230] sm:$0xf]
  %v176 = vld [vmem:[%s3 + $0x234] sm:$0xf]
  %v177 = vld [vmem:[%s3 + $0x238] sm:$0xf]
  %v178 = vld [vmem:[%s3 + $0x23c] sm:$0xf]
  %v179 = vld [vmem:[%s3 + $0x240] sm:$0xf]
  %v180 = vld [vmem:[%s3 + $0x244] sm:$0xf]
  %v181 = vld [vmem:[%s3 + $0x248] sm:$0xf]
  %v182 = vld [vmem:[%s3 + $0x24c] sm:$0xf]
  %v183 = vld [vmem:[%s3 + $0x250] sm:$0xf]
  %v184 = vld [vmem:[%s3 + $0x254] sm:$0xf]
  %v185 = vld [vmem:[%s3 + $0x258] sm:$0xf]
  %v186 = vld [vmem:[%s3 + $0x25c] sm:$0xf]
  %v187 = vld [vmem:[%s3 + $0x260] sm:$0xf]
  %v188 = vld [vmem:[%s3 + $0x264] sm:$0xf]
  %v189 = vld [vmem:[%s3 + $0x268] sm:$0xf]
  %v190 = vld [vmem:[%s3 + $0x26c] sm:$0xf]
  %v191 = vld [vmem:[%s3 + $0x270] sm:$0xf]
  %v192 = vld [vmem:[%s3 + $0x274] sm:$0xf]
  %v193 = vld [vmem:[%s3 + $0x278] sm:$0xf]
  %v194 = vld [vmem:[%s3 + $0x27c] sm:$0xf]
  %v195 = vld [vmem:[%s3 + $0x280] sm:$0xf]
  %v196 = vld [vmem:[%s3 + $0x284] sm:$0xf]
  %v197 = vld [vmem:[%s3 + $0x288] sm:$0xf]
  %v198 = vld [vmem:[%s3 + $0x28c] sm:$0xf]
  %v199 = vld [vmem:[%s3 + $0x290] sm:$0xf]
  %v200 = vld [vmem:[%s3 + $0x294] sm:$0xf]
  %v201 = vld [vmem:[%s3 + $0x298] sm:$0xf]
  %v202 = vld [vmem:[%s3 + $0x29c] sm:$0xf]
  %v203 = vld [vmem:[%s3 + $0x2a0] sm:$0xf]
  %v204 = vld [vmem:[%s3 + $0x2a4] sm:$0xf]
  %v205 = vld [vmem:[%s3 + $0x2a8] sm:$0xf]
  %v206 = vld [vmem:[%s3 + $0x2ac] sm:$0xf]
  %v207 = vld [vmem:[%s3 + $0x2b0] sm:$0xf]
  %v208 = vld [vmem:[%s3 + $0x2b4] sm:$0xf]
  %v209 = vld [vmem:[%s3 + $0x2b8] sm:$0xf]
  %v210 = vld [vmem:[%s3 + $0x2bc] sm:$0xf]
  %v211 = vld [vmem:[%s3 + $0x2c0] sm:$0xf]
  %v212 = vld [vmem:[%s3 + $0x2c4] sm:$0xf]
  %v213 = vld [vmem:[%s3 + $0x2c8] sm:$0xf]
  %v214 = vld [vmem:[%s3 + $0x2cc] sm:$0xf]
  %v215 = vld [vmem:[%s3 + $0x2d0] sm:$0xf]
  %v216 = vld [vmem:[%s3 + $0x2d4] sm:$0xf]
  %v217 = vld [vmem:[%s3 + $0x2d8] sm:$0xf]
  %v218 = vld [vmem:[%s3 + $0x2dc] sm:$0xf]
  %v219 = vld [vmem:[%s3 + $0x2e0] sm:$0xf]
  %v220 = vld [vmem:[%s3 + $0x2e4] sm:$0xf]
  %v221 = vld [vmem:[%s3 + $0x2e8] sm:$0xf]
  %v222 = vld [vmem:[%s3 + $0x2ec] sm:$0xf]
  %v223 = vld [vmem:[%s3 + $0x2f0] sm:$0xf]
  %v224 = vld [vmem:[%s3 + $0x2f4] sm:$0xf]
  %v225 = vld [vmem:[%s3 + $0x2f8] sm:$0xf]
  %v226 = vld [vmem:[%s3 + $0x2fc] sm:$0xf]
  %v227 = vld [vmem:[%s3 + $0x300] sm:$0xf]
  %v228 = vld [vmem:[%s3 + $0x304] sm:$0xf]
  %v229 = vld [vmem:[%s3 + $0x308] sm:$0xf]
  %v230 = vld [vmem:[%s3 + $0x30c] sm:$0xf]
  %v231 = vld [vmem:[%s3 + $0x310] sm:$0xf]
  %v232 = vld [vmem:[%s3 + $0x314] sm:$0xf]
  %v233 = vld [vmem:[%s3 + $0x318] sm:$0xf]
  %v234 = vld [vmem:[%s3 + $0x31c] sm:$0xf]
  %v235 = vld [vmem:[%s4] sm:$0x1]
  %v237 = vlaneseq
  %v238 = vshrl.u32 %v237, 7
  %v239 = vsub.s32 0, %v238
  %v240 = vrot.slane %v235, %v239
  %v244 = vcombine.high %v33, %v33
  %v246 = vunpack.c.l.s4 1966171168
  %v247 = vunpack.c.0.s8 %v246
  %v248 = vlaneseq
  %v249 = vshrl.u32 %v248, 7
  %v250 = vsub.s32 %v247, %v249
  %v251 = vrot.slane %v33, %v250
  %v253 = vunpack.c.l.s4 1966171168
  %v254 = vunpack.c.0.s8 %v253
  %v255 = vlaneseq
  %v256 = vshrl.u32 %v255, 7
  %v257 = vsub.s32 %v254, %v256
  %v258 = vrot.slane %v244, %v257
  %v259 = vcombine.high %v251, %v251
  %v260 = vcombine.high %v258, %v258
  %v262 = vunpack.c.l.s4 1966171168
  %v263 = vunpack.c.0.s8 %v262
  %v264 = vlaneseq
  %v265 = vshrl.u32 %v264, 7
  %v266 = vsub.s32 %v263, %v265
  %v267 = vrot.slane %v251, %v266
  %v269 = vunpack.c.l.s4 1966171168
  %v270 = vunpack.c.0.s8 %v269
  %v271 = vlaneseq
  %v272 = vshrl.u32 %v271, 7
  %v273 = vsub.s32 %v270, %v272
  %v274 = vrot.slane %v258, %v273
  %v276 = vunpack.c.l.s4 1966171168
  %v277 = vunpack.c.0.s8 %v276
  %v278 = vlaneseq
  %v279 = vshrl.u32 %v278, 7
  %v280 = vsub.s32 %v277, %v279
  %v281 = vrot.slane %v259, %v280
  %v283 = vunpack.c.l.s4 1966171168
  %v284 = vunpack.c.0.s8 %v283
  %v285 = vlaneseq
  %v286 = vshrl.u32 %v285, 7
  %v287 = vsub.s32 %v284, %v286
  %v288 = vrot.slane %v260, %v287
  %v289 = vcombine.high %v267, %v267
  %v290 = vcombine.high %v274, %v274
  %v291 = vcombine.high %v281, %v281
  %v292 = vcombine.high %v288, %v288
  %v293 = vcombine.high %v34, %v34
  %v295 = vunpack.c.l.s4 1966171168
  %v296 = vunpack.c.0.s8 %v295
  %v297 = vlaneseq
  %v298 = vshrl.u32 %v297, 7
  %v299 = vsub.s32 %v296, %v298
  %v300 = vrot.slane %v34, %v299
  %v302 = vunpack.c.l.s4 1966171168
  %v303 = vunpack.c.0.s8 %v302
  %v304 = vlaneseq
  %v305 = vshrl.u32 %v304, 7
  %v306 = vsub.s32 %v303, %v305
  %v307 = vrot.slane %v293, %v306
  %v308 = vcombine.high %v300, %v300
  %v310 = vunpack.c.l.s4 1966171168
  %v311 = vunpack.c.0.s8 %v310
  %v312 = vlaneseq
  %v313 = vshrl.u32 %v312, 7
  %v314 = vsub.s32 %v311, %v313
  %v315 = vrot.slane %v300, %v314
  %v317 = vunpack.c.l.s4 1966171168
  %v318 = vunpack.c.0.s8 %v317
  %v319 = vlaneseq
  %v320 = vshrl.u32 %v319, 7
  %v321 = vsub.s32 %v318, %v320
  %v322 = vrot.slane %v307, %v321
  %v324 = vunpack.c.l.s4 1966171168
  %v325 = vunpack.c.0.s8 %v324
  %v326 = vlaneseq
  %v327 = vshrl.u32 %v326, 7
  %v328 = vsub.s32 %v325, %v327
  %v329 = vrot.slane %v308, %v328
  %v330 = vcombine.high %v315, %v315
  %v331 = vcombine.high %v329, %v329
  %v544 = vunpack.c.l.b16 %v35
  %v545 = vunpack.c.l.b16 %v36
  %v546 = vunpack.c.l.b16 %v37
  %v547 = vunpack.c.l.b16 %v38
  %v548 = vunpack.c.l.b16 %v39
  %v549 = vunpack.c.l.b16 %v40
  %v550 = vunpack.c.l.b16 %v41
  %v551 = vunpack.c.l.b16 %v42
  %v552 = vunpack.c.l.b16 %v43
  %v553 = vunpack.c.l.b16 %v44
  %v554 = vunpack.c.l.b16 %v45
  %v555 = vunpack.c.l.b16 %v46
  %v556 = vunpack.c.l.b16 %v47
  %v557 = vunpack.c.l.b16 %v48
  %v558 = vunpack.c.l.b16 %v49
  %v559 = vunpack.c.l.b16 %v50
  %v560 = vunpack.c.l.b16 %v51
  %v561 = vunpack.c.l.b16 %v52
  %v562 = vunpack.c.l.b16 %v53
  %v563 = vunpack.c.l.b16 %v54
  %v564 = vunpack.c.l.b16 %v55
  %v565 = vunpack.c.l.b16 %v56
  %v566 = vunpack.c.l.b16 %v57
  %v567 = vunpack.c.l.b16 %v58
  %v568 = vunpack.c.l.b16 %v59
  %v569 = vunpack.c.l.b16 %v60
  %v570 = vunpack.c.l.b16 %v61
  %v571 = vunpack.c.l.b16 %v62
  %v572 = vunpack.c.l.b16 %v63
  %v573 = vunpack.c.l.b16 %v64
  %v574 = vunpack.c.l.b16 %v65
  %v575 = vunpack.c.l.b16 %v66
  %v576 = vunpack.c.l.b16 %v67
  %v577 = vunpack.c.l.b16 %v68
  %v578 = vunpack.c.l.b16 %v69
  %v579 = vunpack.c.l.b16 %v70
  %v580 = vunpack.c.l.b16 %v71
  %v581 = vunpack.c.l.b16 %v72
  %v582 = vunpack.c.l.b16 %v73
  %v583 = vunpack.c.l.b16 %v74
  %v584 = vunpack.c.l.b16 %v75
  %v585 = vunpack.c.l.b16 %v76
  %v586 = vunpack.c.l.b16 %v77
  %v587 = vunpack.c.l.b16 %v78
  %v588 = vunpack.c.l.b16 %v79
  %v589 = vunpack.c.l.b16 %v80
  %v590 = vunpack.c.l.b16 %v81
  %v591 = vunpack.c.l.b16 %v82
  %v592 = vunpack.c.l.b16 %v83
  %v593 = vunpack.c.l.b16 %v84
  %v594 = vunpack.c.l.b16 %v85
  %v595 = vunpack.c.l.b16 %v86
  %v596 = vunpack.c.l.b16 %v87
  %v597 = vunpack.c.l.b16 %v88
  %v598 = vunpack.c.l.b16 %v89
  %v599 = vunpack.c.l.b16 %v90
  %v600 = vunpack.c.l.b16 %v91
  %v601 = vunpack.c.l.b16 %v92
  %v602 = vunpack.c.l.b16 %v93
  %v603 = vunpack.c.l.b16 %v94
  %v604 = vunpack.c.l.b16 %v95
  %v605 = vunpack.c.l.b16 %v96
  %v606 = vunpack.c.l.b16 %v97
  %v607 = vunpack.c.l.b16 %v98
  %v608 = vunpack.c.l.b16 %v99
  %v609 = vunpack.c.l.b16 %v100
  %v610 = vunpack.c.l.b16 %v101
  %v611 = vunpack.c.l.b16 %v102
  %v612 = vunpack.c.l.b16 %v103
  %v613 = vunpack.c.l.b16 %v104
  %v614 = vunpack.c.l.b16 %v105
  %v615 = vunpack.c.l.b16 %v106
  %v616 = vunpack.c.l.b16 %v107
  %v617 = vunpack.c.l.b16 %v108
  %v618 = vunpack.c.l.b16 %v109
  %v619 = vunpack.c.l.b16 %v110
  %v620 = vunpack.c.l.b16 %v111
  %v621 = vunpack.c.l.b16 %v112
  %v622 = vunpack.c.l.b16 %v113
  %v623 = vunpack.c.l.b16 %v114
  %v624 = vunpack.c.l.b16 %v115
  %v625 = vunpack.c.l.b16 %v116
  %v626 = vunpack.c.l.b16 %v117
  %v627 = vunpack.c.l.b16 %v118
  %v628 = vunpack.c.l.b16 %v119
  %v629 = vunpack.c.l.b16 %v120
  %v630 = vunpack.c.l.b16 %v121
  %v631 = vunpack.c.l.b16 %v122
  %v632 = vunpack.c.l.b16 %v123
  %v633 = vunpack.c.l.b16 %v124
  %v634 = vunpack.c.l.b16 %v125
  %v635 = vunpack.c.l.b16 %v126
  %v636 = vunpack.c.l.b16 %v127
  %v637 = vunpack.c.l.b16 %v128
  %v638 = vunpack.c.l.b16 %v129
  %v639 = vunpack.c.l.b16 %v130
  %v640 = vunpack.c.l.b16 %v131
  %v641 = vunpack.c.l.b16 %v132
  %v642 = vunpack.c.l.b16 %v133
  %v643 = vunpack.c.l.b16 %v134
  %v644 = vunpack.c.l.b16 %v135
  %v645 = vunpack.c.l.b16 %v136
  %v646 = vunpack.c.l.b16 %v137
  %v647 = vunpack.c.l.b16 %v138
  %v648 = vunpack.c.l.b16 %v139
  %v649 = vunpack.c.l.b16 %v140
  %v650 = vunpack.c.l.b16 %v141
  %v651 = vunpack.c.l.b16 %v142
  %v652 = vunpack.c.l.b16 %v143
  %v653 = vunpack.c.l.b16 %v144
  %v654 = vunpack.c.l.b16 %v145
  %v655 = vunpack.c.l.b16 %v146
  %v656 = vunpack.c.l.b16 %v147
  %v657 = vunpack.c.l.b16 %v148
  %v658 = vunpack.c.l.b16 %v149
  %v659 = vunpack.c.l.b16 %v150
  %v660 = vunpack.c.l.b16 %v151
  %v661 = vunpack.c.l.b16 %v152
  %v662 = vunpack.c.l.b16 %v153
  %v663 = vunpack.c.l.b16 %v154
  %v664 = vunpack.c.l.b16 %v155
  %v665 = vunpack.c.l.b16 %v156
  %v666 = vunpack.c.l.b16 %v157
  %v667 = vunpack.c.l.b16 %v158
  %v668 = vunpack.c.l.b16 %v159
  %v669 = vunpack.c.l.b16 %v160
  %v670 = vunpack.c.l.b16 %v161
  %v671 = vunpack.c.l.b16 %v162
  %v672 = vunpack.c.l.b16 %v163
  %v673 = vunpack.c.l.b16 %v164
  %v674 = vunpack.c.l.b16 %v165
  %v675 = vunpack.c.l.b16 %v166
  %v676 = vunpack.c.l.b16 %v167
  %v677 = vunpack.c.l.b16 %v168
  %v678 = vunpack.c.l.b16 %v169
  %v679 = vunpack.c.l.b16 %v170
  %v680 = vunpack.c.l.b16 %v171
  %v681 = vunpack.c.l.b16 %v172
  %v682 = vunpack.c.l.b16 %v173
  %v683 = vunpack.c.l.b16 %v174
  %v684 = vunpack.c.l.b16 %v175
  %v685 = vunpack.c.l.b16 %v176
  %v686 = vunpack.c.l.b16 %v177
  %v687 = vunpack.c.l.b16 %v178
  %v688 = vunpack.c.l.b16 %v179
  %v689 = vunpack.c.l.b16 %v180
  %v690 = vunpack.c.l.b16 %v181
  %v691 = vunpack.c.l.b16 %v182
  %v692 = vunpack.c.l.b16 %v183
  %v693 = vunpack.c.l.b16 %v184
  %v694 = vunpack.c.l.b16 %v185
  %v695 = vunpack.c.l.b16 %v186
  %v696 = vunpack.c.l.b16 %v187
  %v697 = vunpack.c.l.b16 %v188
  %v698 = vunpack.c.l.b16 %v189
  %v699 = vunpack.c.l.b16 %v190
  %v700 = vunpack.c.l.b16 %v191
  %v701 = vunpack.c.l.b16 %v192
  %v702 = vunpack.c.l.b16 %v193
  %v703 = vunpack.c.l.b16 %v194
  %v704 = vunpack.c.l.b16 %v195
  %v705 = vunpack.c.l.b16 %v196
  %v706 = vunpack.c.l.b16 %v197
  %v707 = vunpack.c.l.b16 %v198
  %v708 = vunpack.c.l.b16 %v199
  %v709 = vunpack.c.l.b16 %v200
  %v710 = vunpack.c.l.b16 %v201
  %v711 = vunpack.c.l.b16 %v202
  %v712 = vunpack.c.l.b16 %v203
  %v713 = vunpack.c.l.b16 %v204
  %v714 = vunpack.c.l.b16 %v205
  %v715 = vunpack.c.l.b16 %v206
  %v716 = vunpack.c.l.b16 %v207
  %v717 = vunpack.c.l.b16 %v208
  %v718 = vunpack.c.l.b16 %v209
  %v719 = vunpack.c.l.b16 %v210
  %v720 = vunpack.c.l.b16 %v211
  %v721 = vunpack.c.l.b16 %v212
  %v722 = vunpack.c.l.b16 %v213
  %v723 = vunpack.c.l.b16 %v214
  %v724 = vunpack.c.l.b16 %v215
  %v725 = vunpack.c.l.b16 %v216
  %v726 = vunpack.c.l.b16 %v217
  %v727 = vunpack.c.l.b16 %v218
  %v728 = vunpack.c.l.b16 %v219
  %v729 = vunpack.c.l.b16 %v220
  %v730 = vunpack.c.l.b16 %v221
  %v731 = vunpack.c.l.b16 %v222
  %v732 = vunpack.c.l.b16 %v223
  %v733 = vunpack.c.l.b16 %v224
  %v734 = vunpack.c.l.b16 %v225
  %v735 = vunpack.c.l.b16 %v226
  %v736 = vunpack.c.l.b16 %v227
  %v737 = vunpack.c.l.b16 %v228
  %v738 = vunpack.c.l.b16 %v229
  %v739 = vunpack.c.l.b16 %v230
  %v740 = vunpack.c.l.b16 %v231
  %v741 = vunpack.c.l.b16 %v232
  %v742 = vunpack.c.l.b16 %v233
  %v743 = vunpack.c.l.b16 %v234
  %v744 = vpack.c.b16 %v545, %v544
  %v745 = vpack.c.b16 %v547, %v546
  %v746 = vpack.c.b16 %v549, %v548
  %v747 = vpack.c.b16 %v551, %v550
  %v748 = vpack.c.b16 %v553, %v552
  %v749 = vpack.c.b16 %v555, %v554
  %v750 = vpack.c.b16 %v557, %v556
  %v751 = vpack.c.b16 %v559, %v558
  %v752 = vpack.c.b16 %v561, %v560
  %v753 = vpack.c.b16 %v563, %v562
  %v754 = vpack.c.b16 %v565, %v564
  %v755 = vpack.c.b16 %v567, %v566
  %v756 = vpack.c.b16 %v569, %v568
  %v757 = vpack.c.b16 %v571, %v570
  %v758 = vpack.c.b16 %v573, %v572
  %v759 = vpack.c.b16 %v575, %v574
  %v760 = vpack.c.b16 %v577, %v576
  %v761 = vpack.c.b16 %v579, %v578
  %v762 = vpack.c.b16 %v581, %v580
  %v763 = vpack.c.b16 %v583, %v582
  %v764 = vpack.c.b16 %v585, %v584
  %v765 = vpack.c.b16 %v587, %v586
  %v766 = vpack.c.b16 %v589, %v588
  %v767 = vpack.c.b16 %v591, %v590
  %v768 = vpack.c.b16 %v593, %v592
  %v769 = vpack.c.b16 %v595, %v594
  %v770 = vpack.c.b16 %v597, %v596
  %v771 = vpack.c.b16 %v599, %v598
  %v772 = vpack.c.b16 %v601, %v600
  %v773 = vpack.c.b16 %v603, %v602
  %v774 = vpack.c.b16 %v605, %v604
  %v775 = vpack.c.b16 %v607, %v606
  %v776 = vpack.c.b16 %v609, %v608
  %v777 = vpack.c.b16 %v611, %v610
  %v778 = vpack.c.b16 %v613, %v612
  %v779 = vpack.c.b16 %v615, %v614
  %v780 = vpack.c.b16 %v617, %v616
  %v781 = vpack.c.b16 %v619, %v618
  %v782 = vpack.c.b16 %v621, %v620
  %v783 = vpack.c.b16 %v623, %v622
  %v784 = vpack.c.b16 %v625, %v624
  %v785 = vpack.c.b16 %v627, %v626
  %v786 = vpack.c.b16 %v629, %v628
  %v787 = vpack.c.b16 %v631, %v630
  %v788 = vpack.c.b16 %v633, %v632
  %v789 = vpack.c.b16 %v635, %v634
  %v790 = vpack.c.b16 %v637, %v636
  %v791 = vpack.c.b16 %v639, %v638
  %v792 = vpack.c.b16 %v641, %v640
  %v793 = vpack.c.b16 %v643, %v642
  %v794 = vpack.c.b16 %v645, %v644
  %v795 = vpack.c.b16 %v647, %v646
  %v796 = vpack.c.b16 %v649, %v648
  %v797 = vpack.c.b16 %v651, %v650
  %v798 = vpack.c.b16 %v653, %v652
  %v799 = vpack.c.b16 %v655, %v654
  %v800 = vpack.c.b16 %v657, %v656
  %v801 = vpack.c.b16 %v659, %v658
  %v802 = vpack.c.b16 %v661, %v660
  %v803 = vpack.c.b16 %v663, %v662
  %v804 = vpack.c.b16 %v665, %v664
  %v805 = vpack.c.b16 %v667, %v666
  %v806 = vpack.c.b16 %v669, %v668
  %v807 = vpack.c.b16 %v671, %v670
  %v808 = vpack.c.b16 %v673, %v672
  %v809 = vpack.c.b16 %v675, %v674
  %v810 = vpack.c.b16 %v677, %v676
  %v811 = vpack.c.b16 %v679, %v678
  %v812 = vpack.c.b16 %v681, %v680
  %v813 = vpack.c.b16 %v683, %v682
  %v814 = vpack.c.b16 %v685, %v684
  %v815 = vpack.c.b16 %v687, %v686
  %v816 = vpack.c.b16 %v689, %v688
  %v817 = vpack.c.b16 %v691, %v690
  %v818 = vpack.c.b16 %v693, %v692
  %v819 = vpack.c.b16 %v695, %v694
  %v820 = vpack.c.b16 %v697, %v696
  %v821 = vpack.c.b16 %v699, %v698
  %v822 = vpack.c.b16 %v701, %v700
  %v823 = vpack.c.b16 %v703, %v702
  %v824 = vpack.c.b16 %v705, %v704
  %v825 = vpack.c.b16 %v707, %v706
  %v826 = vpack.c.b16 %v709, %v708
  %v827 = vpack.c.b16 %v711, %v710
  %v828 = vpack.c.b16 %v713, %v712
  %v829 = vpack.c.b16 %v715, %v714
  %v830 = vpack.c.b16 %v717, %v716
  %v831 = vpack.c.b16 %v719, %v718
  %v832 = vpack.c.b16 %v721, %v720
  %v833 = vpack.c.b16 %v723, %v722
  %v834 = vpack.c.b16 %v725, %v724
  %v835 = vpack.c.b16 %v727, %v726
  %v836 = vpack.c.b16 %v729, %v728
  %v837 = vpack.c.b16 %v731, %v730
  %v838 = vpack.c.b16 %v733, %v732
  %v839 = vpack.c.b16 %v735, %v734
  %v840 = vpack.c.b16 %v737, %v736
  %v841 = vpack.c.b16 %v739, %v738
  %v842 = vpack.c.b16 %v741, %v740
  %v843 = vpack.c.b16 %v743, %v742
  %vm944 = vcmask 523264
  %v946 = vsel %vm944, %v322, 0
  %948 = vmatprep.subr.bf16.mxu0 0
  %949 = vmatpush1.bf16.msra.mxu0 %v744
  %950 = vmatprep.subr.bf16.mxu0 0
  %951 = vmatpush1.bf16.msra.mxu0 %v745
  %952 = vmatprep.subr.bf16.mxu0 0
  %953 = vmatpush1.bf16.msra.mxu0 %v746
  %954 = vmatprep.subr.bf16.mxu0 0
  %955 = vmatpush1.bf16.msra.mxu0 %v747
  %956 = vmatprep.subr.bf16.mxu0 0
  %957 = vmatpush1.bf16.msra.mxu0 %v748
  %958 = vmatprep.subr.bf16.mxu0 0
  %959 = vmatpush1.bf16.msra.mxu0 %v749
  %960 = vmatprep.subr.bf16.mxu0 0
  %961 = vmatpush1.bf16.msra.mxu0 %v750
  %962 = vmatprep.subr.bf16.mxu0 0
  %963 = vmatpush1.bf16.msra.mxu0 %v751
  %964 = vmatprep.subr.bf16.mxu0 0
  %965 = vmatpush1.bf16.msra.mxu0 %v752
  %966 = vmatprep.subr.bf16.mxu0 0
  %967 = vmatpush1.bf16.msra.mxu0 %v753
  %968 = vmatprep.subr.bf16.mxu0 0
  %969 = vmatpush1.bf16.msra.mxu0 %v754
  %970 = vmatprep.subr.bf16.mxu0 0
  %971 = vmatpush1.bf16.msra.mxu0 %v755
  %972 = vmatprep.subr.bf16.mxu0 0
  %973 = vmatpush1.bf16.msra.mxu0 %v756
  %974 = vmatprep.subr.bf16.mxu0 0
  %975 = vmatpush1.bf16.msra.mxu0 %v757
  %976 = vmatprep.subr.bf16.mxu0 0
  %977 = vmatpush1.bf16.msra.mxu0 %v758
  %978 = vmatprep.subr.bf16.mxu0 0
  %979 = vmatpush1.bf16.msra.mxu0 %v759
  %980 = vmatprep.mubr.bf16.mxu0 %v281
  %981 = vmatmul.mubr.bf16.gmra.mrb[0].mxu0 %v267
  %v982 = vpop.f32.mrb[0].mxu0
  %v983 = vadd.f32 %v240, %v982
  %v984 = vpop.f32.mrb[0].mxu0
  %v985 = vpop.f32.mrb[0].mxu0
  %v986 = vpop.f32.mrb[0].mxu0
  %987 = vdwg.mxu0
  %988 = vmatprep.subr.bf16.mxu0 0
  %989 = vmatpush1.bf16.msra.mxu0 %v760
  %990 = vmatprep.subr.bf16.mxu0 0
  %991 = vmatpush1.bf16.msra.mxu0 %v761
  %992 = vmatprep.subr.bf16.mxu0 0
  %993 = vmatpush1.bf16.msra.mxu0 %v762
  %994 = vmatprep.subr.bf16.mxu0 0
  %995 = vmatpush1.bf16.msra.mxu0 %v763
  %996 = vmatprep.subr.bf16.mxu0 0
  %997 = vmatpush1.bf16.msra.mxu0 %v764
  %998 = vmatprep.subr.bf16.mxu0 0
  %999 = vmatpush1.bf16.msra.mxu0 %v765
  %1000 = vmatprep.subr.bf16.mxu0 0
  %1001 = vmatpush1.bf16.msra.mxu0 %v766
  %1002 = vmatprep.subr.bf16.mxu0 0
  %1003 = vmatpush1.bf16.msra.mxu0 %v767
  %1004 = vmatprep.subr.bf16.mxu0 0
  %1005 = vmatpush1.bf16.msra.mxu0 %v768
  %1006 = vmatprep.subr.bf16.mxu0 0
  %1007 = vmatpush1.bf16.msra.mxu0 %v769
  %1008 = vmatprep.subr.bf16.mxu0 0
  %1009 = vmatpush1.bf16.msra.mxu0 %v770
  %1010 = vmatprep.subr.bf16.mxu0 0
  %1011 = vmatpush1.bf16.msra.mxu0 %v771
  %1012 = vmatprep.subr.bf16.mxu0 0
  %1013 = vmatpush1.bf16.msra.mxu0 %v772
  %1014 = vmatprep.subr.bf16.mxu0 0
  %1015 = vmatpush1.bf16.msra.mxu0 %v773
  %1016 = vmatprep.subr.bf16.mxu0 0
  %1017 = vmatpush1.bf16.msra.mxu0 %v774
  %1018 = vmatprep.subr.bf16.mxu0 0
  %1019 = vmatpush1.bf16.msra.mxu0 %v775
  %1020 = vmatprep.mubr.bf16.mxu0 %v291
  %1021 = vmatmul.mubr.bf16.gmra.mrb[0].mxu0 %v289
  %v1022 = vpop.f32.mrb[0].mxu0
  %v1023 = vadd.f32 %v983, %v1022
  %v1024 = vpop.f32.mrb[0].mxu0
  %v1025 = vpop.f32.mrb[0].mxu0
  %v1026 = vpop.f32.mrb[0].mxu0
  %1027 = vdwg.mxu0
  %1028 = vmatprep.subr.bf16.mxu0 0
  %1029 = vmatpush1.bf16.msra.mxu0 %v776
  %1030 = vmatprep.subr.bf16.mxu0 0
  %1031 = vmatpush1.bf16.msra.mxu0 %v777
  %1032 = vmatprep.subr.bf16.mxu0 0
  %1033 = vmatpush1.bf16.msra.mxu0 %v778
  %1034 = vmatprep.subr.bf16.mxu0 0
  %1035 = vmatpush1.bf16.msra.mxu0 %v779
  %1036 = vmatprep.subr.bf16.mxu0 0
  %1037 = vmatpush1.bf16.msra.mxu0 %v780
  %1038 = vmatprep.subr.bf16.mxu0 0
  %1039 = vmatpush1.bf16.msra.mxu0 %v781
  %1040 = vmatprep.subr.bf16.mxu0 0
  %1041 = vmatpush1.bf16.msra.mxu0 %v782
  %1042 = vmatprep.subr.bf16.mxu0 0
  %1043 = vmatpush1.bf16.msra.mxu0 %v783
  %1044 = vmatprep.subr.bf16.mxu0 0
  %1045 = vmatpush1.bf16.msra.mxu0 %v784
  %1046 = vmatprep.subr.bf16.mxu0 0
  %1047 = vmatpush1.bf16.msra.mxu0 %v785
  %1048 = vmatprep.subr.bf16.mxu0 0
  %1049 = vmatpush1.bf16.msra.mxu0 %v786
  %1050 = vmatprep.subr.bf16.mxu0 0
  %1051 = vmatpush1.bf16.msra.mxu0 %v787
  %1052 = vmatprep.subr.bf16.mxu0 0
  %1053 = vmatpush1.bf16.msra.mxu0 %v788
  %1054 = vmatprep.subr.bf16.mxu0 0
  %1055 = vmatpush1.bf16.msra.mxu0 %v789
  %1056 = vmatprep.subr.bf16.mxu0 0
  %1057 = vmatpush1.bf16.msra.mxu0 %v790
  %1058 = vmatprep.subr.bf16.mxu0 0
  %1059 = vmatpush1.bf16.msra.mxu0 %v791
  %1060 = vmatprep.mubr.bf16.mxu0 %v288
  %1061 = vmatmul.mubr.bf16.gmra.mrb[0].mxu0 %v274
  %v1062 = vpop.f32.mrb[0].mxu0
  %v1063 = vadd.f32 %v1023, %v1062
  %v1064 = vpop.f32.mrb[0].mxu0
  %v1065 = vpop.f32.mrb[0].mxu0
  %v1066 = vpop.f32.mrb[0].mxu0
  %1067 = vdwg.mxu0
  %1068 = vmatprep.subr.bf16.mxu0 0
  %1069 = vmatpush1.bf16.msra.mxu0 %v792
  %1070 = vmatprep.subr.bf16.mxu0 0
  %1071 = vmatpush1.bf16.msra.mxu0 %v793
  %1072 = vmatprep.subr.bf16.mxu0 0
  %1073 = vmatpush1.bf16.msra.mxu0 %v794
  %1074 = vmatprep.subr.bf16.mxu0 0
  %1075 = vmatpush1.bf16.msra.mxu0 %v795
  %1076 = vmatprep.subr.bf16.mxu0 0
  %1077 = vmatpush1.bf16.msra.mxu0 %v796
  %1078 = vmatprep.subr.bf16.mxu0 0
  %1079 = vmatpush1.bf16.msra.mxu0 %v797
  %1080 = vmatprep.subr.bf16.mxu0 0
  %1081 = vmatpush1.bf16.msra.mxu0 %v798
  %1082 = vmatprep.subr.bf16.mxu0 0
  %1083 = vmatpush1.bf16.msra.mxu0 %v799
  %1084 = vmatprep.subr.bf16.mxu0 0
  %1085 = vmatpush1.bf16.msra.mxu0 %v800
  %1086 = vmatprep.subr.bf16.mxu0 0
  %1087 = vmatpush1.bf16.msra.mxu0 %v801
  %1088 = vmatprep.subr.bf16.mxu0 0
  %1089 = vmatpush1.bf16.msra.mxu0 %v802
  %1090 = vmatprep.subr.bf16.mxu0 0
  %1091 = vmatpush1.bf16.msra.mxu0 %v803
  %1092 = vmatprep.subr.bf16.mxu0 0
  %1093 = vmatpush1.bf16.msra.mxu0 %v804
  %1094 = vmatprep.subr.bf16.mxu0 0
  %1095 = vmatpush1.bf16.msra.mxu0 %v805
  %1096 = vmatprep.subr.bf16.mxu0 0
  %1097 = vmatpush1.bf16.msra.mxu0 %v806
  %1098 = vmatprep.subr.bf16.mxu0 0
  %1099 = vmatpush1.bf16.msra.mxu0 %v807
  %1100 = vmatprep.mubr.bf16.mxu0 %v292
  %1101 = vmatmul.mubr.bf16.gmra.mrb[0].mxu0 %v290
  %v1102 = vpop.f32.mrb[0].mxu0
  %v1103 = vadd.f32 %v1063, %v1102
  %v1104 = vpop.f32.mrb[0].mxu0
  %v1105 = vpop.f32.mrb[0].mxu0
  %v1106 = vpop.f32.mrb[0].mxu0
  %1107 = vdwg.mxu0
  %1108 = vmatprep.subr.bf16.mxu0 0
  %1109 = vmatpush1.bf16.msra.mxu0 %v808
  %1110 = vmatprep.subr.bf16.mxu0 0
  %1111 = vmatpush1.bf16.msra.mxu0 %v809
  %1112 = vmatprep.subr.bf16.mxu0 0
  %1113 = vmatpush1.bf16.msra.mxu0 %v810
  %1114 = vmatprep.subr.bf16.mxu0 0
  %1115 = vmatpush1.bf16.msra.mxu0 %v811
  %1116 = vmatprep.subr.bf16.mxu0 0
  %1117 = vmatpush1.bf16.msra.mxu0 %v812
  %1118 = vmatprep.subr.bf16.mxu0 0
  %1119 = vmatpush1.bf16.msra.mxu0 %v813
  %1120 = vmatprep.subr.bf16.mxu0 0
  %1121 = vmatpush1.bf16.msra.mxu0 %v814
  %1122 = vmatprep.subr.bf16.mxu0 0
  %1123 = vmatpush1.bf16.msra.mxu0 %v815
  %1124 = vmatprep.subr.bf16.mxu0 0
  %1125 = vmatpush1.bf16.msra.mxu0 %v816
  %1126 = vmatprep.subr.bf16.mxu0 0
  %1127 = vmatpush1.bf16.msra.mxu0 %v817
  %1128 = vmatprep.subr.bf16.mxu0 0
  %1129 = vmatpush1.bf16.msra.mxu0 %v818
  %1130 = vmatprep.subr.bf16.mxu0 0
  %1131 = vmatpush1.bf16.msra.mxu0 %v819
  %1132 = vmatprep.subr.bf16.mxu0 0
  %1133 = vmatpush1.bf16.msra.mxu0 %v820
  %1134 = vmatprep.subr.bf16.mxu0 0
  %1135 = vmatpush1.bf16.msra.mxu0 %v821
  %1136 = vmatprep.subr.bf16.mxu0 0
  %1137 = vmatpush1.bf16.msra.mxu0 %v822
  %1138 = vmatprep.subr.bf16.mxu0 0
  %1139 = vmatpush1.bf16.msra.mxu0 %v823
  %1140 = vmatprep.mubr.bf16.mxu0 %v329
  %1141 = vmatmul.mubr.bf16.gmra.mrb[0].mxu0 %v315
  %v1142 = vpop.f32.mrb[0].mxu0
  %v1143 = vadd.f32 %v1103, %v1142
  %v1144 = vpop.f32.mrb[0].mxu0
  %v1145 = vpop.f32.mrb[0].mxu0
  %v1146 = vpop.f32.mrb[0].mxu0
  %1147 = vdwg.mxu0
  %1148 = vmatprep.subr.bf16.mxu0 0
  %1149 = vmatpush1.bf16.msra.mxu0 %v824
  %1150 = vmatprep.subr.bf16.mxu0 0
  %1151 = vmatpush1.bf16.msra.mxu0 %v825
  %1152 = vmatprep.subr.bf16.mxu0 0
  %1153 = vmatpush1.bf16.msra.mxu0 %v826
  %1154 = vmatprep.subr.bf16.mxu0 0
  %1155 = vmatpush1.bf16.msra.mxu0 %v827
  %1156 = vmatprep.subr.bf16.mxu0 0
  %1157 = vmatpush1.bf16.msra.mxu0 %v828
  %1158 = vmatprep.subr.bf16.mxu0 0
  %1159 = vmatpush1.bf16.msra.mxu0 %v829
  %1160 = vmatprep.subr.bf16.mxu0 0
  %1161 = vmatpush1.bf16.msra.mxu0 %v830
  %1162 = vmatprep.subr.bf16.mxu0 0
  %1163 = vmatpush1.bf16.msra.mxu0 %v831
  %1164 = vmatprep.subr.bf16.mxu0 0
  %1165 = vmatpush1.bf16.msra.mxu0 %v832
  %1166 = vmatprep.subr.bf16.mxu0 0
  %1167 = vmatpush1.bf16.msra.mxu0 %v833
  %1168 = vmatprep.subr.bf16.mxu0 0
  %1169 = vmatpush1.bf16.msra.mxu0 %v834
  %1170 = vmatprep.subr.bf16.mxu0 0
  %1171 = vmatpush1.bf16.msra.mxu0 %v835
  %1172 = vmatprep.subr.bf16.mxu0 0
  %1173 = vmatpush1.bf16.msra.mxu0 %v836
  %1174 = vmatprep.subr.bf16.mxu0 0
  %1175 = vmatpush1.bf16.msra.mxu0 %v837
  %1176 = vmatprep.subr.bf16.mxu0 0
  %1177 = vmatpush1.bf16.msra.mxu0 %v838
  %1178 = vmatprep.subr.bf16.mxu0 0
  %1179 = vmatpush1.bf16.msra.mxu0 %v839
  %1180 = vmatprep.mubr.bf16.mxu0 %v331
  %1181 = vmatmul.mubr.bf16.gmra.mrb[0].mxu0 %v330
  %v1182 = vpop.f32.mrb[0].mxu0
  %v1183 = vadd.f32 %v1143, %v1182
  %v1184 = vpop.f32.mrb[0].mxu0
  %v1185 = vpop.f32.mrb[0].mxu0
  %v1186 = vpop.f32.mrb[0].mxu0
  %1187 = vdwg.mxu0
  %1188 = vmatprep.subr.bf16.mxu0 0
  %1189 = vmatpush1.bf16.msra.mxu0 %v840
  %1190 = vmatprep.subr.bf16.mxu0 0
  %1191 = vmatpush1.bf16.msra.mxu0 %v841
  %1192 = vmatprep.subr.bf16.mxu0 0
  %1193 = vmatpush1.bf16.msra.mxu0 %v842
  %1194 = vmatprep.subr.bf16.mxu0 0
  %1195 = vmatpush1.bf16.msra.mxu0 %v843
  %1196 = vmatprep.subr.bf16.mxu0 0
  %1197 = vmatpush1.bf16.msra.mxu0 0
  %1198 = vmatprep.subr.bf16.mxu0 0
  %1199 = vmatpush1.bf16.msra.mxu0 0
  %1200 = vmatprep.subr.bf16.mxu0 0
  %1201 = vmatpush1.bf16.msra.mxu0 0
  %1202 = vmatprep.subr.bf16.mxu0 0
  %1203 = vmatpush1.bf16.msra.mxu0 0
  %1204 = vmatprep.subr.bf16.mxu0 0
  %1205 = vmatpush1.bf16.msra.mxu0 0
  %1206 = vmatprep.subr.bf16.mxu0 0
  %1207 = vmatpush1.bf16.msra.mxu0 0
  %1208 = vmatprep.subr.bf16.mxu0 0
  %1209 = vmatpush1.bf16.msra.mxu0 0
  %1210 = vmatprep.subr.bf16.mxu0 0
  %1211 = vmatpush1.bf16.msra.mxu0 0
  %1212 = vmatprep.subr.bf16.mxu0 0
  %1213 = vmatpush1.bf16.msra.mxu0 0
  %1214 = vmatprep.subr.bf16.mxu0 0
  %1215 = vmatpush1.bf16.msra.mxu0 0
  %1216 = vmatprep.subr.bf16.mxu0 0
  %1217 = vmatpush1.bf16.msra.mxu0 0
  %1218 = vmatprep.subr.bf16.mxu0 0
  %1219 = vmatpush1.bf16.msra.mxu0 0
  %1220 = vmatprep.mubr.bf16.mxu0 0
  %1221 = vmatmul.mubr.bf16.gmra.mrb[0].mxu0 %v946
  %v1222 = vpop.f32.mrb[0].mxu0
  %v1223 = vadd.f32 %v1183, %v1222
  %v1224 = vpop.f32.mrb[0].mxu0
  %v1225 = vpop.f32.mrb[0].mxu0
  %v1226 = vpop.f32.mrb[0].mxu0
  %1227 = vdwg.mxu0
  %v1228 = vtanh.pop %v1223
  %v1229 = vld [vmem:[%s5] sm:$0xff]
  %v1230 = vld [vmem:[%s5 + $0x8] sm:$0xff]
  %v1231 = vld [vmem:[%s5 + $0x10] sm:$0xff]
  %v1232 = vld [vmem:[%s5 + $0x18] sm:$0xff]
  %v1233 = vld [vmem:[%s5 + $0x20] sm:$0xff]
  %v1234 = vld [vmem:[%s5 + $0x28] sm:$0xff]
  %v1235 = vld [vmem:[%s5 + $0x30] sm:$0xff]
  %v1236 = vld [vmem:[%s5 + $0x38] sm:$0xff]
  %v1237 = vld [vmem:[%s5 + $0x40] sm:$0xff]
  %v1238 = vld [vmem:[%s5 + $0x48] sm:$0xff]
  %v1239 = vld [vmem:[%s5 + $0x50] sm:$0xff]
  %v1240 = vld [vmem:[%s5 + $0x58] sm:$0xff]
  %v1241 = vld [vmem:[%s5 + $0x60] sm:$0xff]
  %v1242 = vld [vmem:[%s5 + $0x68] sm:$0xff]
  %v1243 = vld [vmem:[%s5 + $0x70] sm:$0xff]
  %v1244 = vld [vmem:[%s5 + $0x78] sm:$0xff]
  %v1245 = vld [vmem:[%s6] sm:$0x1]
  %v1247 = vlaneseq
  %v1248 = vshrl.u32 %v1247, 7
  %v1249 = vsub.s32 0, %v1248
  %v1250 = vrot.slane %v1245, %v1249
  %1252 = vmatprep.subr.mxu0 0.0
  %1253 = vmatpush1.msra.mxu0 %v1229
  %1254 = vmatprep.subr.mxu0 0.0
  %1255 = vmatpush1.msra.mxu0 %v1230
  %1256 = vmatprep.subr.mxu0 0.0
  %1257 = vmatpush1.msra.mxu0 %v1231
  %1258 = vmatprep.subr.mxu0 0.0
  %1259 = vmatpush1.msra.mxu0 %v1232
  %1260 = vmatprep.subr.mxu0 0.0
  %1261 = vmatpush1.msra.mxu0 %v1233
  %1262 = vmatprep.subr.mxu0 0.0
  %1263 = vmatpush1.msra.mxu0 %v1234
  %1264 = vmatprep.subr.mxu0 0.0
  %1265 = vmatpush1.msra.mxu0 %v1235
  %1266 = vmatprep.subr.mxu0 0.0
  %1267 = vmatpush1.msra.mxu0 %v1236
  %1268 = vmatprep.subr.mxu0 0.0
  %1269 = vmatpush1.msra.mxu0 %v1237
  %1270 = vmatprep.subr.mxu0 0.0
  %1271 = vmatpush1.msra.mxu0 %v1238
  %1272 = vmatprep.subr.mxu0 0.0
  %1273 = vmatpush1.msra.mxu0 %v1239
  %1274 = vmatprep.subr.mxu0 0.0
  %1275 = vmatpush1.msra.mxu0 %v1240
  %1276 = vmatprep.subr.mxu0 0.0
  %1277 = vmatpush1.msra.mxu0 %v1241
  %1278 = vmatprep.subr.mxu0 0.0
  %1279 = vmatpush1.msra.mxu0 %v1242
  %1280 = vmatprep.subr.mxu0 0.0
  %1281 = vmatpush1.msra.mxu0 %v1243
  %1282 = vmatprep.subr.mxu0 0.0
  %1283 = vmatpush1.msra.mxu0 %v1244
  %1284 = vmatprep.subr.mxu0 0.0
  %1285 = vmatpush1.msra.mxu0 0.0
  %1286 = vmatprep.subr.mxu0 0.0
  %1287 = vmatpush1.msra.mxu0 0.0
  %1288 = vmatprep.subr.mxu0 0.0
  %1289 = vmatpush1.msra.mxu0 0.0
  %1290 = vmatprep.subr.mxu0 0.0
  %1291 = vmatpush1.msra.mxu0 0.0
  %1292 = vmatprep.subr.mxu0 0.0
  %1293 = vmatpush1.msra.mxu0 0.0
  %1294 = vmatprep.subr.mxu0 0.0
  %1295 = vmatpush1.msra.mxu0 0.0
  %1296 = vmatprep.subr.mxu0 0.0
  %1297 = vmatpush1.msra.mxu0 0.0
  %1298 = vmatprep.subr.mxu0 0.0
  %1299 = vmatpush1.msra.mxu0 0.0
  %1300 = vmatprep.subr.mxu0 0.0
  %1301 = vmatpush1.msra.mxu0 0.0
  %1302 = vmatprep.subr.mxu0 0.0
  %1303 = vmatpush1.msra.mxu0 0.0
  %1304 = vmatprep.subr.mxu0 0.0
  %1305 = vmatpush1.msra.mxu0 0.0
  %1306 = vmatprep.subr.mxu0 0.0
  %1307 = vmatpush1.msra.mxu0 0.0
  %1308 = vmatprep.subr.mxu0 0.0
  %1309 = vmatpush1.msra.mxu0 0.0
  %1310 = vmatprep.subr.mxu0 0.0
  %1311 = vmatpush1.msra.mxu0 0.0
  %1312 = vmatprep.subr.mxu0 0.0
  %1313 = vmatpush1.msra.mxu0 0.0
  %1314 = vmatprep.subr.mxu0 0.0
  %1315 = vmatpush1.msra.mxu0 0.0
  %1316 = vmatprep.mubr.f32.mxu0 0.0
  %1317 = vmatmul.mubr.f32.gmra.mrb[0].mxu0 %v1228
  %v1318 = vpop.f32.mrb[0].mxu0
  %v1319 = vadd.f32 %v1250, %v1318
  %v1320 = vpop.f32.mrb[0].mxu0
  %1321 = vdwg.mxu0
  %v1322 = vtanh.pop %v1319
  %v1323 = vld [vmem:[%s7] sm:$0xff]
  %v1324 = vld [vmem:[%s7 + $0x8] sm:$0xff]
  %v1325 = vld [vmem:[%s7 + $0x10] sm:$0xff]
  %v1326 = vld [vmem:[%s7 + $0x18] sm:$0xff]
  %v1327 = vld [vmem:[%s7 + $0x20] sm:$0xff]
  %v1328 = vld [vmem:[%s7 + $0x28] sm:$0xff]
  %v1329 = vld [vmem:[%s7 + $0x30] sm:$0xff]
  %v1330 = vld [vmem:[%s7 + $0x38] sm:$0xff]
  %v1331 = vld [vmem:[%s7 + $0x40] sm:$0xff]
  %v1332 = vld [vmem:[%s7 + $0x48] sm:$0xff]
  %v1333 = vld [vmem:[%s7 + $0x50] sm:$0xff]
  %v1334 = vld [vmem:[%s7 + $0x58] sm:$0xff]
  %v1335 = vld [vmem:[%s7 + $0x60] sm:$0xff]
  %v1336 = vld [vmem:[%s7 + $0x68] sm:$0xff]
  %v1337 = vld [vmem:[%s7 + $0x70] sm:$0xff]
  %v1338 = vld [vmem:[%s7 + $0x78] sm:$0xff]
  %v1339 = vld [vmem:[%s8] sm:$0x1]
  %v1341 = vlaneseq
  %v1342 = vshrl.u32 %v1341, 7
  %v1343 = vsub.s32 0, %v1342
  %v1344 = vrot.slane %v1339, %v1343
  %1346 = vmatprep.subr.mxu0 0.0
  %1347 = vmatpush1.msra.mxu0 %v1323
  %1348 = vmatprep.subr.mxu0 0.0
  %1349 = vmatpush1.msra.mxu0 %v1324
  %1350 = vmatprep.subr.mxu0 0.0
  %1351 = vmatpush1.msra.mxu0 %v1325
  %1352 = vmatprep.subr.mxu0 0.0
  %1353 = vmatpush1.msra.mxu0 %v1326
  %1354 = vmatprep.subr.mxu0 0.0
  %1355 = vmatpush1.msra.mxu0 %v1327
  %1356 = vmatprep.subr.mxu0 0.0
  %1357 = vmatpush1.msra.mxu0 %v1328
  %1358 = vmatprep.subr.mxu0 0.0
  %1359 = vmatpush1.msra.mxu0 %v1329
  %1360 = vmatprep.subr.mxu0 0.0
  %1361 = vmatpush1.msra.mxu0 %v1330
  %1362 = vmatprep.subr.mxu0 0.0
  %1363 = vmatpush1.msra.mxu0 %v1331
  %1364 = vmatprep.subr.mxu0 0.0
  %1365 = vmatpush1.msra.mxu0 %v1332
  %1366 = vmatprep.subr.mxu0 0.0
  %1367 = vmatpush1.msra.mxu0 %v1333
  %1368 = vmatprep.subr.mxu0 0.0
  %1369 = vmatpush1.msra.mxu0 %v1334
  %1370 = vmatprep.subr.mxu0 0.0
  %1371 = vmatpush1.msra.mxu0 %v1335
  %1372 = vmatprep.subr.mxu0 0.0
  %1373 = vmatpush1.msra.mxu0 %v1336
  %1374 = vmatprep.subr.mxu0 0.0
  %1375 = vmatpush1.msra.mxu0 %v1337
  %1376 = vmatprep.subr.mxu0 0.0
  %1377 = vmatpush1.msra.mxu0 %v1338
  %1378 = vmatprep.subr.mxu0 0.0
  %1379 = vmatpush1.msra.mxu0 0.0
  %1380 = vmatprep.subr.mxu0 0.0
  %1381 = vmatpush1.msra.mxu0 0.0
  %1382 = vmatprep.subr.mxu0 0.0
  %1383 = vmatpush1.msra.mxu0 0.0
  %1384 = vmatprep.subr.mxu0 0.0
  %1385 = vmatpush1.msra.mxu0 0.0
  %1386 = vmatprep.subr.mxu0 0.0
  %1387 = vmatpush1.msra.mxu0 0.0
  %1388 = vmatprep.subr.mxu0 0.0
  %1389 = vmatpush1.msra.mxu0 0.0
  %1390 = vmatprep.subr.mxu0 0.0
  %1391 = vmatpush1.msra.mxu0 0.0
  %1392 = vmatprep.subr.mxu0 0.0
  %1393 = vmatpush1.msra.mxu0 0.0
  %1394 = vmatprep.subr.mxu0 0.0
  %1395 = vmatpush1.msra.mxu0 0.0
  %1396 = vmatprep.subr.mxu0 0.0
  %1397 = vmatpush1.msra.mxu0 0.0
  %1398 = vmatprep.subr.mxu0 0.0
  %1399 = vmatpush1.msra.mxu0 0.0
  %1400 = vmatprep.subr.mxu0 0.0
  %1401 = vmatpush1.msra.mxu0 0.0
  %1402 = vmatprep.subr.mxu0 0.0
  %1403 = vmatpush1.msra.mxu0 0.0
  %1404 = vmatprep.subr.mxu0 0.0
  %1405 = vmatpush1.msra.mxu0 0.0
  %1406 = vmatprep.subr.mxu0 0.0
  %1407 = vmatpush1.msra.mxu0 0.0
  %1408 = vmatprep.subr.mxu0 0.0
  %1409 = vmatpush1.msra.mxu0 0.0
  %1410 = vmatprep.mubr.f32.mxu0 0.0
  %1411 = vmatmul.mubr.f32.gmra.mrb[0].mxu0 %v1322
  %v1412 = vpop.f32.mrb[0].mxu0
  %v1413 = vadd.f32 %v1344, %v1412
  %v1414 = vpop.f32.mrb[0].mxu0
  %1415 = vdwg.mxu0
  %v1416 = vtanh.pop %v1413
  %v1417 = vld [vmem:[%s2] sm:$0x1]
  %v1418 = vld [vmem:[%s1] sm:$0x3]
  %v1419 = vsub.f32 %v1418, %v1416
  %v1420 = vmul.f32 %v1419, %v1419
  %v1422 = vlaneseq
  %v1423 = vshrl.u32 %v1422, 7
  %v1424 = vsub.s32 0, %v1423
  %v1425 = vrot.slane %v1417, %v1424
  %v1427 = vrcp.pop %v1425
  %v1428 = vmul.f32 %v1420, %v1427
  %vm1429 = vcmask 17408
  %v1430 = vsel %vm1429, %v1428, 0.0
  %1431 = vadd.xlane.f32.xlu0 %v1430
  %v1432 = vpop.xlane.xlu0 %1431
  %v1433 = vlog2.pop %v1417
  %v1434 = vmul.f32 %v1433, 0.6931472
  %vm1435 = vcmask 16384
  %v1436 = vsel %vm1435, %v1434, 0.0
  %1437 = vadd.xlane.f32.xlu0 %v1436
  %v1438 = vpop.xlane.xlu0 %1437
  %v1439 = vlaneseq
  %v1440 = vshrl.u32 %v1439, 7
  %v1441 = vsub.s32 0, %v1440
  %v1442 = vrot.slane %v1438, %v1441
  %v1443 = vadd.f32 %v1432, %v1442
  %v1444 = vadd.f32 %v1443, 5.5136313
  %v1445 = vmul.f32 %v1444, -0.5
  %v1446 = vadd.f32 %v1438, 8.513631
  %v1447 = vmul.f32 %v1446, 0.5
  %v1448 = vlaneseq
  %v1449 = vand.u32 %v1448, 127
  %vm1450 = vcmp.eq.s32.totalorder %v1449, 0
  %v1451 = vsel %vm1450, 1, 0
  %vm1452 = vcmp.eq.s32.totalorder %v1451, 1
  %v1453 = vsel %vm1452, %v1445, 0.0
  %vm1454 = vcmp.eq.s32.totalorder %v1449, 1
  %v1455 = vsel %vm1454, 1, 0
  %vm1456 = vcmp.eq.s32.totalorder %v1455, 1
  %1458 = vset.pattern.permute.xlu0 3
  %1459 = vperm.xlu0 %1458, %v1413
  %v1460 = vpop.permute.xlu0 %1459
  %v1462 = vsel %vm1456, %v1460, 0.0
  %v1463 = vadd.f32 %v1453, %v1462
  %vm1464 = vcmp.eq.s32.totalorder %v1449, 2
  %v1465 = vsel %vm1464, %v1447, 0.0
  %v1466 = vlaneseq
  %v1467 = vshrl.u32 %v1466, 7
  %v1468 = vsub.s32 0, %v1467
  %v1469 = vrot.slane %v1465, %v1468
  %v1470 = vadd.f32 %v1463, %v1469
  %1471 = vst [vmem:[%s9] sm:$0x3] %v1470
  // Predicated region
  $region38: #{evaluate.5} parent=0 // pred_check
    _
  $region39: #{evaluate.5} parent=0 // pred_check_branch
    %1473 = sbr.rel (0) target = $region41
  $region40: #{evaluate.5} parent=0 // pred_region
    _
  $region41: #{evaluate.5} parent=0 // pred_fallthru
    _
  // Predicated region
  $region42: #{evaluate.5} parent=0 // pred_check
    _
  $region43: #{evaluate.5} parent=0 // pred_check_branch
    %1475 = sbr.rel (0) target = $region45
  $region44: #{evaluate.5} parent=0 // pred_region
    _
  $region45: #{evaluate.5} parent=0 // pred_fallthru
    _

</llo_original>
